<compile_context>
chip_gen: v7x
topology: tpu7x:2x2x1
jax: 0.10.0
libtpu: 0.0.40
codegen_flags: <defaults>
</compile_context>

<pallas_src>
import functools

import jax
import jax.numpy as jnp
from jax import lax
from jax.experimental import pallas as pl
from jax.experimental.pallas import tpu as pltpu


def _projection_kernel(idx_ref, xall_ref, c1t_ref, w_ref, b_ref, wct_ref,
                       out_ref, stats_ref, *, p_tile, out_channels):
    pi = pl.program_id(0)   # pillar tile (parallel)
    pk = pl.program_id(1)   # point tile (reduction, output-resident)

    n_t = idx_ref.shape[0]

    @pl.when(pk == 0)
    def _init():
        stats_ref[...] = jnp.zeros_like(stats_ref)                 # (4, Pt)
        out_ref[...] = jnp.full_like(out_ref, -jnp.inf)            # running max

    idx = idx_ref[...]                                             # (Nt, 1) int32
    pids = pi * p_tile + lax.broadcasted_iota(jnp.int32, (n_t, p_tile), 1)
    mask = idx == pids                                             # (Nt, Pt) bool
    maskf = mask.astype(jnp.float32)

    # per-pillar coordinate sums + counts, on the (otherwise idle) MXU:
    #   [x|y|z|1]^T (4, Nt) @ maskf (Nt, Pt) -> (4, Pt)
    stats_ref[...] += jnp.dot(c1t_ref[...], maskf,
                              preferred_element_type=jnp.float32)

    # raw MLP pre-activation (bias / centering / ReLU hoisted to finalize).
    base = jnp.dot(xall_ref[...], w_ref[...],
                   preferred_element_type=jnp.float32)             # (Nt, OC)

    # masked running max per channel; fill value MUST be -inf (ReLU hoisted).
    for c in range(out_channels):
        row = jnp.max(jnp.where(mask, base[:, c:c + 1], -jnp.inf),
                      axis=0, keepdims=True)                       # (1, Pt)
        out_ref[c:c + 1, :] = jnp.maximum(out_ref[c:c + 1, :], row)

    @pl.when(pk == pl.num_programs(1) - 1)
    def _finalize():
        cnt = jnp.maximum(stats_ref[3:4, :], 1.0)                  # (1, Pt)
        mean = stats_ref[0:3, :] / cnt                             # (3, Pt)
        mcorr = jnp.dot(wct_ref[...], mean,
                        preferred_element_type=jnp.float32)        # (OC, Pt)
        # relu(max_n base + b - mcorr); empty pillars (-inf) -> 0, matching
        # torch scatter_max into a zero-initialized buffer.
        out_ref[...] = jnp.maximum(out_ref[...] + b_ref[...] - mcorr, 0.0)


def projection_forward(features, norm_coords, coords_int, p_v_dist, proj_axis,
                       w, b, resolution, *, n_tile=256, p_tile=256):
    """JAX/Pallas equivalent of Projection.forward.

    features   : (B, C, Np) f32
    norm_coords: (B*Np, 3)  f32
    coords_int : (B*Np, 4)  int32 (col 0 = batch id, cols 1..3 = voxel coords)
    p_v_dist   : (B*Np, 4)  f32
    proj_axis  : python int in {1, 2, 3}
    w          : (C+5, OC)  f32 (Conv1d weight (OC, C+5, 1) transposed+squeezed)
    b          : (1, OC)    f32
    returns    : (B, R, R, OC) f32
    """
    B, C, Np = features.shape
    R = int(resolution)
    N = B * Np
    OC = w.shape[1]
    P = B * R * R

    axes_all = [0, 1, 2, 3]
    axes = axes_all[:proj_axis] + axes_all[proj_axis + 1:]

    pv = p_v_dist[:, jnp.array(axes[1:])].astype(jnp.float32)            # (N, 2)
    ci = coords_int[:, jnp.array(axes)].astype(jnp.int32)                # (N, 3)
    index = ci[:, 0] * (R * R) + ci[:, 1] * R + ci[:, 2]                 # (N,)
    feat = jnp.transpose(features, (0, 2, 1)).reshape(N, C).astype(jnp.float32)
    coords = norm_coords.astype(jnp.float32)                             # (N, 3)
    # concat order matches the torch cat: [feat | x_p_y_p | (coords)]
    x_all = jnp.concatenate([feat, pv, coords], axis=1)                  # (N, C+5)

    # pad points so N divides the point tile (padded points get pillar id -1
    # and therefore never match any pillar -> excluded from mean and max).
    n_pad = pl.cdiv(N, n_tile) * n_tile
    if n_pad != N:
        x_all = jnp.pad(x_all, ((0, n_pad - N), (0, 0)))
        coords = jnp.pad(coords, ((0, n_pad - N), (0, 0)))
        index = jnp.pad(index, (0, n_pad - N), constant_values=-1)
    idx_col = index.reshape(n_pad, 1).astype(jnp.int32)
    # transposed [x | y | z | 1] (4, n_pad) for the MXU stats matmul; padded
    # point columns contribute nothing because their mask row is all-zero.
    c1t = jnp.concatenate(
        [jnp.transpose(coords), jnp.ones((1, n_pad), jnp.float32)], axis=0)

    p_pad = pl.cdiv(P, p_tile) * p_tile
    n_pillar_tiles = p_pad // p_tile
    n_point_tiles = n_pad // n_tile

    w = w.astype(jnp.float32)
    b_col = b.astype(jnp.float32).reshape(OC, 1)                         # (OC, 1)
    w_cent_t = jnp.transpose(w[C + 2:C + 5, :])                          # (OC, 3)

    kernel = functools.partial(_projection_kernel, p_tile=p_tile,
                               out_channels=OC)

    flops = int(n_pillar_tiles * 2 * n_pad * (C + 5) * OC                # MLP (re-done per pillar tile)
                + n_pad * p_pad * (8 + 2 * OC + 2)                       # stats matmul + masked max + mask
                + 2 * 3 * OC * p_pad)                                    # mcorr
    bytes_accessed = int(4 * (n_pillar_tiles * (x_all.size + c1t.size
                                                + idx_col.size)
                              + OC * p_pad + w.size + w_cent_t.size + OC))
    cost = pl.CostEstimate(flops=flops, transcendentals=0,
                           bytes_accessed=bytes_accessed)

    out_t = pl.pallas_call(
        kernel,
        out_shape=jax.ShapeDtypeStruct((OC, p_pad), jnp.float32),
        grid=(n_pillar_tiles, n_point_tiles),
        in_specs=[
            pl.BlockSpec((n_tile, 1), lambda pi, pk: (pk, 0)),           # idx
            pl.BlockSpec((n_tile, C + 5), lambda pi, pk: (pk, 0)),       # x_all
            pl.BlockSpec((4, n_tile), lambda pi, pk: (0, pk)),           # [xyz1]^T
            pl.BlockSpec((C + 5, OC), lambda pi, pk: (0, 0)),            # w
            pl.BlockSpec((OC, 1), lambda pi, pk: (0, 0)),                # b (col)
            pl.BlockSpec((OC, 3), lambda pi, pk: (0, 0)),                # w_cent^T
        ],
        out_specs=pl.BlockSpec((OC, p_tile), lambda pi, pk: (0, pi)),
        scratch_shapes=[pltpu.VMEM((4, p_tile), jnp.float32)],           # sums+count
        compiler_params=pltpu.CompilerParams(
            dimension_semantics=("parallel", "arbitrary"),
            vmem_limit_bytes=32 * 1024 * 1024),
        cost_estimate=cost,
    )(idx_col, x_all, c1t, w, b_col, w_cent_t)

    return jnp.transpose(out_t[:, :P]).reshape(B, R, R, OC)


def _reference(features, norm_coords, coords_int, p_v_dist, proj_axis, w, b, R):
    """Pure-JAX reference (torch_scatter semantics via segment ops)."""
    B, C, Np = features.shape
    N = B * Np
    P = B * R * R
    axes_all = [0, 1, 2, 3]
    axes = axes_all[:proj_axis] + axes_all[proj_axis + 1:]
    pv = p_v_dist[:, jnp.array(axes[1:])]
    ci = coords_int[:, jnp.array(axes)]
    index = ci[:, 0] * (R * R) + ci[:, 1] * R + ci[:, 2]
    sums = jax.ops.segment_sum(norm_coords, index, num_segments=P)
    cnt = jax.ops.segment_sum(jnp.ones((N, 1), jnp.float32), index, num_segments=P)
    mean = sums / jnp.maximum(cnt, 1.0)
    centered = norm_coords - mean[index]
    feat = jnp.transpose(features, (0, 2, 1)).reshape(N, C)
    x = jnp.concatenate([feat, pv, centered], axis=1)
    h = jnp.maximum(x @ w + b, 0.0)
    pf = jax.ops.segment_max(h, index, num_segments=P)
    pf = jnp.maximum(pf, 0.0)  # torch scatter 'out' was zeros
    return pf.reshape(B, R, R, w.shape[1])


if __name__ == "__main__":
    key = jax.random.PRNGKey(0)
    B, C, Np, R, OC = 2, 4, 64, 16, 16
    N = B * Np
    ks = jax.random.split(key, 6)

    features = jax.random.normal(ks[0], (B, C, Np), jnp.float32)
    norm_coords = jax.random.uniform(ks[1], (N, 3), jnp.float32)
    batch_ids = jnp.repeat(jnp.arange(B, dtype=jnp.int32), Np)
    spatial = jax.random.randint(ks[2], (N, 3), 0, R, jnp.int32)
    coords_int = jnp.concatenate([batch_ids[:, None], spatial], axis=1)   # (N, 4)
    p_v_dist = jax.random.uniform(ks[3], (N, 4), jnp.float32)
    proj_axis = 2

    # SharedMLP(C+5, OC) == Conv1d(C+5, OC, 1) + ReLU; deterministic init.
    w = 0.1 * jax.random.normal(ks[4], (C + 5, OC), jnp.float32)
    b = 0.1 * jax.random.normal(ks[5], (1, OC), jnp.float32)

    out = projection_forward(features, norm_coords, coords_int, p_v_dist,
                             proj_axis, w, b, R)
    out = jax.block_until_ready(out)

    ref = _reference(features, norm_coords, coords_int, p_v_dist, proj_axis, w, b, R)
    assert out.shape == (B, R, R, OC), out.shape
    assert jnp.allclose(out, ref, atol=1e-4, rtol=1e-4), \
        float(jnp.max(jnp.abs(out - ref)))
    print("KERNEL_OK")
</pallas_src>

<mosaic_0001>
module attributes {stable_mosaic.version = 11 : i64} {
  func.func @_projection_kernel(%arg0: i32, %arg1: i32, %arg2: memref<256x1xi32, #tpu.memory_space<vmem>>, %arg3: memref<256x9xf32, #tpu.memory_space<vmem>>, %arg4: memref<4x256xf32, #tpu.memory_space<vmem>>, %arg5: memref<9x16xf32, #tpu.memory_space<vmem>>, %arg6: memref<16x1xf32, #tpu.memory_space<vmem>>, %arg7: memref<16x3xf32, #tpu.memory_space<vmem>>, %arg8: memref<16x256xf32, #tpu.memory_space<vmem>>, %arg9: memref<4x256xf32, #tpu.memory_space<vmem>>) attributes {dimension_semantics = [#tpu.dimension_semantics<parallel>, #tpu.dimension_semantics<arbitrary>], iteration_bounds = array<i64: 2, 1>, scalar_prefetch = 0 : i64, scratch_operands = 1 : i64, tpu.core_type = #tpu.core_type<tc>, window_params = [{transform_indices = @transform_0, window_bounds = array<i64: 256, 1>}, {transform_indices = @transform_1, window_bounds = array<i64: 256, 9>}, {transform_indices = @transform_2, window_bounds = array<i64: 4, 256>}, {pipeline_mode = #tpu.pipeline_mode<synchronous>, transform_indices = @transform_3, window_bounds = array<i64: 9, 16>}, {pipeline_mode = #tpu.pipeline_mode<synchronous>, transform_indices = @transform_4, window_bounds = array<i64: 16, 1>}, {pipeline_mode = #tpu.pipeline_mode<synchronous>, transform_indices = @transform_5, window_bounds = array<i64: 16, 3>}, {transform_indices = @transform_6, window_bounds = array<i64: 16, 256>}]} {
    %c0_i32 = arith.constant 0 : i32
    %0 = arith.cmpi eq, %arg1, %c0_i32 : i32
    %1 = arith.extui %0 : i1 to i32
    %c0_i32_0 = arith.constant 0 : i32
    %2 = arith.cmpi ne, %1, %c0_i32_0 : i32
    scf.if %2 {
      %cst_96 = arith.constant 0.000000e+00 : f32
      %183 = vector.broadcast %cst_96 : f32 to vector<4x256xf32>
      %c0_97 = arith.constant 0 : index
      %c0_98 = arith.constant 0 : index
      %184 = vector.load %arg9[%c0_97, %c0_98] : memref<4x256xf32, #tpu.memory_space<vmem>>, vector<4x256xf32>
      tpu.vector_store %arg9[%c0_97, %c0_98], %183 {strides = array<i32>} : memref<4x256xf32, #tpu.memory_space<vmem>>, vector<4x256xf32>,
      %cst_99 = arith.constant 0xFF800000 : f32
      %185 = vector.broadcast %cst_99 : f32 to vector<16x256xf32>
      %c0_100 = arith.constant 0 : index
      %c0_101 = arith.constant 0 : index
      %186 = vector.load %arg8[%c0_100, %c0_101] : memref<16x256xf32, #tpu.memory_space<vmem>>, vector<16x256xf32>
      tpu.vector_store %arg8[%c0_100, %c0_101], %185 {strides = array<i32>} : memref<16x256xf32, #tpu.memory_space<vmem>>, vector<16x256xf32>,
    } else {
    }
    %c0 = arith.constant 0 : index
    %c0_1 = arith.constant 0 : index
    %3 = vector.load %arg2[%c0, %c0_1] : memref<256x1xi32, #tpu.memory_space<vmem>>, vector<256x1xi32>
    %c256_i32 = arith.constant 256 : i32
    %4 = arith.muli %arg0, %c256_i32 : i32
    %5 = tpu.iota {dimensions = array<i32: 1>} : vector<256x256xi32>
    %6 = vector.broadcast %4 : i32 to vector<256x256xi32>
    %7 = arith.addi %6, %5 : vector<256x256xi32>
    %8 = vector.broadcast %3 : vector<256x1xi32> to vector<256x256xi32>
    %9 = arith.cmpi eq, %8, %7 : vector<256x256xi32>
    %10 = arith.extui %9 : vector<256x256xi1> to vector<256x256xi32>
    %11 = arith.sitofp %10 : vector<256x256xi32> to vector<256x256xf32>
    %c0_2 = arith.constant 0 : index
    %c0_3 = arith.constant 0 : index
    %12 = vector.load %arg9[%c0_2, %c0_3] : memref<4x256xf32, #tpu.memory_space<vmem>>, vector<4x256xf32>
    %c0_4 = arith.constant 0 : index
    %c0_5 = arith.constant 0 : index
    %13 = vector.load %arg4[%c0_4, %c0_5] : memref<4x256xf32, #tpu.memory_space<vmem>>, vector<4x256xf32>
    %cst = arith.constant dense<0.000000e+00> : vector<4x256xf32>
    %14 = tpu.matmul %13, %11, %cst {dimension_numbers = #tpu.dot_dimension_numbers<[1], [0], [0], [1], [0, 0, 1, 1], [], []>} : vector<4x256xf32>, vector<256x256xf32>, vector<4x256xf32> -> vector<4x256xf32>
    %15 = arith.addf %12, %14 : vector<4x256xf32>
    %c0_6 = arith.constant 0 : index
    %c0_7 = arith.constant 0 : index
    %16 = vector.load %arg9[%c0_6, %c0_7] : memref<4x256xf32, #tpu.memory_space<vmem>>, vector<4x256xf32>
    tpu.vector_store %arg9[%c0_6, %c0_7], %15 {strides = array<i32>} : memref<4x256xf32, #tpu.memory_space<vmem>>, vector<4x256xf32>,
    %c0_8 = arith.constant 0 : index
    %c0_9 = arith.constant 0 : index
    %17 = vector.load %arg3[%c0_8, %c0_9] : memref<256x9xf32, #tpu.memory_space<vmem>>, vector<256x9xf32>
    %c0_10 = arith.constant 0 : index
    %c0_11 = arith.constant 0 : index
    %18 = vector.load %arg5[%c0_10, %c0_11] : memref<9x16xf32, #tpu.memory_space<vmem>>, vector<9x16xf32>
    %cst_12 = arith.constant dense<0.000000e+00> : vector<256x16xf32>
    %19 = tpu.matmul %17, %18, %cst_12 {dimension_numbers = #tpu.dot_dimension_numbers<[1], [0], [0], [1], [0, 0, 1, 1], [], []>} : vector<256x9xf32>, vector<9x16xf32>, vector<256x16xf32> -> vector<256x16xf32>
    %20 = vector.extract_strided_slice %19 {offsets = [0, 0], sizes = [256, 1], strides = [1, 1]} : vector<256x16xf32> to vector<256x1xf32>
    %cst_13 = arith.constant 0xFF800000 : f32
    %21 = vector.shape_cast %20 : vector<256x1xf32> to vector<256x1xf32>
    %22 = vector.broadcast %21 : vector<256x1xf32> to vector<256x256xf32>
    %23 = vector.broadcast %cst_13 : f32 to vector<256x256xf32>
    %24 = arith.select %9, %22, %23 : vector<256x256xi1>, vector<256x256xf32>
    %cst_14 = arith.constant dense<0xFF800000> : vector<256xf32>
    %25 = vector.multi_reduction <maximumf>, %24, %cst_14 [0] : vector<256x256xf32> to vector<256xf32>
    %26 = vector.shape_cast %25 : vector<256xf32> to vector<1x256xf32>
    %c0_15 = arith.constant 0 : index
    %c0_16 = arith.constant 0 : index
    %27 = vector.load %arg8[%c0_15, %c0_16] : memref<16x256xf32, #tpu.memory_space<vmem>>, vector<1x256xf32>
    %28 = arith.maximumf %27, %26 : vector<1x256xf32>
    %c0_17 = arith.constant 0 : index
    %c0_18 = arith.constant 0 : index
    %29 = vector.load %arg8[%c0_17, %c0_18] : memref<16x256xf32, #tpu.memory_space<vmem>>, vector<1x256xf32>
    tpu.vector_store %arg8[%c0_17, %c0_18], %28 {strides = array<i32>} : memref<16x256xf32, #tpu.memory_space<vmem>>, vector<1x256xf32>,
    %30 = vector.extract_strided_slice %19 {offsets = [0, 1], sizes = [256, 1], strides = [1, 1]} : vector<256x16xf32> to vector<256x1xf32>
    %cst_19 = arith.constant 0xFF800000 : f32
    %31 = vector.shape_cast %30 : vector<256x1xf32> to vector<256x1xf32>
    %32 = vector.broadcast %31 : vector<256x1xf32> to vector<256x256xf32>
    %33 = vector.broadcast %cst_19 : f32 to vector<256x256xf32>
    %34 = arith.select %9, %32, %33 : vector<256x256xi1>, vector<256x256xf32>
    %cst_20 = arith.constant dense<0xFF800000> : vector<256xf32>
    %35 = vector.multi_reduction <maximumf>, %34, %cst_20 [0] : vector<256x256xf32> to vector<256xf32>
    %36 = vector.shape_cast %35 : vector<256xf32> to vector<1x256xf32>
    %c1 = arith.constant 1 : index
    %c0_21 = arith.constant 0 : index
    %37 = vector.load %arg8[%c1, %c0_21] : memref<16x256xf32, #tpu.memory_space<vmem>>, vector<1x256xf32>
    %38 = arith.maximumf %37, %36 : vector<1x256xf32>
    %c1_22 = arith.constant 1 : index
    %c0_23 = arith.constant 0 : index
    %39 = vector.load %arg8[%c1_22, %c0_23] : memref<16x256xf32, #tpu.memory_space<vmem>>, vector<1x256xf32>
    tpu.vector_store %arg8[%c1_22, %c0_23], %38 {strides = array<i32>} : memref<16x256xf32, #tpu.memory_space<vmem>>, vector<1x256xf32>,
    %40 = vector.extract_strided_slice %19 {offsets = [0, 2], sizes = [256, 1], strides = [1, 1]} : vector<256x16xf32> to vector<256x1xf32>
    %cst_24 = arith.constant 0xFF800000 : f32
    %41 = vector.shape_cast %40 : vector<256x1xf32> to vector<256x1xf32>
    %42 = vector.broadcast %41 : vector<256x1xf32> to vector<256x256xf32>
    %43 = vector.broadcast %cst_24 : f32 to vector<256x256xf32>
    %44 = arith.select %9, %42, %43 : vector<256x256xi1>, vector<256x256xf32>
    %cst_25 = arith.constant dense<0xFF800000> : vector<256xf32>
    %45 = vector.multi_reduction <maximumf>, %44, %cst_25 [0] : vector<256x256xf32> to vector<256xf32>
    %46 = vector.shape_cast %45 : vector<256xf32> to vector<1x256xf32>
    %c2 = arith.constant 2 : index
    %c0_26 = arith.constant 0 : index
    %47 = vector.load %arg8[%c2, %c0_26] : memref<16x256xf32, #tpu.memory_space<vmem>>, vector<1x256xf32>
    %48 = arith.maximumf %47, %46 : vector<1x256xf32>
    %c2_27 = arith.constant 2 : index
    %c0_28 = arith.constant 0 : index
    %49 = vector.load %arg8[%c2_27, %c0_28] : memref<16x256xf32, #tpu.memory_space<vmem>>, vector<1x256xf32>
    tpu.vector_store %arg8[%c2_27, %c0_28], %48 {strides = array<i32>} : memref<16x256xf32, #tpu.memory_space<vmem>>, vector<1x256xf32>,
    %50 = vector.extract_strided_slice %19 {offsets = [0, 3], sizes = [256, 1], strides = [1, 1]} : vector<256x16xf32> to vector<256x1xf32>
    %cst_29 = arith.constant 0xFF800000 : f32
    %51 = vector.shape_cast %50 : vector<256x1xf32> to vector<256x1xf32>
    %52 = vector.broadcast %51 : vector<256x1xf32> to vector<256x256xf32>
    %53 = vector.broadcast %cst_29 : f32 to vector<256x256xf32>
    %54 = arith.select %9, %52, %53 : vector<256x256xi1>, vector<256x256xf32>
    %cst_30 = arith.constant dense<0xFF800000> : vector<256xf32>
    %55 = vector.multi_reduction <maximumf>, %54, %cst_30 [0] : vector<256x256xf32> to vector<256xf32>
    %56 = vector.shape_cast %55 : vector<256xf32> to vector<1x256xf32>
    %c3 = arith.constant 3 : index
    %c0_31 = arith.constant 0 : index
    %57 = vector.load %arg8[%c3, %c0_31] : memref<16x256xf32, #tpu.memory_space<vmem>>, vector<1x256xf32>
    %58 = arith.maximumf %57, %56 : vector<1x256xf32>
    %c3_32 = arith.constant 3 : index
    %c0_33 = arith.constant 0 : index
    %59 = vector.load %arg8[%c3_32, %c0_33] : memref<16x256xf32, #tpu.memory_space<vmem>>, vector<1x256xf32>
    tpu.vector_store %arg8[%c3_32, %c0_33], %58 {strides = array<i32>} : memref<16x256xf32, #tpu.memory_space<vmem>>, vector<1x256xf32>,
    %60 = vector.extract_strided_slice %19 {offsets = [0, 4], sizes = [256, 1], strides = [1, 1]} : vector<256x16xf32> to vector<256x1xf32>
    %cst_34 = arith.constant 0xFF800000 : f32
    %61 = vector.shape_cast %60 : vector<256x1xf32> to vector<256x1xf32>
    %62 = vector.broadcast %61 : vector<256x1xf32> to vector<256x256xf32>
    %63 = vector.broadcast %cst_34 : f32 to vector<256x256xf32>
    %64 = arith.select %9, %62, %63 : vector<256x256xi1>, vector<256x256xf32>
    %cst_35 = arith.constant dense<0xFF800000> : vector<256xf32>
    %65 = vector.multi_reduction <maximumf>, %64, %cst_35 [0] : vector<256x256xf32> to vector<256xf32>
    %66 = vector.shape_cast %65 : vector<256xf32> to vector<1x256xf32>
    %c4 = arith.constant 4 : index
    %c0_36 = arith.constant 0 : index
    %67 = vector.load %arg8[%c4, %c0_36] : memref<16x256xf32, #tpu.memory_space<vmem>>, vector<1x256xf32>
    %68 = arith.maximumf %67, %66 : vector<1x256xf32>
    %c4_37 = arith.constant 4 : index
    %c0_38 = arith.constant 0 : index
    %69 = vector.load %arg8[%c4_37, %c0_38] : memref<16x256xf32, #tpu.memory_space<vmem>>, vector<1x256xf32>
    tpu.vector_store %arg8[%c4_37, %c0_38], %68 {strides = array<i32>} : memref<16x256xf32, #tpu.memory_space<vmem>>, vector<1x256xf32>,
    %70 = vector.extract_strided_slice %19 {offsets = [0, 5], sizes = [256, 1], strides = [1, 1]} : vector<256x16xf32> to vector<256x1xf32>
    %cst_39 = arith.constant 0xFF800000 : f32
    %71 = vector.shape_cast %70 : vector<256x1xf32> to vector<256x1xf32>
    %72 = vector.broadcast %71 : vector<256x1xf32> to vector<256x256xf32>
    %73 = vector.broadcast %cst_39 : f32 to vector<256x256xf32>
    %74 = arith.select %9, %72, %73 : vector<256x256xi1>, vector<256x256xf32>
    %cst_40 = arith.constant dense<0xFF800000> : vector<256xf32>
    %75 = vector.multi_reduction <maximumf>, %74, %cst_40 [0] : vector<256x256xf32> to vector<256xf32>
    %76 = vector.shape_cast %75 : vector<256xf32> to vector<1x256xf32>
    %c5 = arith.constant 5 : index
    %c0_41 = arith.constant 0 : index
    %77 = vector.load %arg8[%c5, %c0_41] : memref<16x256xf32, #tpu.memory_space<vmem>>, vector<1x256xf32>
    %78 = arith.maximumf %77, %76 : vector<1x256xf32>
    %c5_42 = arith.constant 5 : index
    %c0_43 = arith.constant 0 : index
    %79 = vector.load %arg8[%c5_42, %c0_43] : memref<16x256xf32, #tpu.memory_space<vmem>>, vector<1x256xf32>
    tpu.vector_store %arg8[%c5_42, %c0_43], %78 {strides = array<i32>} : memref<16x256xf32, #tpu.memory_space<vmem>>, vector<1x256xf32>,
    %80 = vector.extract_strided_slice %19 {offsets = [0, 6], sizes = [256, 1], strides = [1, 1]} : vector<256x16xf32> to vector<256x1xf32>
    %cst_44 = arith.constant 0xFF800000 : f32
    %81 = vector.shape_cast %80 : vector<256x1xf32> to vector<256x1xf32>
    %82 = vector.broadcast %81 : vector<256x1xf32> to vector<256x256xf32>
    %83 = vector.broadcast %cst_44 : f32 to vector<256x256xf32>
    %84 = arith.select %9, %82, %83 : vector<256x256xi1>, vector<256x256xf32>
    %cst_45 = arith.constant dense<0xFF800000> : vector<256xf32>
    %85 = vector.multi_reduction <maximumf>, %84, %cst_45 [0] : vector<256x256xf32> to vector<256xf32>
    %86 = vector.shape_cast %85 : vector<256xf32> to vector<1x256xf32>
    %c6 = arith.constant 6 : index
    %c0_46 = arith.constant 0 : index
    %87 = vector.load %arg8[%c6, %c0_46] : memref<16x256xf32, #tpu.memory_space<vmem>>, vector<1x256xf32>
    %88 = arith.maximumf %87, %86 : vector<1x256xf32>
    %c6_47 = arith.constant 6 : index
    %c0_48 = arith.constant 0 : index
    %89 = vector.load %arg8[%c6_47, %c0_48] : memref<16x256xf32, #tpu.memory_space<vmem>>, vector<1x256xf32>
    tpu.vector_store %arg8[%c6_47, %c0_48], %88 {strides = array<i32>} : memref<16x256xf32, #tpu.memory_space<vmem>>, vector<1x256xf32>,
    %90 = vector.extract_strided_slice %19 {offsets = [0, 7], sizes = [256, 1], strides = [1, 1]} : vector<256x16xf32> to vector<256x1xf32>
    %cst_49 = arith.constant 0xFF800000 : f32
    %91 = vector.shape_cast %90 : vector<256x1xf32> to vector<256x1xf32>
    %92 = vector.broadcast %91 : vector<256x1xf32> to vector<256x256xf32>
    %93 = vector.broadcast %cst_49 : f32 to vector<256x256xf32>
    %94 = arith.select %9, %92, %93 : vector<256x256xi1>, vector<256x256xf32>
    %cst_50 = arith.constant dense<0xFF800000> : vector<256xf32>
    %95 = vector.multi_reduction <maximumf>, %94, %cst_50 [0] : vector<256x256xf32> to vector<256xf32>
    %96 = vector.shape_cast %95 : vector<256xf32> to vector<1x256xf32>
    %c7 = arith.constant 7 : index
    %c0_51 = arith.constant 0 : index
    %97 = vector.load %arg8[%c7, %c0_51] : memref<16x256xf32, #tpu.memory_space<vmem>>, vector<1x256xf32>
    %98 = arith.maximumf %97, %96 : vector<1x256xf32>
    %c7_52 = arith.constant 7 : index
    %c0_53 = arith.constant 0 : index
    %99 = vector.load %arg8[%c7_52, %c0_53] : memref<16x256xf32, #tpu.memory_space<vmem>>, vector<1x256xf32>
    tpu.vector_store %arg8[%c7_52, %c0_53], %98 {strides = array<i32>} : memref<16x256xf32, #tpu.memory_space<vmem>>, vector<1x256xf32>,
    %100 = vector.extract_strided_slice %19 {offsets = [0, 8], sizes = [256, 1], strides = [1, 1]} : vector<256x16xf32> to vector<256x1xf32>
    %cst_54 = arith.constant 0xFF800000 : f32
    %101 = vector.shape_cast %100 : vector<256x1xf32> to vector<256x1xf32>
    %102 = vector.broadcast %101 : vector<256x1xf32> to vector<256x256xf32>
    %103 = vector.broadcast %cst_54 : f32 to vector<256x256xf32>
    %104 = arith.select %9, %102, %103 : vector<256x256xi1>, vector<256x256xf32>
    %cst_55 = arith.constant dense<0xFF800000> : vector<256xf32>
    %105 = vector.multi_reduction <maximumf>, %104, %cst_55 [0] : vector<256x256xf32> to vector<256xf32>
    %106 = vector.shape_cast %105 : vector<256xf32> to vector<1x256xf32>
    %c8 = arith.constant 8 : index
    %c0_56 = arith.constant 0 : index
    %107 = vector.load %arg8[%c8, %c0_56] : memref<16x256xf32, #tpu.memory_space<vmem>>, vector<1x256xf32>
    %108 = arith.maximumf %107, %106 : vector<1x256xf32>
    %c8_57 = arith.constant 8 : index
    %c0_58 = arith.constant 0 : index
    %109 = vector.load %arg8[%c8_57, %c0_58] : memref<16x256xf32, #tpu.memory_space<vmem>>, vector<1x256xf32>
    tpu.vector_store %arg8[%c8_57, %c0_58], %108 {strides = array<i32>} : memref<16x256xf32, #tpu.memory_space<vmem>>, vector<1x256xf32>,
    %110 = vector.extract_strided_slice %19 {offsets = [0, 9], sizes = [256, 1], strides = [1, 1]} : vector<256x16xf32> to vector<256x1xf32>
    %cst_59 = arith.constant 0xFF800000 : f32
    %111 = vector.shape_cast %110 : vector<256x1xf32> to vector<256x1xf32>
    %112 = vector.broadcast %111 : vector<256x1xf32> to vector<256x256xf32>
    %113 = vector.broadcast %cst_59 : f32 to vector<256x256xf32>
    %114 = arith.select %9, %112, %113 : vector<256x256xi1>, vector<256x256xf32>
    %cst_60 = arith.constant dense<0xFF800000> : vector<256xf32>
    %115 = vector.multi_reduction <maximumf>, %114, %cst_60 [0] : vector<256x256xf32> to vector<256xf32>
    %116 = vector.shape_cast %115 : vector<256xf32> to vector<1x256xf32>
    %c9 = arith.constant 9 : index
    %c0_61 = arith.constant 0 : index
    %117 = vector.load %arg8[%c9, %c0_61] : memref<16x256xf32, #tpu.memory_space<vmem>>, vector<1x256xf32>
    %118 = arith.maximumf %117, %116 : vector<1x256xf32>
    %c9_62 = arith.constant 9 : index
    %c0_63 = arith.constant 0 : index
    %119 = vector.load %arg8[%c9_62, %c0_63] : memref<16x256xf32, #tpu.memory_space<vmem>>, vector<1x256xf32>
    tpu.vector_store %arg8[%c9_62, %c0_63], %118 {strides = array<i32>} : memref<16x256xf32, #tpu.memory_space<vmem>>, vector<1x256xf32>,
    %120 = vector.extract_strided_slice %19 {offsets = [0, 10], sizes = [256, 1], strides = [1, 1]} : vector<256x16xf32> to vector<256x1xf32>
    %cst_64 = arith.constant 0xFF800000 : f32
    %121 = vector.shape_cast %120 : vector<256x1xf32> to vector<256x1xf32>
    %122 = vector.broadcast %121 : vector<256x1xf32> to vector<256x256xf32>
    %123 = vector.broadcast %cst_64 : f32 to vector<256x256xf32>
    %124 = arith.select %9, %122, %123 : vector<256x256xi1>, vector<256x256xf32>
    %cst_65 = arith.constant dense<0xFF800000> : vector<256xf32>
    %125 = vector.multi_reduction <maximumf>, %124, %cst_65 [0] : vector<256x256xf32> to vector<256xf32>
    %126 = vector.shape_cast %125 : vector<256xf32> to vector<1x256xf32>
    %c10 = arith.constant 10 : index
    %c0_66 = arith.constant 0 : index
    %127 = vector.load %arg8[%c10, %c0_66] : memref<16x256xf32, #tpu.memory_space<vmem>>, vector<1x256xf32>
    %128 = arith.maximumf %127, %126 : vector<1x256xf32>
    %c10_67 = arith.constant 10 : index
    %c0_68 = arith.constant 0 : index
    %129 = vector.load %arg8[%c10_67, %c0_68] : memref<16x256xf32, #tpu.memory_space<vmem>>, vector<1x256xf32>
    tpu.vector_store %arg8[%c10_67, %c0_68], %128 {strides = array<i32>} : memref<16x256xf32, #tpu.memory_space<vmem>>, vector<1x256xf32>,
    %130 = vector.extract_strided_slice %19 {offsets = [0, 11], sizes = [256, 1], strides = [1, 1]} : vector<256x16xf32> to vector<256x1xf32>
    %cst_69 = arith.constant 0xFF800000 : f32
    %131 = vector.shape_cast %130 : vector<256x1xf32> to vector<256x1xf32>
    %132 = vector.broadcast %131 : vector<256x1xf32> to vector<256x256xf32>
    %133 = vector.broadcast %cst_69 : f32 to vector<256x256xf32>
    %134 = arith.select %9, %132, %133 : vector<256x256xi1>, vector<256x256xf32>
    %cst_70 = arith.constant dense<0xFF800000> : vector<256xf32>
    %135 = vector.multi_reduction <maximumf>, %134, %cst_70 [0] : vector<256x256xf32> to vector<256xf32>
    %136 = vector.shape_cast %135 : vector<256xf32> to vector<1x256xf32>
    %c11 = arith.constant 11 : index
    %c0_71 = arith.constant 0 : index
    %137 = vector.load %arg8[%c11, %c0_71] : memref<16x256xf32, #tpu.memory_space<vmem>>, vector<1x256xf32>
    %138 = arith.maximumf %137, %136 : vector<1x256xf32>
    %c11_72 = arith.constant 11 : index
    %c0_73 = arith.constant 0 : index
    %139 = vector.load %arg8[%c11_72, %c0_73] : memref<16x256xf32, #tpu.memory_space<vmem>>, vector<1x256xf32>
    tpu.vector_store %arg8[%c11_72, %c0_73], %138 {strides = array<i32>} : memref<16x256xf32, #tpu.memory_space<vmem>>, vector<1x256xf32>,
    %140 = vector.extract_strided_slice %19 {offsets = [0, 12], sizes = [256, 1], strides = [1, 1]} : vector<256x16xf32> to vector<256x1xf32>
    %cst_74 = arith.constant 0xFF800000 : f32
    %141 = vector.shape_cast %140 : vector<256x1xf32> to vector<256x1xf32>
    %142 = vector.broadcast %141 : vector<256x1xf32> to vector<256x256xf32>
    %143 = vector.broadcast %cst_74 : f32 to vector<256x256xf32>
    %144 = arith.select %9, %142, %143 : vector<256x256xi1>, vector<256x256xf32>
    %cst_75 = arith.constant dense<0xFF800000> : vector<256xf32>
    %145 = vector.multi_reduction <maximumf>, %144, %cst_75 [0] : vector<256x256xf32> to vector<256xf32>
    %146 = vector.shape_cast %145 : vector<256xf32> to vector<1x256xf32>
    %c12 = arith.constant 12 : index
    %c0_76 = arith.constant 0 : index
    %147 = vector.load %arg8[%c12, %c0_76] : memref<16x256xf32, #tpu.memory_space<vmem>>, vector<1x256xf32>
    %148 = arith.maximumf %147, %146 : vector<1x256xf32>
    %c12_77 = arith.constant 12 : index
    %c0_78 = arith.constant 0 : index
    %149 = vector.load %arg8[%c12_77, %c0_78] : memref<16x256xf32, #tpu.memory_space<vmem>>, vector<1x256xf32>
    tpu.vector_store %arg8[%c12_77, %c0_78], %148 {strides = array<i32>} : memref<16x256xf32, #tpu.memory_space<vmem>>, vector<1x256xf32>,
    %150 = vector.extract_strided_slice %19 {offsets = [0, 13], sizes = [256, 1], strides = [1, 1]} : vector<256x16xf32> to vector<256x1xf32>
    %cst_79 = arith.constant 0xFF800000 : f32
    %151 = vector.shape_cast %150 : vector<256x1xf32> to vector<256x1xf32>
    %152 = vector.broadcast %151 : vector<256x1xf32> to vector<256x256xf32>
    %153 = vector.broadcast %cst_79 : f32 to vector<256x256xf32>
    %154 = arith.select %9, %152, %153 : vector<256x256xi1>, vector<256x256xf32>
    %cst_80 = arith.constant dense<0xFF800000> : vector<256xf32>
    %155 = vector.multi_reduction <maximumf>, %154, %cst_80 [0] : vector<256x256xf32> to vector<256xf32>
    %156 = vector.shape_cast %155 : vector<256xf32> to vector<1x256xf32>
    %c13 = arith.constant 13 : index
    %c0_81 = arith.constant 0 : index
    %157 = vector.load %arg8[%c13, %c0_81] : memref<16x256xf32, #tpu.memory_space<vmem>>, vector<1x256xf32>
    %158 = arith.maximumf %157, %156 : vector<1x256xf32>
    %c13_82 = arith.constant 13 : index
    %c0_83 = arith.constant 0 : index
    %159 = vector.load %arg8[%c13_82, %c0_83] : memref<16x256xf32, #tpu.memory_space<vmem>>, vector<1x256xf32>
    tpu.vector_store %arg8[%c13_82, %c0_83], %158 {strides = array<i32>} : memref<16x256xf32, #tpu.memory_space<vmem>>, vector<1x256xf32>,
    %160 = vector.extract_strided_slice %19 {offsets = [0, 14], sizes = [256, 1], strides = [1, 1]} : vector<256x16xf32> to vector<256x1xf32>
    %cst_84 = arith.constant 0xFF800000 : f32
    %161 = vector.shape_cast %160 : vector<256x1xf32> to vector<256x1xf32>
    %162 = vector.broadcast %161 : vector<256x1xf32> to vector<256x256xf32>
    %163 = vector.broadcast %cst_84 : f32 to vector<256x256xf32>
    %164 = arith.select %9, %162, %163 : vector<256x256xi1>, vector<256x256xf32>
    %cst_85 = arith.constant dense<0xFF800000> : vector<256xf32>
    %165 = vector.multi_reduction <maximumf>, %164, %cst_85 [0] : vector<256x256xf32> to vector<256xf32>
    %166 = vector.shape_cast %165 : vector<256xf32> to vector<1x256xf32>
    %c14 = arith.constant 14 : index
    %c0_86 = arith.constant 0 : index
    %167 = vector.load %arg8[%c14, %c0_86] : memref<16x256xf32, #tpu.memory_space<vmem>>, vector<1x256xf32>
    %168 = arith.maximumf %167, %166 : vector<1x256xf32>
    %c14_87 = arith.constant 14 : index
    %c0_88 = arith.constant 0 : index
    %169 = vector.load %arg8[%c14_87, %c0_88] : memref<16x256xf32, #tpu.memory_space<vmem>>, vector<1x256xf32>
    tpu.vector_store %arg8[%c14_87, %c0_88], %168 {strides = array<i32>} : memref<16x256xf32, #tpu.memory_space<vmem>>, vector<1x256xf32>,
    %170 = vector.extract_strided_slice %19 {offsets = [0, 15], sizes = [256, 1], strides = [1, 1]} : vector<256x16xf32> to vector<256x1xf32>
    %cst_89 = arith.constant 0xFF800000 : f32
    %171 = vector.shape_cast %170 : vector<256x1xf32> to vector<256x1xf32>
    %172 = vector.broadcast %171 : vector<256x1xf32> to vector<256x256xf32>
    %173 = vector.broadcast %cst_89 : f32 to vector<256x256xf32>
    %174 = arith.select %9, %172, %173 : vector<256x256xi1>, vector<256x256xf32>
    %cst_90 = arith.constant dense<0xFF800000> : vector<256xf32>
    %175 = vector.multi_reduction <maximumf>, %174, %cst_90 [0] : vector<256x256xf32> to vector<256xf32>
    %176 = vector.shape_cast %175 : vector<256xf32> to vector<1x256xf32>
    %c15 = arith.constant 15 : index
    %c0_91 = arith.constant 0 : index
    %177 = vector.load %arg8[%c15, %c0_91] : memref<16x256xf32, #tpu.memory_space<vmem>>, vector<1x256xf32>
    %178 = arith.maximumf %177, %176 : vector<1x256xf32>
    %c15_92 = arith.constant 15 : index
    %c0_93 = arith.constant 0 : index
    %179 = vector.load %arg8[%c15_92, %c0_93] : memref<16x256xf32, #tpu.memory_space<vmem>>, vector<1x256xf32>
    tpu.vector_store %arg8[%c15_92, %c0_93], %178 {strides = array<i32>} : memref<16x256xf32, #tpu.memory_space<vmem>>, vector<1x256xf32>,
    %c0_i32_94 = arith.constant 0 : i32
    %180 = arith.cmpi eq, %arg1, %c0_i32_94 : i32
    %181 = arith.extui %180 : i1 to i32
    %c0_i32_95 = arith.constant 0 : i32
    %182 = arith.cmpi ne, %181, %c0_i32_95 : i32
    scf.if %182 {
      %c3_96 = arith.constant 3 : index
      %c0_97 = arith.constant 0 : index
      %183 = vector.load %arg9[%c3_96, %c0_97] : memref<4x256xf32, #tpu.memory_space<vmem>>, vector<1x256xf32>
      %cst_98 = arith.constant 1.000000e+00 : f32
      %184 = vector.broadcast %cst_98 : f32 to vector<1x256xf32>
      %185 = arith.maximumf %183, %184 : vector<1x256xf32>
      %c0_99 = arith.constant 0 : index
      %c0_100 = arith.constant 0 : index
      %186 = vector.load %arg9[%c0_99, %c0_100] : memref<4x256xf32, #tpu.memory_space<vmem>>, vector<3x256xf32>
      %187 = vector.broadcast %185 : vector<1x256xf32> to vector<3x256xf32>
      %188 = arith.divf %186, %187 : vector<3x256xf32>
      %c0_101 = arith.constant 0 : index
      %c0_102 = arith.constant 0 : index
      %189 = vector.load %arg7[%c0_101, %c0_102] : memref<16x3xf32, #tpu.memory_space<vmem>>, vector<16x3xf32>
      %cst_103 = arith.constant dense<0.000000e+00> : vector<16x256xf32>
      %190 = tpu.matmul %189, %188, %cst_103 {dimension_numbers = #tpu.dot_dimension_numbers<[1], [0], [0], [1], [0, 0, 1, 1], [], []>} : vector<16x3xf32>, vector<3x256xf32>, vector<16x256xf32> -> vector<16x256xf32>
      %c0_104 = arith.constant 0 : index
      %c0_105 = arith.constant 0 : index
      %191 = vector.load %arg8[%c0_104, %c0_105] : memref<16x256xf32, #tpu.memory_space<vmem>>, vector<16x256xf32>
      %c0_106 = arith.constant 0 : index
      %c0_107 = arith.constant 0 : index
      %192 = vector.load %arg6[%c0_106, %c0_107] : memref<16x1xf32, #tpu.memory_space<vmem>>, vector<16x1xf32>
      %193 = vector.broadcast %192 : vector<16x1xf32> to vector<16x256xf32>
      %194 = arith.addf %191, %193 : vector<16x256xf32>
      %195 = arith.subf %194, %190 : vector<16x256xf32>
      %cst_108 = arith.constant 0.000000e+00 : f32
      %196 = vector.broadcast %cst_108 : f32 to vector<16x256xf32>
      %197 = arith.maximumf %195, %196 : vector<16x256xf32>
      %c0_109 = arith.constant 0 : index
      %c0_110 = arith.constant 0 : index
      %198 = vector.load %arg8[%c0_109, %c0_110] : memref<16x256xf32, #tpu.memory_space<vmem>>, vector<16x256xf32>
      tpu.vector_store %arg8[%c0_109, %c0_110], %197 {strides = array<i32>} : memref<16x256xf32, #tpu.memory_space<vmem>>, vector<16x256xf32>,
    } else {
    }
    return
  }
  func.func @transform_0(%arg0: i32, %arg1: i32) -> (i32, i32) {
    %c0_i32 = arith.constant 0 : i32
    %c0_i32_0 = arith.constant 0 : i32
    return %arg1, %c0_i32 : i32, i32
  }
  func.func @transform_1(%arg0: i32, %arg1: i32) -> (i32, i32) {
    %c0_i32 = arith.constant 0 : i32
    %c0_i32_0 = arith.constant 0 : i32
    return %arg1, %c0_i32 : i32, i32
  }
  func.func @transform_2(%arg0: i32, %arg1: i32) -> (i32, i32) {
    %c0_i32 = arith.constant 0 : i32
    %c0_i32_0 = arith.constant 0 : i32
    return %c0_i32, %arg1 : i32, i32
  }
  func.func @transform_3(%arg0: i32, %arg1: i32) -> (i32, i32) {
    %c0_i32 = arith.constant 0 : i32
    %c0_i32_0 = arith.constant 0 : i32
    %c0_i32_1 = arith.constant 0 : i32
    return %c0_i32, %c0_i32_0 : i32, i32
  }
  func.func @transform_4(%arg0: i32, %arg1: i32) -> (i32, i32) {
    %c0_i32 = arith.constant 0 : i32
    %c0_i32_0 = arith.constant 0 : i32
    %c0_i32_1 = arith.constant 0 : i32
    return %c0_i32, %c0_i32_0 : i32, i32
  }
  func.func @transform_5(%arg0: i32, %arg1: i32) -> (i32, i32) {
    %c0_i32 = arith.constant 0 : i32
    %c0_i32_0 = arith.constant 0 : i32
    %c0_i32_1 = arith.constant 0 : i32
    return %c0_i32, %c0_i32_0 : i32, i32
  }
  func.func @transform_6(%arg0: i32, %arg1: i32) -> (i32, i32) {
    %c0_i32 = arith.constant 0 : i32
    %c0_i32_0 = arith.constant 0 : i32
    return %c0_i32, %arg0 : i32, i32
  }
}

</mosaic_0001>

<llo_original>
// kernel: tpu_custom_call.1
$region0: #{tpu_custom_call.1}
  #allocation0 [shape = 'u32[]', space=smem, size = 0x4, offset = 0x4, fixed_abs, tag = 'smem constant byte address 0x4 - core index']
  #allocation1 [shape = 'u32[144,128]{1,0:T(1,128)}', space=vmem, size = 0x12000, scoped, tag = 'internal scratch']
  #allocation2 [shape = 'f32[4,256]{1,0:T(4,128)}', space=vmem, size = 0x1000, scoped, tag = 'scratch operand']
  %s0 = inlined_call_operand.vmem [shape: s32[256,1], index: 0, kind: input, shape index: {}]
  %s1 = inlined_call_operand.vmem [shape: f32[256,9], index: 1, kind: input, shape index: {}]
  %s2 = inlined_call_operand.vmem [shape: f32[4,256], index: 2, kind: input, shape index: {}]
  %s3 = inlined_call_operand.vmem [shape: f32[9,16], index: 3, kind: input, shape index: {}]
  %s4 = inlined_call_operand.vmem [shape: f32[16,1], index: 4, kind: input, shape index: {}]
  %s5 = inlined_call_operand.vmem [shape: f32[16,3], index: 5, kind: input, shape index: {}]
  %s6 = inlined_call_operand.hbm [shape: f32[16,512], index: 6, kind: output, shape index: {}]
  %s7 = sld [smem:[#allocation0]]
  $region65: #{tpu_custom_call.1} parent=0
    _
  %s9 = ssub.s32 1, %s7
  %s10 = scalar_select 0, %s9, %s7
  $region1: #{tpu_custom_call.1} parent=0
    #allocation3 [shape = 'u8[32768]{0}', space=vmem, size = 0x8000, scoped, tag = 'output window, operand 0']
    #allocation4 [shape = 's32[2]{0}', space=sflag, size = 0x8, scoped, tag = 'scoped memory for tpu_custom_call.1']
    %11 = vsyncpa [#allocation4], 0
    %s12 = scalar_lea.sflag [#allocation4], 1
    %13 = vsyncpa %s12, 0
    loop: start=0, step=1, limit=4
    $region2: #{tpu_custom_call.1} parent=1 // loop_pre_header
      _
    $region3: #{tpu_custom_call.1} parent=1 // loop_header
      %s15 = sphi 0, %s19
      %p16 = scmp.ge.s32.totalorder %s15, 4
      %s22 = sphi 0, %s34
      %s23 = sphi 0, %s30
      %s24 = sphi 0, %s22
      %s25 = sphi 0, %s23
      %s26 = sphi 0, %s24
      %s27 = sphi 0, %s25
      %s37 = sphi 0, %s39
      %s40 = sphi 0, %s37
      %s41 = sphi 0, %s40
      %s57 = sphi 0, %s41
      %s63 = sphi 0, %s65
      %s66 = sphi 0, %s63
      %s67 = sphi 0, %s66
      %s83 = sphi 0, %s67
      %s89 = sphi 0, %s91
      %s92 = sphi 0, %s89
      %s93 = sphi 0, %s92
      %s109 = sphi 0, %s93
      %s113 = sphi 0, %s113
      %s115 = sphi 0, %s113
      %s116 = sphi 0, %s115
      %s130 = sphi 0, %s116
      %s134 = sphi 0, %s134
      %s136 = sphi 0, %s134
      %s137 = sphi 0, %s136
      %s151 = sphi 0, %s137
      %s155 = sphi 0, %s155
      %s157 = sphi 0, %s155
      %s158 = sphi 0, %s157
      %s172 = sphi 0, %s158
      %s178 = sphi 0, %s180
      %s181 = sphi 0, %s178
      %s182 = sphi 0, %s181
      %s198 = sphi 0, %s182
    $region4: #{tpu_custom_call.1} parent=1 // loop_header_branch
      %18 = sbr.rel (%p16) target = $region8
    $region5: #{tpu_custom_call.1} parent=1 // loop_body
      %s20 = ssub.s32 %s15, 1
      %s21 = ssub.s32 %s15, 2
      %s28 = sadd.s32 1, %s23
      %p29 = scmp.ge.s32.totalorder %s28, 1
      %s30 = scalar_select %p29, 0, %s28
      %s31 = sadd.s32 1, %s22
      %s32 = scalar_select %p29, %s31, %s22
      %p33 = scmp.ge.s32.totalorder %s32, 2
      %s34 = scalar_select %p33, 0, %s32
      %s35 = ssub.s32 %s23, %s30
      %p36 = scmp.eq.s32.totalorder %s35, 0
      %s38 = sadd.s32 %s37, 1
      %s39 = scalar_select %p36, %s37, %s38
      %p42 = pneg %p36
      %p43 = scmp.eq.s32.totalorder %s15, 1
      %p44 = por %p42, %p43
      %p45 = scmp.ne.s32.totalorder %s37, %s40
      %p46 = scmp.eq.s32.totalorder %s15, 0
      %p47 = por %p45, %p46
      %p48 = scmp.ne.s32.totalorder %s37, %s40
      %p49 = scmp.eq.s32.totalorder %s20, 1
      %p50 = por %p48, %p49
      %p51 = scmp.ne.s32.totalorder %s40, %s41
      %p52 = scmp.eq.s32.totalorder %s20, 0
      %p53 = por %p51, %p52
      %p54 = scmp.ne.s32.totalorder %s40, %s41
      %p55 = scmp.eq.s32.totalorder %s21, 1
      %p56 = por %p54, %p55
      %p58 = scmp.ne.s32.totalorder %s41, %s57
      %p59 = scmp.eq.s32.totalorder %s21, 0
      %p60 = por %p58, %p59
      %s61 = ssub.s32 %s23, %s30
      %p62 = scmp.eq.s32.totalorder %s61, 0
      %s64 = sadd.s32 %s63, 1
      %s65 = scalar_select %p62, %s63, %s64
      %p68 = pneg %p62
      %p69 = scmp.eq.s32.totalorder %s15, 1
      %p70 = por %p68, %p69
      %p71 = scmp.ne.s32.totalorder %s63, %s66
      %p72 = scmp.eq.s32.totalorder %s15, 0
      %p73 = por %p71, %p72
      %p74 = scmp.ne.s32.totalorder %s63, %s66
      %p75 = scmp.eq.s32.totalorder %s20, 1
      %p76 = por %p74, %p75
      %p77 = scmp.ne.s32.totalorder %s66, %s67
      %p78 = scmp.eq.s32.totalorder %s20, 0
      %p79 = por %p77, %p78
      %p80 = scmp.ne.s32.totalorder %s66, %s67
      %p81 = scmp.eq.s32.totalorder %s21, 1
      %p82 = por %p80, %p81
      %p84 = scmp.ne.s32.totalorder %s67, %s83
      %p85 = scmp.eq.s32.totalorder %s21, 0
      %p86 = por %p84, %p85
      %s87 = ssub.s32 %s23, %s30
      %p88 = scmp.eq.s32.totalorder %s87, 0
      %s90 = sadd.s32 %s89, 1
      %s91 = scalar_select %p88, %s89, %s90
      %p94 = pneg %p88
      %p95 = scmp.eq.s32.totalorder %s15, 1
      %p96 = por %p94, %p95
      %p97 = scmp.ne.s32.totalorder %s89, %s92
      %p98 = scmp.eq.s32.totalorder %s15, 0
      %p99 = por %p97, %p98
      %p100 = scmp.ne.s32.totalorder %s89, %s92
      %p101 = scmp.eq.s32.totalorder %s20, 1
      %p102 = por %p100, %p101
      %p103 = scmp.ne.s32.totalorder %s92, %s93
      %p104 = scmp.eq.s32.totalorder %s20, 0
      %p105 = por %p103, %p104
      %p106 = scmp.ne.s32.totalorder %s92, %s93
      %p107 = scmp.eq.s32.totalorder %s21, 1
      %p108 = por %p106, %p107
      %p110 = scmp.ne.s32.totalorder %s93, %s109
      %p111 = scmp.eq.s32.totalorder %s21, 0
      %p112 = por %p110, %p111
      %s114 = sadd.s32 %s113, 1
      %p117 = scmp.eq.s32.totalorder %s15, 1
      %p118 = scmp.ne.s32.totalorder %s113, %s115
      %p119 = scmp.eq.s32.totalorder %s15, 0
      %p120 = por %p118, %p119
      %p121 = scmp.ne.s32.totalorder %s113, %s115
      %p122 = scmp.eq.s32.totalorder %s20, 1
      %p123 = por %p121, %p122
      %p124 = scmp.ne.s32.totalorder %s115, %s116
      %p125 = scmp.eq.s32.totalorder %s20, 0
      %p126 = por %p124, %p125
      %p127 = scmp.ne.s32.totalorder %s115, %s116
      %p128 = scmp.eq.s32.totalorder %s21, 1
      %p129 = por %p127, %p128
      %p131 = scmp.ne.s32.totalorder %s116, %s130
      %p132 = scmp.eq.s32.totalorder %s21, 0
      %p133 = por %p131, %p132
      %s135 = sadd.s32 %s134, 1
      %p138 = scmp.eq.s32.totalorder %s15, 1
      %p139 = scmp.ne.s32.totalorder %s134, %s136
      %p140 = scmp.eq.s32.totalorder %s15, 0
      %p141 = por %p139, %p140
      %p142 = scmp.ne.s32.totalorder %s134, %s136
      %p143 = scmp.eq.s32.totalorder %s20, 1
      %p144 = por %p142, %p143
      %p145 = scmp.ne.s32.totalorder %s136, %s137
      %p146 = scmp.eq.s32.totalorder %s20, 0
      %p147 = por %p145, %p146
      %p148 = scmp.ne.s32.totalorder %s136, %s137
      %p149 = scmp.eq.s32.totalorder %s21, 1
      %p150 = por %p148, %p149
      %p152 = scmp.ne.s32.totalorder %s137, %s151
      %p153 = scmp.eq.s32.totalorder %s21, 0
      %p154 = por %p152, %p153
      %s156 = sadd.s32 %s155, 1
      %p159 = scmp.eq.s32.totalorder %s15, 1
      %p160 = scmp.ne.s32.totalorder %s155, %s157
      %p161 = scmp.eq.s32.totalorder %s15, 0
      %p162 = por %p160, %p161
      %p163 = scmp.ne.s32.totalorder %s155, %s157
      %p164 = scmp.eq.s32.totalorder %s20, 1
      %p165 = por %p163, %p164
      %p166 = scmp.ne.s32.totalorder %s157, %s158
      %p167 = scmp.eq.s32.totalorder %s20, 0
      %p168 = por %p166, %p167
      %p169 = scmp.ne.s32.totalorder %s157, %s158
      %p170 = scmp.eq.s32.totalorder %s21, 1
      %p171 = por %p169, %p170
      %p173 = scmp.ne.s32.totalorder %s158, %s172
      %p174 = scmp.eq.s32.totalorder %s21, 0
      %p175 = por %p173, %p174
      %s176 = ssub.s32 %s22, %s34
      %p177 = scmp.eq.s32.totalorder %s176, 0
      %s179 = sadd.s32 %s178, 1
      %s180 = scalar_select %p177, %s178, %s179
      %p183 = pneg %p177
      %p184 = scmp.eq.s32.totalorder %s15, 1
      %p185 = por %p183, %p184
      %p186 = scmp.ne.s32.totalorder %s178, %s181
      %p187 = scmp.eq.s32.totalorder %s15, 0
      %p188 = por %p186, %p187
      %p189 = scmp.ne.s32.totalorder %s178, %s181
      %p190 = scmp.eq.s32.totalorder %s20, 1
      %p191 = por %p189, %p190
      %p192 = scmp.ne.s32.totalorder %s181, %s182
      %p193 = scmp.eq.s32.totalorder %s20, 0
      %p194 = por %p192, %p193
      %p195 = scmp.ne.s32.totalorder %s181, %s182
      %p196 = scmp.eq.s32.totalorder %s21, 1
      %p197 = por %p195, %p196
      %p199 = scmp.ne.s32.totalorder %s182, %s198
      %p200 = scmp.eq.s32.totalorder %s21, 0
      %p201 = por %p199, %p200
      %p202 = scmp.le.s32.totalorder 1, %s15
      %p203 = scmp.lt.s32.totalorder %s15, 3
      %p204 = pnand %p202, %p203
      %p205 = pneg %p204
      // Predicated region
      $region9: #{tpu_custom_call.1} parent=5 // pred_check
        _
      $region10: #{tpu_custom_call.1} parent=5 // pred_check_branch
        %207 = sbr.rel (%p204) target = $region12
      $region11: #{tpu_custom_call.1} parent=5 // pred_region
        %s208 = ssub.s32 %s15, 1
        // Predicated region
        $region13: #{tpu_custom_call.1} parent=11 // pred_check
          %p209 = pneg %p53
        $region14: #{tpu_custom_call.1} parent=11 // pred_check_branch
          %211 = sbr.rel (%p209) target = $region16
        $region15: #{tpu_custom_call.1} parent=11 // pred_region
          %s212 = smul.u32 32, %s25
          %p213 = scmp.lt.s32.totalorder %s212, 31
          %s214 = scalar_select %p213, %s212, 31
          %s215 = smul.addr %s214, 8
          %s216 = scalar_lea.vmem %s0, %s215
          %s217 = smul.u32 32, %s25
        $region16: #{tpu_custom_call.1} parent=11 // pred_fallthru
          _
        // Predicated region
        $region17: #{tpu_custom_call.1} parent=11 // pred_check
          %p218 = pneg %p79
        $region18: #{tpu_custom_call.1} parent=11 // pred_check_branch
          %220 = sbr.rel (%p218) target = $region20
        $region19: #{tpu_custom_call.1} parent=11 // pred_region
          %s221 = smul.u32 32, %s25
          %p222 = scmp.lt.s32.totalorder %s221, 31
          %s223 = scalar_select %p222, %s221, 31
          %s224 = smul.addr %s223, 8
          %s225 = scalar_lea.vmem %s1, %s224
          %s226 = smul.u32 32, %s25
        $region20: #{tpu_custom_call.1} parent=11 // pred_fallthru
          _
        // Predicated region
        $region21: #{tpu_custom_call.1} parent=11 // pred_check
          %p227 = pneg %p105
        $region22: #{tpu_custom_call.1} parent=11 // pred_check_branch
          %229 = sbr.rel (%p227) target = $region24
        $region23: #{tpu_custom_call.1} parent=11 // pred_region
          %s230 = smul.u32 2, %s25
          %p231 = scmp.lt.s32.totalorder %s230, 1
          %s232 = scalar_select %p231, %s230, 1
          %s233 = smul.addr %s232, 4
          %s234 = scalar_lea.vmem %s2, %s233
          %s235 = smul.u32 2, %s25
        $region24: #{tpu_custom_call.1} parent=11 // pred_fallthru
          _
        // Predicated region
        $region25: #{tpu_custom_call.1} parent=11 // pred_check
          %p236 = pneg %p126
        $region26: #{tpu_custom_call.1} parent=11 // pred_check_branch
          %238 = sbr.rel (%p236) target = $region28
        $region27: #{tpu_custom_call.1} parent=11 // pred_region
          _
        $region28: #{tpu_custom_call.1} parent=11 // pred_fallthru
          _
        // Predicated region
        $region29: #{tpu_custom_call.1} parent=11 // pred_check
          %p239 = pneg %p147
        $region30: #{tpu_custom_call.1} parent=11 // pred_check_branch
          %241 = sbr.rel (%p239) target = $region32
        $region31: #{tpu_custom_call.1} parent=11 // pred_region
          _
        $region32: #{tpu_custom_call.1} parent=11 // pred_fallthru
          _
        // Predicated region
        $region33: #{tpu_custom_call.1} parent=11 // pred_check
          %p242 = pneg %p168
        $region34: #{tpu_custom_call.1} parent=11 // pred_check_branch
          %244 = sbr.rel (%p242) target = $region36
        $region35: #{tpu_custom_call.1} parent=11 // pred_region
          _
        $region36: #{tpu_custom_call.1} parent=11 // pred_fallthru
          _
      $region12: #{tpu_custom_call.1} parent=5 // pred_fallthru
        _
      %p245 = scmp.lt.s32.totalorder %s15, 2
      // Predicated region
      $region37: #{tpu_custom_call.1} parent=5 // pred_check
        %p246 = pneg %p245
      $region38: #{tpu_custom_call.1} parent=5 // pred_check_branch
        %248 = sbr.rel (%p246) target = $region40
      $region39: #{tpu_custom_call.1} parent=5 // pred_region
        _
      $region40: #{tpu_custom_call.1} parent=5 // pred_fallthru
        _
      %p249 = scmp.le.s32.totalorder 1, %s15
      %p250 = scmp.lt.s32.totalorder %s15, 3
      %p251 = pnand %p249, %p250
      %p252 = pneg %p251
      // Predicated region
      $region41: #{tpu_custom_call.1} parent=5 // pred_check
        _
      $region42: #{tpu_custom_call.1} parent=5 // pred_check_branch
        %254 = sbr.rel (%p251) target = $region44
      $region43: #{tpu_custom_call.1} parent=5 // pred_region
        %s255 = ssub.s32 %s15, 1
        %s256 = smul.u32 32, %s25
        %p257 = scmp.lt.s32.totalorder %s256, 31
        %s258 = scalar_select %p257, %s256, 31
        %s259 = smul.addr %s258, 8
        %s260 = scalar_lea.vmem %s0, %s259
        %p261 = pneg %p53
        %p262 = pneg %p50
        %s263 = smul.u32 32, %s25
        %p264 = scmp.lt.s32.totalorder %s263, 31
        %s265 = scalar_select %p264, %s263, 31
        %s266 = smul.addr %s265, 8
        %s267 = scalar_lea.vmem %s1, %s266
        %p268 = pneg %p79
        %p269 = pneg %p76
        %s270 = smul.u32 2, %s25
        %p271 = scmp.lt.s32.totalorder %s270, 1
        %s272 = scalar_select %p271, %s270, 1
        %s273 = smul.addr %s272, 4
        %s274 = scalar_lea.vmem %s2, %s273
        %p275 = pneg %p105
        %p276 = pneg %p102
        %p277 = pneg %p126
        %p278 = pneg %p123
        %p279 = pneg %p147
        %p280 = pneg %p144
        %p281 = pneg %p168
        %p282 = pneg %p165
        %p283 = pneg %p194
        %p284 = pneg %p191
        %s285 = sand.u32 %s181, 1
        %s286 = scalar_lea.sflag [#allocation4], %s285
        %s287 = sand.u32 %s181, 1
        %s288 = smul.addr %s287, 32
        %s289 = scalar_lea.vmem [#allocation3], %s288
        %s290 = smul.u32 32, %s25
        %p291 = scmp.lt.s32.totalorder %s290, 31
        %s292 = scalar_select %p291, %s290, 31
        %s293 = smul.addr %s292, 8
        %s294 = scalar_lea.vmem %s0, %s293
        %s295 = smul.u32 32, %s25
        %s296 = smul.u32 32, %s25
        %p297 = scmp.lt.s32.totalorder %s296, 31
        %s298 = scalar_select %p297, %s296, 31
        %s299 = smul.addr %s298, 8
        %s300 = scalar_lea.vmem %s1, %s299
        %s301 = smul.u32 32, %s25
        %s302 = smul.u32 2, %s25
        %p303 = scmp.lt.s32.totalorder %s302, 1
        %s304 = scalar_select %p303, %s302, 1
        %s305 = smul.addr %s304, 4
        %s306 = scalar_lea.vmem %s2, %s305
        %s307 = smul.u32 2, %s25
        %s308 = smul.u32 2, %s24
        %p309 = scmp.eq.s32.totalorder %s25, 0
        // Predicated region
        $region45: #{tpu_custom_call.1} parent=43 // pred_check
          %p310 = pneg %p309
        $region46: #{tpu_custom_call.1} parent=43 // pred_check_branch
          %312 = sbr.rel (%p310) target = $region48
        $region47: #{tpu_custom_call.1} parent=43 // pred_region
          %313 = vst [vmem:[#allocation2] sm:$0xff] 0.0
          %314 = vst [vmem:[%s289] sm:$0xff] -inf
          %315 = vst [vmem:[%s289 + $0x8] sm:$0xff] -inf
          %316 = vst [vmem:[%s289 + $0x10] sm:$0xff] -inf
          %317 = vst [vmem:[%s289 + $0x18] sm:$0xff] -inf
        $region48: #{tpu_custom_call.1} parent=43 // pred_fallthru
          _
        %v318 = vld [vmem:[%s294] sm:$0xff]
        %v319 = vld [vmem:[%s294 + $0x8] sm:$0xff]
        %v320 = vld [vmem:[%s294 + $0x10] sm:$0xff]
        %v321 = vld [vmem:[%s294 + $0x18] sm:$0xff]
        %v322 = vld [vmem:[%s294 + $0x20] sm:$0xff]
        %v323 = vld [vmem:[%s294 + $0x28] sm:$0xff]
        %v324 = vld [vmem:[%s294 + $0x30] sm:$0xff]
        %v325 = vld [vmem:[%s294 + $0x38] sm:$0xff]
        %v326 = vld [vmem:[%s294 + $0x40] sm:$0xff]
        %v327 = vld [vmem:[%s294 + $0x48] sm:$0xff]
        %v328 = vld [vmem:[%s294 + $0x50] sm:$0xff]
        %v329 = vld [vmem:[%s294 + $0x58] sm:$0xff]
        %v330 = vld [vmem:[%s294 + $0x60] sm:$0xff]
        %v331 = vld [vmem:[%s294 + $0x68] sm:$0xff]
        %v332 = vld [vmem:[%s294 + $0x70] sm:$0xff]
        %v333 = vld [vmem:[%s294 + $0x78] sm:$0xff]
        %v334 = vld [vmem:[%s294 + $0x80] sm:$0xff]
        %v335 = vld [vmem:[%s294 + $0x88] sm:$0xff]
        %v336 = vld [vmem:[%s294 + $0x90] sm:$0xff]
        %v337 = vld [vmem:[%s294 + $0x98] sm:$0xff]
        %v338 = vld [vmem:[%s294 + $0xa0] sm:$0xff]
        %v339 = vld [vmem:[%s294 + $0xa8] sm:$0xff]
        %v340 = vld [vmem:[%s294 + $0xb0] sm:$0xff]
        %v341 = vld [vmem:[%s294 + $0xb8] sm:$0xff]
        %v342 = vld [vmem:[%s294 + $0xc0] sm:$0xff]
        %v343 = vld [vmem:[%s294 + $0xc8] sm:$0xff]
        %v344 = vld [vmem:[%s294 + $0xd0] sm:$0xff]
        %v345 = vld [vmem:[%s294 + $0xd8] sm:$0xff]
        %v346 = vld [vmem:[%s294 + $0xe0] sm:$0xff]
        %v347 = vld [vmem:[%s294 + $0xe8] sm:$0xff]
        %v348 = vld [vmem:[%s294 + $0xf0] sm:$0xff]
        %v349 = vld [vmem:[%s294 + $0xf8] sm:$0xff]
        %s350 = smul.u32 %s24, 256
        %v351 = vlaneseq
        %v352 = vand.u32 %v351, 127
        %v353 = vadd.s32 %v352, 128
        %v354 = vstv %s350
        %v355 = vadd.s32 %v354, %v352
        %v356 = vadd.s32 %v354, %v353
        %357 = vset.pattern.permute.xlu0 0
        %358 = vperm.xlu0 %357, %v318
        %v359 = vpop.permute.xlu0 %358
        %360 = vset.pattern.permute.xlu0 0
        %361 = vperm.xlu0 %360, %v319
        %v362 = vpop.permute.xlu0 %361
        %363 = vset.pattern.permute.xlu0 0
        %364 = vperm.xlu0 %363, %v320
        %v365 = vpop.permute.xlu0 %364
        %366 = vset.pattern.permute.xlu0 0
        %367 = vperm.xlu0 %366, %v321
        %v368 = vpop.permute.xlu0 %367
        %369 = vset.pattern.permute.xlu0 0
        %370 = vperm.xlu0 %369, %v322
        %v371 = vpop.permute.xlu0 %370
        %372 = vset.pattern.permute.xlu0 0
        %373 = vperm.xlu0 %372, %v323
        %v374 = vpop.permute.xlu0 %373
        %375 = vset.pattern.permute.xlu0 0
        %376 = vperm.xlu0 %375, %v324
        %v377 = vpop.permute.xlu0 %376
        %378 = vset.pattern.permute.xlu0 0
        %379 = vperm.xlu0 %378, %v325
        %v380 = vpop.permute.xlu0 %379
        %381 = vset.pattern.permute.xlu0 0
        %382 = vperm.xlu0 %381, %v326
        %v383 = vpop.permute.xlu0 %382
        %384 = vset.pattern.permute.xlu0 0
        %385 = vperm.xlu0 %384, %v327
        %v386 = vpop.permute.xlu0 %385
        %387 = vset.pattern.permute.xlu0 0
        %388 = vperm.xlu0 %387, %v328
        %v389 = vpop.permute.xlu0 %388
        %390 = vset.pattern.permute.xlu0 0
        %391 = vperm.xlu0 %390, %v329
        %v392 = vpop.permute.xlu0 %391
        %393 = vset.pattern.permute.xlu0 0
        %394 = vperm.xlu0 %393, %v330
        %v395 = vpop.permute.xlu0 %394
        %396 = vset.pattern.permute.xlu0 0
        %397 = vperm.xlu0 %396, %v331
        %v398 = vpop.permute.xlu0 %397
        %399 = vset.pattern.permute.xlu0 0
        %400 = vperm.xlu0 %399, %v332
        %v401 = vpop.permute.xlu0 %400
        %402 = vset.pattern.permute.xlu0 0
        %403 = vperm.xlu0 %402, %v333
        %v404 = vpop.permute.xlu0 %403
        %405 = vset.pattern.permute.xlu0 0
        %406 = vperm.xlu0 %405, %v334
        %v407 = vpop.permute.xlu0 %406
        %408 = vset.pattern.permute.xlu0 0
        %409 = vperm.xlu0 %408, %v335
        %v410 = vpop.permute.xlu0 %409
        %411 = vset.pattern.permute.xlu0 0
        %412 = vperm.xlu0 %411, %v336
        %v413 = vpop.permute.xlu0 %412
        %414 = vset.pattern.permute.xlu0 0
        %415 = vperm.xlu0 %414, %v337
        %v416 = vpop.permute.xlu0 %415
        %417 = vset.pattern.permute.xlu0 0
        %418 = vperm.xlu0 %417, %v338
        %v419 = vpop.permute.xlu0 %418
        %420 = vset.pattern.permute.xlu0 0
        %421 = vperm.xlu0 %420, %v339
        %v422 = vpop.permute.xlu0 %421
        %423 = vset.pattern.permute.xlu0 0
        %424 = vperm.xlu0 %423, %v340
        %v425 = vpop.permute.xlu0 %424
        %426 = vset.pattern.permute.xlu0 0
        %427 = vperm.xlu0 %426, %v341
        %v428 = vpop.permute.xlu0 %427
        %429 = vset.pattern.permute.xlu0 0
        %430 = vperm.xlu0 %429, %v342
        %v431 = vpop.permute.xlu0 %430
        %432 = vset.pattern.permute.xlu0 0
        %433 = vperm.xlu0 %432, %v343
        %v434 = vpop.permute.xlu0 %433
        %435 = vset.pattern.permute.xlu0 0
        %436 = vperm.xlu0 %435, %v344
        %v437 = vpop.permute.xlu0 %436
        %438 = vset.pattern.permute.xlu0 0
        %439 = vperm.xlu0 %438, %v345
        %v440 = vpop.permute.xlu0 %439
        %441 = vset.pattern.permute.xlu0 0
        %442 = vperm.xlu0 %441, %v346
        %v443 = vpop.permute.xlu0 %442
        %444 = vset.pattern.permute.xlu0 0
        %445 = vperm.xlu0 %444, %v347
        %v446 = vpop.permute.xlu0 %445
        %447 = vset.pattern.permute.xlu0 0
        %448 = vperm.xlu0 %447, %v348
        %v449 = vpop.permute.xlu0 %448
        %450 = vset.pattern.permute.xlu0 0
        %451 = vperm.xlu0 %450, %v349
        %v452 = vpop.permute.xlu0 %451
        %vm453 = vcmp.eq.s32.totalorder %v359, %v355
        %vm454 = vcmp.eq.s32.totalorder %v359, %v356
        %vm455 = vcmp.eq.s32.totalorder %v362, %v355
        %vm456 = vcmp.eq.s32.totalorder %v362, %v356
        %vm457 = vcmp.eq.s32.totalorder %v365, %v355
        %vm458 = vcmp.eq.s32.totalorder %v365, %v356
        %vm459 = vcmp.eq.s32.totalorder %v368, %v355
        %vm460 = vcmp.eq.s32.totalorder %v368, %v356
        %vm461 = vcmp.eq.s32.totalorder %v371, %v355
        %vm462 = vcmp.eq.s32.totalorder %v371, %v356
        %vm463 = vcmp.eq.s32.totalorder %v374, %v355
        %vm464 = vcmp.eq.s32.totalorder %v374, %v356
        %vm465 = vcmp.eq.s32.totalorder %v377, %v355
        %vm466 = vcmp.eq.s32.totalorder %v377, %v356
        %vm467 = vcmp.eq.s32.totalorder %v380, %v355
        %vm468 = vcmp.eq.s32.totalorder %v380, %v356
        %vm469 = vcmp.eq.s32.totalorder %v383, %v355
        %vm470 = vcmp.eq.s32.totalorder %v383, %v356
        %vm471 = vcmp.eq.s32.totalorder %v386, %v355
        %vm472 = vcmp.eq.s32.totalorder %v386, %v356
        %vm473 = vcmp.eq.s32.totalorder %v389, %v355
        %vm474 = vcmp.eq.s32.totalorder %v389, %v356
        %vm475 = vcmp.eq.s32.totalorder %v392, %v355
        %vm476 = vcmp.eq.s32.totalorder %v392, %v356
        %vm477 = vcmp.eq.s32.totalorder %v395, %v355
        %vm478 = vcmp.eq.s32.totalorder %v395, %v356
        %vm479 = vcmp.eq.s32.totalorder %v398, %v355
        %vm480 = vcmp.eq.s32.totalorder %v398, %v356
        %vm481 = vcmp.eq.s32.totalorder %v401, %v355
        %vm482 = vcmp.eq.s32.totalorder %v401, %v356
        %vm483 = vcmp.eq.s32.totalorder %v404, %v355
        %vm484 = vcmp.eq.s32.totalorder %v404, %v356
        %vm485 = vcmp.eq.s32.totalorder %v407, %v355
        %vm486 = vcmp.eq.s32.totalorder %v407, %v356
        %vm487 = vcmp.eq.s32.totalorder %v410, %v355
        %vm488 = vcmp.eq.s32.totalorder %v410, %v356
        %vm489 = vcmp.eq.s32.totalorder %v413, %v355
        %vm490 = vcmp.eq.s32.totalorder %v413, %v356
        %vm491 = vcmp.eq.s32.totalorder %v416, %v355
        %vm492 = vcmp.eq.s32.totalorder %v416, %v356
        %vm493 = vcmp.eq.s32.totalorder %v419, %v355
        %vm494 = vcmp.eq.s32.totalorder %v419, %v356
        %vm495 = vcmp.eq.s32.totalorder %v422, %v355
        %vm496 = vcmp.eq.s32.totalorder %v422, %v356
        %vm497 = vcmp.eq.s32.totalorder %v425, %v355
        %vm498 = vcmp.eq.s32.totalorder %v425, %v356
        %vm499 = vcmp.eq.s32.totalorder %v428, %v355
        %vm500 = vcmp.eq.s32.totalorder %v428, %v356
        %vm501 = vcmp.eq.s32.totalorder %v431, %v355
        %vm502 = vcmp.eq.s32.totalorder %v431, %v356
        %vm503 = vcmp.eq.s32.totalorder %v434, %v355
        %vm504 = vcmp.eq.s32.totalorder %v434, %v356
        %vm505 = vcmp.eq.s32.totalorder %v437, %v355
        %vm506 = vcmp.eq.s32.totalorder %v437, %v356
        %vm507 = vcmp.eq.s32.totalorder %v440, %v355
        %vm508 = vcmp.eq.s32.totalorder %v440, %v356
        %vm509 = vcmp.eq.s32.totalorder %v443, %v355
        %vm510 = vcmp.eq.s32.totalorder %v443, %v356
        %vm511 = vcmp.eq.s32.totalorder %v446, %v355
        %vm512 = vcmp.eq.s32.totalorder %v446, %v356
        %vm513 = vcmp.eq.s32.totalorder %v449, %v355
        %vm514 = vcmp.eq.s32.totalorder %v449, %v356
        %vm515 = vcmp.eq.s32.totalorder %v452, %v355
        %vm516 = vcmp.eq.s32.totalorder %v452, %v356
        %v517 = vsel %vm453, 1, 0
        %v518 = vsel %vm454, 1, 0
        %v519 = vsel %vm455, 1, 0
        %v520 = vsel %vm456, 1, 0
        %v521 = vsel %vm457, 1, 0
        %v522 = vsel %vm458, 1, 0
        %v523 = vsel %vm459, 1, 0
        %v524 = vsel %vm460, 1, 0
        %v525 = vsel %vm461, 1, 0
        %v526 = vsel %vm462, 1, 0
        %v527 = vsel %vm463, 1, 0
        %v528 = vsel %vm464, 1, 0
        %v529 = vsel %vm465, 1, 0
        %v530 = vsel %vm466, 1, 0
        %v531 = vsel %vm467, 1, 0
        %v532 = vsel %vm468, 1, 0
        %v533 = vsel %vm469, 1, 0
        %v534 = vsel %vm470, 1, 0
        %v535 = vsel %vm471, 1, 0
        %v536 = vsel %vm472, 1, 0
        %v537 = vsel %vm473, 1, 0
        %v538 = vsel %vm474, 1, 0
        %v539 = vsel %vm475, 1, 0
        %v540 = vsel %vm476, 1, 0
        %v541 = vsel %vm477, 1, 0
        %v542 = vsel %vm478, 1, 0
        %v543 = vsel %vm479, 1, 0
        %v544 = vsel %vm480, 1, 0
        %v545 = vsel %vm481, 1, 0
        %v546 = vsel %vm482, 1, 0
        %v547 = vsel %vm483, 1, 0
        %v548 = vsel %vm484, 1, 0
        %v549 = vsel %vm485, 1, 0
        %v550 = vsel %vm486, 1, 0
        %v551 = vsel %vm487, 1, 0
        %v552 = vsel %vm488, 1, 0
        %v553 = vsel %vm489, 1, 0
        %v554 = vsel %vm490, 1, 0
        %v555 = vsel %vm491, 1, 0
        %v556 = vsel %vm492, 1, 0
        %v557 = vsel %vm493, 1, 0
        %v558 = vsel %vm494, 1, 0
        %v559 = vsel %vm495, 1, 0
        %v560 = vsel %vm496, 1, 0
        %v561 = vsel %vm497, 1, 0
        %v562 = vsel %vm498, 1, 0
        %v563 = vsel %vm499, 1, 0
        %v564 = vsel %vm500, 1, 0
        %v565 = vsel %vm501, 1, 0
        %v566 = vsel %vm502, 1, 0
        %v567 = vsel %vm503, 1, 0
        %v568 = vsel %vm504, 1, 0
        %v569 = vsel %vm505, 1, 0
        %v570 = vsel %vm506, 1, 0
        %v571 = vsel %vm507, 1, 0
        %v572 = vsel %vm508, 1, 0
        %v573 = vsel %vm509, 1, 0
        %v574 = vsel %vm510, 1, 0
        %v575 = vsel %vm511, 1, 0
        %v576 = vsel %vm512, 1, 0
        %v577 = vsel %vm513, 1, 0
        %v578 = vsel %vm514, 1, 0
        %v579 = vsel %vm515, 1, 0
        %v580 = vsel %vm516, 1, 0
        %v581 = vcvt.s32.f32 %v517
        %v582 = vcvt.s32.f32 %v518
        %v583 = vcvt.s32.f32 %v519
        %v584 = vcvt.s32.f32 %v520
        %v585 = vcvt.s32.f32 %v521
        %v586 = vcvt.s32.f32 %v522
        %v587 = vcvt.s32.f32 %v523
        %v588 = vcvt.s32.f32 %v524
        %v589 = vcvt.s32.f32 %v525
        %v590 = vcvt.s32.f32 %v526
        %v591 = vcvt.s32.f32 %v527
        %v592 = vcvt.s32.f32 %v528
        %v593 = vcvt.s32.f32 %v529
        %v594 = vcvt.s32.f32 %v530
        %v595 = vcvt.s32.f32 %v531
        %v596 = vcvt.s32.f32 %v532
        %v597 = vcvt.s32.f32 %v533
        %v598 = vcvt.s32.f32 %v534
        %v599 = vcvt.s32.f32 %v535
        %v600 = vcvt.s32.f32 %v536
        %v601 = vcvt.s32.f32 %v537
        %v602 = vcvt.s32.f32 %v538
        %v603 = vcvt.s32.f32 %v539
        %v604 = vcvt.s32.f32 %v540
        %v605 = vcvt.s32.f32 %v541
        %v606 = vcvt.s32.f32 %v542
        %v607 = vcvt.s32.f32 %v543
        %v608 = vcvt.s32.f32 %v544
        %v609 = vcvt.s32.f32 %v545
        %v610 = vcvt.s32.f32 %v546
        %v611 = vcvt.s32.f32 %v547
        %v612 = vcvt.s32.f32 %v548
        %v613 = vcvt.s32.f32 %v549
        %v614 = vcvt.s32.f32 %v550
        %v615 = vcvt.s32.f32 %v551
        %v616 = vcvt.s32.f32 %v552
        %v617 = vcvt.s32.f32 %v553
        %v618 = vcvt.s32.f32 %v554
        %v619 = vcvt.s32.f32 %v555
        %v620 = vcvt.s32.f32 %v556
        %v621 = vcvt.s32.f32 %v557
        %v622 = vcvt.s32.f32 %v558
        %v623 = vcvt.s32.f32 %v559
        %v624 = vcvt.s32.f32 %v560
        %v625 = vcvt.s32.f32 %v561
        %v626 = vcvt.s32.f32 %v562
        %v627 = vcvt.s32.f32 %v563
        %v628 = vcvt.s32.f32 %v564
        %v629 = vcvt.s32.f32 %v565
        %v630 = vcvt.s32.f32 %v566
        %v631 = vcvt.s32.f32 %v567
        %v632 = vcvt.s32.f32 %v568
        %v633 = vcvt.s32.f32 %v569
        %v634 = vcvt.s32.f32 %v570
        %v635 = vcvt.s32.f32 %v571
        %v636 = vcvt.s32.f32 %v572
        %v637 = vcvt.s32.f32 %v573
        %v638 = vcvt.s32.f32 %v574
        %v639 = vcvt.s32.f32 %v575
        %v640 = vcvt.s32.f32 %v576
        %v641 = vcvt.s32.f32 %v577
        %v642 = vcvt.s32.f32 %v578
        %v643 = vcvt.s32.f32 %v579
        %v644 = vcvt.s32.f32 %v580
        %v645 = vld [vmem:[#allocation2] sm:$0xff]
        %v646 = vld [vmem:[%s306] sm:$0xff]
        %v648 = vcombine.high %v646, %v646
        %650 = vmatprep.subr.mxu0 %v582
        %651 = vmatpush1.msra.mxu0 %v581
        %652 = vmatprep.subr.mxu0 %v584
        %653 = vmatpush1.msra.mxu0 %v583
        %654 = vmatprep.subr.mxu0 %v586
        %655 = vmatpush1.msra.mxu0 %v585
        %656 = vmatprep.subr.mxu0 %v588
        %657 = vmatpush1.msra.mxu0 %v587
        %658 = vmatprep.subr.mxu0 %v590
        %659 = vmatpush1.msra.mxu0 %v589
        %660 = vmatprep.subr.mxu0 %v592
        %661 = vmatpush1.msra.mxu0 %v591
        %662 = vmatprep.subr.mxu0 %v594
        %663 = vmatpush1.msra.mxu0 %v593
        %664 = vmatprep.subr.mxu0 %v596
        %665 = vmatpush1.msra.mxu0 %v595
        %666 = vmatprep.subr.mxu0 %v598
        %667 = vmatpush1.msra.mxu0 %v597
        %668 = vmatprep.subr.mxu0 %v600
        %669 = vmatpush1.msra.mxu0 %v599
        %670 = vmatprep.subr.mxu0 %v602
        %671 = vmatpush1.msra.mxu0 %v601
        %672 = vmatprep.subr.mxu0 %v604
        %673 = vmatpush1.msra.mxu0 %v603
        %674 = vmatprep.subr.mxu0 %v606
        %675 = vmatpush1.msra.mxu0 %v605
        %676 = vmatprep.subr.mxu0 %v608
        %677 = vmatpush1.msra.mxu0 %v607
        %678 = vmatprep.subr.mxu0 %v610
        %679 = vmatpush1.msra.mxu0 %v609
        %680 = vmatprep.subr.mxu0 %v612
        %681 = vmatpush1.msra.mxu0 %v611
        %682 = vmatprep.subr.mxu0 %v614
        %683 = vmatpush1.msra.mxu0 %v613
        %684 = vmatprep.subr.mxu0 %v616
        %685 = vmatpush1.msra.mxu0 %v615
        %686 = vmatprep.subr.mxu0 %v618
        %687 = vmatpush1.msra.mxu0 %v617
        %688 = vmatprep.subr.mxu0 %v620
        %689 = vmatpush1.msra.mxu0 %v619
        %690 = vmatprep.subr.mxu0 %v622
        %691 = vmatpush1.msra.mxu0 %v621
        %692 = vmatprep.subr.mxu0 %v624
        %693 = vmatpush1.msra.mxu0 %v623
        %694 = vmatprep.subr.mxu0 %v626
        %695 = vmatpush1.msra.mxu0 %v625
        %696 = vmatprep.subr.mxu0 %v628
        %697 = vmatpush1.msra.mxu0 %v627
        %698 = vmatprep.subr.mxu0 %v630
        %699 = vmatpush1.msra.mxu0 %v629
        %700 = vmatprep.subr.mxu0 %v632
        %701 = vmatpush1.msra.mxu0 %v631
        %702 = vmatprep.subr.mxu0 %v634
        %703 = vmatpush1.msra.mxu0 %v633
        %704 = vmatprep.subr.mxu0 %v636
        %705 = vmatpush1.msra.mxu0 %v635
        %706 = vmatprep.subr.mxu0 %v638
        %707 = vmatpush1.msra.mxu0 %v637
        %708 = vmatprep.subr.mxu0 %v640
        %709 = vmatpush1.msra.mxu0 %v639
        %710 = vmatprep.subr.mxu0 %v642
        %711 = vmatpush1.msra.mxu0 %v641
        %712 = vmatprep.subr.mxu0 %v644
        %713 = vmatpush1.msra.mxu0 %v643
        %714 = vmatprep.mubr.f32.mxu0 %v648
        %715 = vmatmul.mubr.f32.gmra.mrb[0].mxu0 %v646
        %v716 = vpop.f32.mrb[0].mxu0
        %v717 = vadd.f32 0.0, %v716
        %v718 = vpop.f32.mrb[0].mxu0
        %v719 = vadd.f32 0.0, %v718
        %720 = vdwg.mxu0
        %v723 = vcombine.low %v717, %v719
        %v725 = vadd.f32 %v645, %v723
        %726 = vst [vmem:[#allocation2] sm:$0xff] %v725
        %v727 = vld [vmem:[%s300] sm:$0xff]
        %v728 = vld [vmem:[%s300 + $0x8] sm:$0xff]
        %v729 = vld [vmem:[%s300 + $0x10] sm:$0xff]
        %v730 = vld [vmem:[%s300 + $0x18] sm:$0xff]
        %v731 = vld [vmem:[%s300 + $0x20] sm:$0xff]
        %v732 = vld [vmem:[%s300 + $0x28] sm:$0xff]
        %v733 = vld [vmem:[%s300 + $0x30] sm:$0xff]
        %v734 = vld [vmem:[%s300 + $0x38] sm:$0xff]
        %v735 = vld [vmem:[%s300 + $0x40] sm:$0xff]
        %v736 = vld [vmem:[%s300 + $0x48] sm:$0xff]
        %v737 = vld [vmem:[%s300 + $0x50] sm:$0xff]
        %v738 = vld [vmem:[%s300 + $0x58] sm:$0xff]
        %v739 = vld [vmem:[%s300 + $0x60] sm:$0xff]
        %v740 = vld [vmem:[%s300 + $0x68] sm:$0xff]
        %v741 = vld [vmem:[%s300 + $0x70] sm:$0xff]
        %v742 = vld [vmem:[%s300 + $0x78] sm:$0xff]
        %v743 = vld [vmem:[%s300 + $0x80] sm:$0xff]
        %v744 = vld [vmem:[%s300 + $0x88] sm:$0xff]
        %v745 = vld [vmem:[%s300 + $0x90] sm:$0xff]
        %v746 = vld [vmem:[%s300 + $0x98] sm:$0xff]
        %v747 = vld [vmem:[%s300 + $0xa0] sm:$0xff]
        %v748 = vld [vmem:[%s300 + $0xa8] sm:$0xff]
        %v749 = vld [vmem:[%s300 + $0xb0] sm:$0xff]
        %v750 = vld [vmem:[%s300 + $0xb8] sm:$0xff]
        %v751 = vld [vmem:[%s300 + $0xc0] sm:$0xff]
        %v752 = vld [vmem:[%s300 + $0xc8] sm:$0xff]
        %v753 = vld [vmem:[%s300 + $0xd0] sm:$0xff]
        %v754 = vld [vmem:[%s300 + $0xd8] sm:$0xff]
        %v755 = vld [vmem:[%s300 + $0xe0] sm:$0xff]
        %v756 = vld [vmem:[%s300 + $0xe8] sm:$0xff]
        %v757 = vld [vmem:[%s300 + $0xf0] sm:$0xff]
        %v758 = vld [vmem:[%s300 + $0xf8] sm:$0xff]
        %v759 = vld [vmem:[%s3] sm:$0xff]
        %v760 = vld [vmem:[%s3 + $0x8] sm:$0x1]
        %vm761 = vcmask 72704
        %v763 = vsel %vm761, %v727, 0
        %v766 = vsel %vm761, %v728, 0
        %v769 = vsel %vm761, %v729, 0
        %v772 = vsel %vm761, %v730, 0
        %v775 = vsel %vm761, %v731, 0
        %v778 = vsel %vm761, %v732, 0
        %v781 = vsel %vm761, %v733, 0
        %v784 = vsel %vm761, %v734, 0
        %v787 = vsel %vm761, %v735, 0
        %v790 = vsel %vm761, %v736, 0
        %v793 = vsel %vm761, %v737, 0
        %v796 = vsel %vm761, %v738, 0
        %v799 = vsel %vm761, %v739, 0
        %v802 = vsel %vm761, %v740, 0
        %v805 = vsel %vm761, %v741, 0
        %v808 = vsel %vm761, %v742, 0
        %v811 = vsel %vm761, %v743, 0
        %v814 = vsel %vm761, %v744, 0
        %v817 = vsel %vm761, %v745, 0
        %v820 = vsel %vm761, %v746, 0
        %v823 = vsel %vm761, %v747, 0
        %v826 = vsel %vm761, %v748, 0
        %v829 = vsel %vm761, %v749, 0
        %v832 = vsel %vm761, %v750, 0
        %v835 = vsel %vm761, %v751, 0
        %v838 = vsel %vm761, %v752, 0
        %v841 = vsel %vm761, %v753, 0
        %v844 = vsel %vm761, %v754, 0
        %v847 = vsel %vm761, %v755, 0
        %v850 = vsel %vm761, %v756, 0
        %v853 = vsel %vm761, %v757, 0
        %v856 = vsel %vm761, %v758, 0
        %vm858 = vcmask 1040384
        %v860 = vsel %vm858, %v760, 0
        %862 = vmatprep.subr.mxu0 0.0
        %863 = vmatpush1.msra.mxu0 %v759
        %864 = vmatprep.subr.mxu0 0.0
        %865 = vmatpush1.msra.mxu0 %v860
        %866 = vmatprep.subr.mxu0 0.0
        %867 = vmatpush1.msra.mxu0 0.0
        %868 = vmatprep.subr.mxu0 0.0
        %869 = vmatpush1.msra.mxu0 0.0
        %870 = vmatprep.subr.mxu0 0.0
        %871 = vmatpush1.msra.mxu0 0.0
        %872 = vmatprep.subr.mxu0 0.0
        %873 = vmatpush1.msra.mxu0 0.0
        %874 = vmatprep.subr.mxu0 0.0
        %875 = vmatpush1.msra.mxu0 0.0
        %876 = vmatprep.subr.mxu0 0.0
        %877 = vmatpush1.msra.mxu0 0.0
        %878 = vmatprep.subr.mxu0 0.0
        %879 = vmatpush1.msra.mxu0 0.0
        %880 = vmatprep.subr.mxu0 0.0
        %881 = vmatpush1.msra.mxu0 0.0
        %882 = vmatprep.subr.mxu0 0.0
        %883 = vmatpush1.msra.mxu0 0.0
        %884 = vmatprep.subr.mxu0 0.0
        %885 = vmatpush1.msra.mxu0 0.0
        %886 = vmatprep.subr.mxu0 0.0
        %887 = vmatpush1.msra.mxu0 0.0
        %888 = vmatprep.subr.mxu0 0.0
        %889 = vmatpush1.msra.mxu0 0.0
        %890 = vmatprep.subr.mxu0 0.0
        %891 = vmatpush1.msra.mxu0 0.0
        %892 = vmatprep.subr.mxu0 0.0
        %893 = vmatpush1.msra.mxu0 0.0
        %894 = vmatprep.subr.mxu0 0.0
        %895 = vmatpush1.msra.mxu0 0.0
        %896 = vmatprep.subr.mxu0 0.0
        %897 = vmatpush1.msra.mxu0 0.0
        %898 = vmatprep.subr.mxu0 0.0
        %899 = vmatpush1.msra.mxu0 0.0
        %900 = vmatprep.subr.mxu0 0.0
        %901 = vmatpush1.msra.mxu0 0.0
        %902 = vmatprep.subr.mxu0 0.0
        %903 = vmatpush1.msra.mxu0 0.0
        %904 = vmatprep.subr.mxu0 0.0
        %905 = vmatpush1.msra.mxu0 0.0
        %906 = vmatprep.subr.mxu0 0.0
        %907 = vmatpush1.msra.mxu0 0.0
        %908 = vmatprep.subr.mxu0 0.0
        %909 = vmatpush1.msra.mxu0 0.0
        %910 = vmatprep.subr.mxu0 0.0
        %911 = vmatpush1.msra.mxu0 0.0
        %912 = vmatprep.subr.mxu0 0.0
        %913 = vmatpush1.msra.mxu0 0.0
        %914 = vmatprep.subr.mxu0 0.0
        %915 = vmatpush1.msra.mxu0 0.0
        %916 = vmatprep.subr.mxu0 0.0
        %917 = vmatpush1.msra.mxu0 0.0
        %918 = vmatprep.subr.mxu0 0.0
        %919 = vmatpush1.msra.mxu0 0.0
        %920 = vmatprep.subr.mxu0 0.0
        %921 = vmatpush1.msra.mxu0 0.0
        %922 = vmatprep.subr.mxu0 0.0
        %923 = vmatpush1.msra.mxu0 0.0
        %924 = vmatprep.subr.mxu0 0.0
        %925 = vmatpush1.msra.mxu0 0.0
        %926 = vmatprep.mubr.f32.mxu0 0.0
        %927 = vmatmul.mubr.f32.gmra.mrb[0].mxu0 %v763
        %v928 = vpop.f32.mrb[0].mxu0
        %v929 = vadd.f32 0.0, %v928
        %v930 = vpop.f32.mrb[0].mxu0
        %931 = vmatprep.mubr.f32.mxu0 0.0
        %932 = vmatmul.mubr.f32.gmra.mrb[0].mxu0 %v766
        %v933 = vpop.f32.mrb[0].mxu0
        %v934 = vadd.f32 0.0, %v933
        %v935 = vpop.f32.mrb[0].mxu0
        %936 = vmatprep.mubr.f32.mxu0 0.0
        %937 = vmatmul.mubr.f32.gmra.mrb[0].mxu0 %v769
        %v938 = vpop.f32.mrb[0].mxu0
        %v939 = vadd.f32 0.0, %v938
        %v940 = vpop.f32.mrb[0].mxu0
        %941 = vmatprep.mubr.f32.mxu0 0.0
        %942 = vmatmul.mubr.f32.gmra.mrb[0].mxu0 %v772
        %v943 = vpop.f32.mrb[0].mxu0
        %v944 = vadd.f32 0.0, %v943
        %v945 = vpop.f32.mrb[0].mxu0
        %946 = vmatprep.mubr.f32.mxu0 0.0
        %947 = vmatmul.mubr.f32.gmra.mrb[0].mxu0 %v775
        %v948 = vpop.f32.mrb[0].mxu0
        %v949 = vadd.f32 0.0, %v948
        %v950 = vpop.f32.mrb[0].mxu0
        %951 = vmatprep.mubr.f32.mxu0 0.0
        %952 = vmatmul.mubr.f32.gmra.mrb[0].mxu0 %v778
        %v953 = vpop.f32.mrb[0].mxu0
        %v954 = vadd.f32 0.0, %v953
        %v955 = vpop.f32.mrb[0].mxu0
        %956 = vmatprep.mubr.f32.mxu0 0.0
        %957 = vmatmul.mubr.f32.gmra.mrb[0].mxu0 %v781
        %v958 = vpop.f32.mrb[0].mxu0
        %v959 = vadd.f32 0.0, %v958
        %v960 = vpop.f32.mrb[0].mxu0
        %961 = vmatprep.mubr.f32.mxu0 0.0
        %962 = vmatmul.mubr.f32.gmra.mrb[0].mxu0 %v784
        %v963 = vpop.f32.mrb[0].mxu0
        %v964 = vadd.f32 0.0, %v963
        %v965 = vpop.f32.mrb[0].mxu0
        %966 = vmatprep.mubr.f32.mxu0 0.0
        %967 = vmatmul.mubr.f32.gmra.mrb[0].mxu0 %v787
        %v968 = vpop.f32.mrb[0].mxu0
        %v969 = vadd.f32 0.0, %v968
        %v970 = vpop.f32.mrb[0].mxu0
        %971 = vmatprep.mubr.f32.mxu0 0.0
        %972 = vmatmul.mubr.f32.gmra.mrb[0].mxu0 %v790
        %v973 = vpop.f32.mrb[0].mxu0
        %v974 = vadd.f32 0.0, %v973
        %v975 = vpop.f32.mrb[0].mxu0
        %976 = vmatprep.mubr.f32.mxu0 0.0
        %977 = vmatmul.mubr.f32.gmra.mrb[0].mxu0 %v793
        %v978 = vpop.f32.mrb[0].mxu0
        %v979 = vadd.f32 0.0, %v978
        %v980 = vpop.f32.mrb[0].mxu0
        %981 = vmatprep.mubr.f32.mxu0 0.0
        %982 = vmatmul.mubr.f32.gmra.mrb[0].mxu0 %v796
        %v983 = vpop.f32.mrb[0].mxu0
        %v984 = vadd.f32 0.0, %v983
        %v985 = vpop.f32.mrb[0].mxu0
        %986 = vmatprep.mubr.f32.mxu0 0.0
        %987 = vmatmul.mubr.f32.gmra.mrb[0].mxu0 %v799
        %v988 = vpop.f32.mrb[0].mxu0
        %v989 = vadd.f32 0.0, %v988
        %v990 = vpop.f32.mrb[0].mxu0
        %991 = vmatprep.mubr.f32.mxu0 0.0
        %992 = vmatmul.mubr.f32.gmra.mrb[0].mxu0 %v802
        %v993 = vpop.f32.mrb[0].mxu0
        %v994 = vadd.f32 0.0, %v993
        %v995 = vpop.f32.mrb[0].mxu0
        %996 = vmatprep.mubr.f32.mxu0 0.0
        %997 = vmatmul.mubr.f32.gmra.mrb[0].mxu0 %v805
        %v998 = vpop.f32.mrb[0].mxu0
        %v999 = vadd.f32 0.0, %v998
        %v1000 = vpop.f32.mrb[0].mxu0
        %1001 = vmatprep.mubr.f32.mxu0 0.0
        %1002 = vmatmul.mubr.f32.gmra.mrb[0].mxu0 %v808
        %v1003 = vpop.f32.mrb[0].mxu0
        %v1004 = vadd.f32 0.0, %v1003
        %v1005 = vpop.f32.mrb[0].mxu0
        %1006 = vmatprep.mubr.f32.mxu0 0.0
        %1007 = vmatmul.mubr.f32.gmra.mrb[0].mxu0 %v811
        %v1008 = vpop.f32.mrb[0].mxu0
        %v1009 = vadd.f32 0.0, %v1008
        %v1010 = vpop.f32.mrb[0].mxu0
        %1011 = vmatprep.mubr.f32.mxu0 0.0
        %1012 = vmatmul.mubr.f32.gmra.mrb[0].mxu0 %v814
        %v1013 = vpop.f32.mrb[0].mxu0
        %v1014 = vadd.f32 0.0, %v1013
        %v1015 = vpop.f32.mrb[0].mxu0
        %1016 = vmatprep.mubr.f32.mxu0 0.0
        %1017 = vmatmul.mubr.f32.gmra.mrb[0].mxu0 %v817
        %v1018 = vpop.f32.mrb[0].mxu0
        %v1019 = vadd.f32 0.0, %v1018
        %v1020 = vpop.f32.mrb[0].mxu0
        %1021 = vmatprep.mubr.f32.mxu0 0.0
        %1022 = vmatmul.mubr.f32.gmra.mrb[0].mxu0 %v820
        %v1023 = vpop.f32.mrb[0].mxu0
        %v1024 = vadd.f32 0.0, %v1023
        %v1025 = vpop.f32.mrb[0].mxu0
        %1026 = vmatprep.mubr.f32.mxu0 0.0
        %1027 = vmatmul.mubr.f32.gmra.mrb[0].mxu0 %v823
        %v1028 = vpop.f32.mrb[0].mxu0
        %v1029 = vadd.f32 0.0, %v1028
        %v1030 = vpop.f32.mrb[0].mxu0
        %1031 = vmatprep.mubr.f32.mxu0 0.0
        %1032 = vmatmul.mubr.f32.gmra.mrb[0].mxu0 %v826
        %v1033 = vpop.f32.mrb[0].mxu0
        %v1034 = vadd.f32 0.0, %v1033
        %v1035 = vpop.f32.mrb[0].mxu0
        %1036 = vmatprep.mubr.f32.mxu0 0.0
        %1037 = vmatmul.mubr.f32.gmra.mrb[0].mxu0 %v829
        %v1038 = vpop.f32.mrb[0].mxu0
        %v1039 = vadd.f32 0.0, %v1038
        %v1040 = vpop.f32.mrb[0].mxu0
        %1041 = vmatprep.mubr.f32.mxu0 0.0
        %1042 = vmatmul.mubr.f32.gmra.mrb[0].mxu0 %v832
        %v1043 = vpop.f32.mrb[0].mxu0
        %v1044 = vadd.f32 0.0, %v1043
        %v1045 = vpop.f32.mrb[0].mxu0
        %1046 = vmatprep.mubr.f32.mxu0 0.0
        %1047 = vmatmul.mubr.f32.gmra.mrb[0].mxu0 %v835
        %v1048 = vpop.f32.mrb[0].mxu0
        %v1049 = vadd.f32 0.0, %v1048
        %v1050 = vpop.f32.mrb[0].mxu0
        %1051 = vmatprep.mubr.f32.mxu0 0.0
        %1052 = vmatmul.mubr.f32.gmra.mrb[0].mxu0 %v838
        %v1053 = vpop.f32.mrb[0].mxu0
        %v1054 = vadd.f32 0.0, %v1053
        %v1055 = vpop.f32.mrb[0].mxu0
        %1056 = vmatprep.mubr.f32.mxu0 0.0
        %1057 = vmatmul.mubr.f32.gmra.mrb[0].mxu0 %v841
        %v1058 = vpop.f32.mrb[0].mxu0
        %v1059 = vadd.f32 0.0, %v1058
        %v1060 = vpop.f32.mrb[0].mxu0
        %1061 = vmatprep.mubr.f32.mxu0 0.0
        %1062 = vmatmul.mubr.f32.gmra.mrb[0].mxu0 %v844
        %v1063 = vpop.f32.mrb[0].mxu0
        %v1064 = vadd.f32 0.0, %v1063
        %v1065 = vpop.f32.mrb[0].mxu0
        %1066 = vmatprep.mubr.f32.mxu0 0.0
        %1067 = vmatmul.mubr.f32.gmra.mrb[0].mxu0 %v847
        %v1068 = vpop.f32.mrb[0].mxu0
        %v1069 = vadd.f32 0.0, %v1068
        %v1070 = vpop.f32.mrb[0].mxu0
        %1071 = vmatprep.mubr.f32.mxu0 0.0
        %1072 = vmatmul.mubr.f32.gmra.mrb[0].mxu0 %v850
        %v1073 = vpop.f32.mrb[0].mxu0
        %v1074 = vadd.f32 0.0, %v1073
        %v1075 = vpop.f32.mrb[0].mxu0
        %1076 = vmatprep.mubr.f32.mxu0 0.0
        %1077 = vmatmul.mubr.f32.gmra.mrb[0].mxu0 %v853
        %v1078 = vpop.f32.mrb[0].mxu0
        %v1079 = vadd.f32 0.0, %v1078
        %v1080 = vpop.f32.mrb[0].mxu0
        %1081 = vmatprep.mubr.f32.mxu0 0.0
        %1082 = vmatmul.mubr.f32.gmra.mrb[0].mxu0 %v856
        %v1083 = vpop.f32.mrb[0].mxu0
        %v1084 = vadd.f32 0.0, %v1083
        %v1085 = vpop.f32.mrb[0].mxu0
        %1086 = vdwg.mxu0
        %1088 = vset.pattern.permute.xlu0 0
        %1089 = vperm.xlu0 %1088, %v929
        %v1090 = vpop.permute.xlu0 %1089
        %1093 = vset.pattern.permute.xlu0 0
        %1094 = vperm.xlu0 %1093, %v934
        %v1095 = vpop.permute.xlu0 %1094
        %1098 = vset.pattern.permute.xlu0 0
        %1099 = vperm.xlu0 %1098, %v939
        %v1100 = vpop.permute.xlu0 %1099
        %1103 = vset.pattern.permute.xlu0 0
        %1104 = vperm.xlu0 %1103, %v944
        %v1105 = vpop.permute.xlu0 %1104
        %1108 = vset.pattern.permute.xlu0 0
        %1109 = vperm.xlu0 %1108, %v949
        %v1110 = vpop.permute.xlu0 %1109
        %1113 = vset.pattern.permute.xlu0 0
        %1114 = vperm.xlu0 %1113, %v954
        %v1115 = vpop.permute.xlu0 %1114
        %1118 = vset.pattern.permute.xlu0 0
        %1119 = vperm.xlu0 %1118, %v959
        %v1120 = vpop.permute.xlu0 %1119
        %1123 = vset.pattern.permute.xlu0 0
        %1124 = vperm.xlu0 %1123, %v964
        %v1125 = vpop.permute.xlu0 %1124
        %1128 = vset.pattern.permute.xlu0 0
        %1129 = vperm.xlu0 %1128, %v969
        %v1130 = vpop.permute.xlu0 %1129
        %1133 = vset.pattern.permute.xlu0 0
        %1134 = vperm.xlu0 %1133, %v974
        %v1135 = vpop.permute.xlu0 %1134
        %1138 = vset.pattern.permute.xlu0 0
        %1139 = vperm.xlu0 %1138, %v979
        %v1140 = vpop.permute.xlu0 %1139
        %1143 = vset.pattern.permute.xlu0 0
        %1144 = vperm.xlu0 %1143, %v984
        %v1145 = vpop.permute.xlu0 %1144
        %1148 = vset.pattern.permute.xlu0 0
        %1149 = vperm.xlu0 %1148, %v989
        %v1150 = vpop.permute.xlu0 %1149
        %1153 = vset.pattern.permute.xlu0 0
        %1154 = vperm.xlu0 %1153, %v994
        %v1155 = vpop.permute.xlu0 %1154
        %1158 = vset.pattern.permute.xlu0 0
        %1159 = vperm.xlu0 %1158, %v999
        %v1160 = vpop.permute.xlu0 %1159
        %1163 = vset.pattern.permute.xlu0 0
        %1164 = vperm.xlu0 %1163, %v1004
        %v1165 = vpop.permute.xlu0 %1164
        %1168 = vset.pattern.permute.xlu0 0
        %1169 = vperm.xlu0 %1168, %v1009
        %v1170 = vpop.permute.xlu0 %1169
        %1173 = vset.pattern.permute.xlu0 0
        %1174 = vperm.xlu0 %1173, %v1014
        %v1175 = vpop.permute.xlu0 %1174
        %1178 = vset.pattern.permute.xlu0 0
        %1179 = vperm.xlu0 %1178, %v1019
        %v1180 = vpop.permute.xlu0 %1179
        %1183 = vset.pattern.permute.xlu0 0
        %1184 = vperm.xlu0 %1183, %v1024
        %v1185 = vpop.permute.xlu0 %1184
        %1188 = vset.pattern.permute.xlu0 0
        %1189 = vperm.xlu0 %1188, %v1029
        %v1190 = vpop.permute.xlu0 %1189
        %1193 = vset.pattern.permute.xlu0 0
        %1194 = vperm.xlu0 %1193, %v1034
        %v1195 = vpop.permute.xlu0 %1194
        %1198 = vset.pattern.permute.xlu0 0
        %1199 = vperm.xlu0 %1198, %v1039
        %v1200 = vpop.permute.xlu0 %1199
        %1203 = vset.pattern.permute.xlu0 0
        %1204 = vperm.xlu0 %1203, %v1044
        %v1205 = vpop.permute.xlu0 %1204
        %1208 = vset.pattern.permute.xlu0 0
        %1209 = vperm.xlu0 %1208, %v1049
        %v1210 = vpop.permute.xlu0 %1209
        %1213 = vset.pattern.permute.xlu0 0
        %1214 = vperm.xlu0 %1213, %v1054
        %v1215 = vpop.permute.xlu0 %1214
        %1218 = vset.pattern.permute.xlu0 0
        %1219 = vperm.xlu0 %1218, %v1059
        %v1220 = vpop.permute.xlu0 %1219
        %1223 = vset.pattern.permute.xlu0 0
        %1224 = vperm.xlu0 %1223, %v1064
        %v1225 = vpop.permute.xlu0 %1224
        %1228 = vset.pattern.permute.xlu0 0
        %1229 = vperm.xlu0 %1228, %v1069
        %v1230 = vpop.permute.xlu0 %1229
        %1233 = vset.pattern.permute.xlu0 0
        %1234 = vperm.xlu0 %1233, %v1074
        %v1235 = vpop.permute.xlu0 %1234
        %1238 = vset.pattern.permute.xlu0 0
        %1239 = vperm.xlu0 %1238, %v1079
        %v1240 = vpop.permute.xlu0 %1239
        %1243 = vset.pattern.permute.xlu0 0
        %1244 = vperm.xlu0 %1243, %v1084
        %v1245 = vpop.permute.xlu0 %1244
        %v1247 = vsel %vm453, %v1090, -inf
        %v1248 = vsel %vm454, %v1090, -inf
        %v1249 = vsel %vm455, %v1095, -inf
        %v1250 = vsel %vm456, %v1095, -inf
        %v1251 = vsel %vm457, %v1100, -inf
        %v1252 = vsel %vm458, %v1100, -inf
        %v1253 = vsel %vm459, %v1105, -inf
        %v1254 = vsel %vm460, %v1105, -inf
        %v1255 = vsel %vm461, %v1110, -inf
        %v1256 = vsel %vm462, %v1110, -inf
        %v1257 = vsel %vm463, %v1115, -inf
        %v1258 = vsel %vm464, %v1115, -inf
        %v1259 = vsel %vm465, %v1120, -inf
        %v1260 = vsel %vm466, %v1120, -inf
        %v1261 = vsel %vm467, %v1125, -inf
        %v1262 = vsel %vm468, %v1125, -inf
        %v1263 = vsel %vm469, %v1130, -inf
        %v1264 = vsel %vm470, %v1130, -inf
        %v1265 = vsel %vm471, %v1135, -inf
        %v1266 = vsel %vm472, %v1135, -inf
        %v1267 = vsel %vm473, %v1140, -inf
        %v1268 = vsel %vm474, %v1140, -inf
        %v1269 = vsel %vm475, %v1145, -inf
        %v1270 = vsel %vm476, %v1145, -inf
        %v1271 = vsel %vm477, %v1150, -inf
        %v1272 = vsel %vm478, %v1150, -inf
        %v1273 = vsel %vm479, %v1155, -inf
        %v1274 = vsel %vm480, %v1155, -inf
        %v1275 = vsel %vm481, %v1160, -inf
        %v1276 = vsel %vm482, %v1160, -inf
        %v1277 = vsel %vm483, %v1165, -inf
        %v1278 = vsel %vm484, %v1165, -inf
        %v1279 = vsel %vm485, %v1170, -inf
        %v1280 = vsel %vm486, %v1170, -inf
        %v1281 = vsel %vm487, %v1175, -inf
        %v1282 = vsel %vm488, %v1175, -inf
        %v1283 = vsel %vm489, %v1180, -inf
        %v1284 = vsel %vm490, %v1180, -inf
        %v1285 = vsel %vm491, %v1185, -inf
        %v1286 = vsel %vm492, %v1185, -inf
        %v1287 = vsel %vm493, %v1190, -inf
        %v1288 = vsel %vm494, %v1190, -inf
        %v1289 = vsel %vm495, %v1195, -inf
        %v1290 = vsel %vm496, %v1195, -inf
        %v1291 = vsel %vm497, %v1200, -inf
        %v1292 = vsel %vm498, %v1200, -inf
        %v1293 = vsel %vm499, %v1205, -inf
        %v1294 = vsel %vm500, %v1205, -inf
        %v1295 = vsel %vm501, %v1210, -inf
        %v1296 = vsel %vm502, %v1210, -inf
        %v1297 = vsel %vm503, %v1215, -inf
        %v1298 = vsel %vm504, %v1215, -inf
        %v1299 = vsel %vm505, %v1220, -inf
        %v1300 = vsel %vm506, %v1220, -inf
        %v1301 = vsel %vm507, %v1225, -inf
        %v1302 = vsel %vm508, %v1225, -inf
        %v1303 = vsel %vm509, %v1230, -inf
        %v1304 = vsel %vm510, %v1230, -inf
        %v1305 = vsel %vm511, %v1235, -inf
        %v1306 = vsel %vm512, %v1235, -inf
        %v1307 = vsel %vm513, %v1240, -inf
        %v1308 = vsel %vm514, %v1240, -inf
        %v1309 = vsel %vm515, %v1245, -inf
        %v1310 = vsel %vm516, %v1245, -inf
        %v1311 = vmax.f32 %v1247, %v1251
        %v1312 = vmax.f32 %v1249, %v1253
        %v1313 = vmax.f32 %v1311, %v1255
        %v1314 = vmax.f32 %v1312, %v1257
        %v1315 = vmax.f32 %v1313, %v1259
        %v1316 = vmax.f32 %v1314, %v1261
        %v1317 = vmax.f32 %v1315, %v1263
        %v1318 = vmax.f32 %v1316, %v1265
        %v1319 = vmax.f32 %v1317, %v1267
        %v1320 = vmax.f32 %v1318, %v1269
        %v1321 = vmax.f32 %v1319, %v1271
        %v1322 = vmax.f32 %v1320, %v1273
        %v1323 = vmax.f32 %v1321, %v1275
        %v1324 = vmax.f32 %v1322, %v1277
        %v1325 = vmax.f32 %v1323, %v1279
        %v1326 = vmax.f32 %v1324, %v1281
        %v1327 = vmax.f32 %v1325, %v1283
        %v1328 = vmax.f32 %v1326, %v1285
        %v1329 = vmax.f32 %v1327, %v1287
        %v1330 = vmax.f32 %v1328, %v1289
        %v1331 = vmax.f32 %v1329, %v1291
        %v1332 = vmax.f32 %v1330, %v1293
        %v1333 = vmax.f32 %v1331, %v1295
        %v1334 = vmax.f32 %v1332, %v1297
        %v1335 = vmax.f32 %v1333, %v1299
        %v1336 = vmax.f32 %v1334, %v1301
        %v1337 = vmax.f32 %v1335, %v1303
        %v1338 = vmax.f32 %v1336, %v1305
        %v1339 = vmax.f32 %v1337, %v1307
        %v1340 = vmax.f32 %v1338, %v1309
        %v1341 = vmax.f32 %v1339, %v1340
        %v1342 = vrot.slane %v1341, 4
        %v1343 = vmax.f32 %v1341, %v1342
        %v1344 = vrot.slane %v1343, 2
        %v1345 = vmax.f32 %v1343, %v1344
        %v1346 = vrot.slane %v1345, 1
        %v1347 = vmax.f32 %v1345, %v1346
        %v1348 = vmax.f32 %v1248, %v1252
        %v1349 = vmax.f32 %v1250, %v1254
        %v1350 = vmax.f32 %v1348, %v1256
        %v1351 = vmax.f32 %v1349, %v1258
        %v1352 = vmax.f32 %v1350, %v1260
        %v1353 = vmax.f32 %v1351, %v1262
        %v1354 = vmax.f32 %v1352, %v1264
        %v1355 = vmax.f32 %v1353, %v1266
        %v1356 = vmax.f32 %v1354, %v1268
        %v1357 = vmax.f32 %v1355, %v1270
        %v1358 = vmax.f32 %v1356, %v1272
        %v1359 = vmax.f32 %v1357, %v1274
        %v1360 = vmax.f32 %v1358, %v1276
        %v1361 = vmax.f32 %v1359, %v1278
        %v1362 = vmax.f32 %v1360, %v1280
        %v1363 = vmax.f32 %v1361, %v1282
        %v1364 = vmax.f32 %v1362, %v1284
        %v1365 = vmax.f32 %v1363, %v1286
        %v1366 = vmax.f32 %v1364, %v1288
        %v1367 = vmax.f32 %v1365, %v1290
        %v1368 = vmax.f32 %v1366, %v1292
        %v1369 = vmax.f32 %v1367, %v1294
        %v1370 = vmax.f32 %v1368, %v1296
        %v1371 = vmax.f32 %v1369, %v1298
        %v1372 = vmax.f32 %v1370, %v1300
        %v1373 = vmax.f32 %v1371, %v1302
        %v1374 = vmax.f32 %v1372, %v1304
        %v1375 = vmax.f32 %v1373, %v1306
        %v1376 = vmax.f32 %v1374, %v1308
        %v1377 = vmax.f32 %v1375, %v1310
        %v1378 = vmax.f32 %v1376, %v1377
        %v1379 = vrot.slane %v1378, 4
        %v1380 = vmax.f32 %v1378, %v1379
        %v1381 = vrot.slane %v1380, 2
        %v1382 = vmax.f32 %v1380, %v1381
        %v1383 = vrot.slane %v1382, 1
        %v1384 = vmax.f32 %v1382, %v1383
        %v1385 = vld [vmem:[%s289] ss:$8 sm:$0x3]
        %v1388 = vcombine.low %v1347, %v1384
        %v1390 = vunpack.c.l.s4 1966171168
        %v1391 = vunpack.c.0.s8 %v1390
        %v1392 = vlaneseq
        %v1393 = vshrl.u32 %v1392, 7
        %v1394 = vsub.s32 %v1391, %v1393
        %v1395 = vrot.slane %v1388, %v1394
        %v1397 = vunpack.c.l.s4 1966171168
        %v1398 = vunpack.c.0.s8 %v1397
        %v1399 = vlaneseq
        %v1400 = vshrl.u32 %v1399, 7
        %v1401 = vsub.s32 %v1398, %v1400
        %v1402 = vrot.slane %v1395, %v1401
        %v1404 = vmax.f32 %v1385, %v1402
        %v1405 = vlaneseq
        %vm1406 = vcmp.ge.s32.totalorder %v1405, 0
        %vm1407 = vcmp.lt.s32.totalorder %v1405, 256
        %vm1408 = vmand %vm1406, %vm1407
        %1409 = vst.msk [vmem:[%s289] ss:$8 sm:$0x3] %vm1408, %v1404
        %1410 = vst.msk [vmem:[%s289] ss:$8 sm:$0x0] %vm1408, %v1404
        %1411 = vset.pattern.permute.xlu0 1
        %1412 = vperm.xlu0 %1411, %v929
        %v1413 = vpop.permute.xlu0 %1412
        %1415 = vset.pattern.permute.xlu0 1
        %1416 = vperm.xlu0 %1415, %v934
        %v1417 = vpop.permute.xlu0 %1416
        %1419 = vset.pattern.permute.xlu0 1
        %1420 = vperm.xlu0 %1419, %v939
        %v1421 = vpop.permute.xlu0 %1420
        %1423 = vset.pattern.permute.xlu0 1
        %1424 = vperm.xlu0 %1423, %v944
        %v1425 = vpop.permute.xlu0 %1424
        %1427 = vset.pattern.permute.xlu0 1
        %1428 = vperm.xlu0 %1427, %v949
        %v1429 = vpop.permute.xlu0 %1428
        %1431 = vset.pattern.permute.xlu0 1
        %1432 = vperm.xlu0 %1431, %v954
        %v1433 = vpop.permute.xlu0 %1432
        %1435 = vset.pattern.permute.xlu0 1
        %1436 = vperm.xlu0 %1435, %v959
        %v1437 = vpop.permute.xlu0 %1436
        %1439 = vset.pattern.permute.xlu0 1
        %1440 = vperm.xlu0 %1439, %v964
        %v1441 = vpop.permute.xlu0 %1440
        %1443 = vset.pattern.permute.xlu0 1
        %1444 = vperm.xlu0 %1443, %v969
        %v1445 = vpop.permute.xlu0 %1444
        %1447 = vset.pattern.permute.xlu0 1
        %1448 = vperm.xlu0 %1447, %v974
        %v1449 = vpop.permute.xlu0 %1448
        %1451 = vset.pattern.permute.xlu0 1
        %1452 = vperm.xlu0 %1451, %v979
        %v1453 = vpop.permute.xlu0 %1452
        %1455 = vset.pattern.permute.xlu0 1
        %1456 = vperm.xlu0 %1455, %v984
        %v1457 = vpop.permute.xlu0 %1456
        %1459 = vset.pattern.permute.xlu0 1
        %1460 = vperm.xlu0 %1459, %v989
        %v1461 = vpop.permute.xlu0 %1460
        %1463 = vset.pattern.permute.xlu0 1
        %1464 = vperm.xlu0 %1463, %v994
        %v1465 = vpop.permute.xlu0 %1464
        %1467 = vset.pattern.permute.xlu0 1
        %1468 = vperm.xlu0 %1467, %v999
        %v1469 = vpop.permute.xlu0 %1468
        %1471 = vset.pattern.permute.xlu0 1
        %1472 = vperm.xlu0 %1471, %v1004
        %v1473 = vpop.permute.xlu0 %1472
        %1475 = vset.pattern.permute.xlu0 1
        %1476 = vperm.xlu0 %1475, %v1009
        %v1477 = vpop.permute.xlu0 %1476
        %1479 = vset.pattern.permute.xlu0 1
        %1480 = vperm.xlu0 %1479, %v1014
        %v1481 = vpop.permute.xlu0 %1480
        %1483 = vset.pattern.permute.xlu0 1
        %1484 = vperm.xlu0 %1483, %v1019
        %v1485 = vpop.permute.xlu0 %1484
        %1487 = vset.pattern.permute.xlu0 1
        %1488 = vperm.xlu0 %1487, %v1024
        %v1489 = vpop.permute.xlu0 %1488
        %1491 = vset.pattern.permute.xlu0 1
        %1492 = vperm.xlu0 %1491, %v1029
        %v1493 = vpop.permute.xlu0 %1492
        %1495 = vset.pattern.permute.xlu0 1
        %1496 = vperm.xlu0 %1495, %v1034
        %v1497 = vpop.permute.xlu0 %1496
        %1499 = vset.pattern.permute.xlu0 1
        %1500 = vperm.xlu0 %1499, %v1039
        %v1501 = vpop.permute.xlu0 %1500
        %1503 = vset.pattern.permute.xlu0 1
        %1504 = vperm.xlu0 %1503, %v1044
        %v1505 = vpop.permute.xlu0 %1504
        %1507 = vset.pattern.permute.xlu0 1
        %1508 = vperm.xlu0 %1507, %v1049
        %v1509 = vpop.permute.xlu0 %1508
        %1511 = vset.pattern.permute.xlu0 1
        %1512 = vperm.xlu0 %1511, %v1054
        %v1513 = vpop.permute.xlu0 %1512
        %1515 = vset.pattern.permute.xlu0 1
        %1516 = vperm.xlu0 %1515, %v1059
        %v1517 = vpop.permute.xlu0 %1516
        %1519 = vset.pattern.permute.xlu0 1
        %1520 = vperm.xlu0 %1519, %v1064
        %v1521 = vpop.permute.xlu0 %1520
        %1523 = vset.pattern.permute.xlu0 1
        %1524 = vperm.xlu0 %1523, %v1069
        %v1525 = vpop.permute.xlu0 %1524
        %1527 = vset.pattern.permute.xlu0 1
        %1528 = vperm.xlu0 %1527, %v1074
        %v1529 = vpop.permute.xlu0 %1528
        %1531 = vset.pattern.permute.xlu0 1
        %1532 = vperm.xlu0 %1531, %v1079
        %v1533 = vpop.permute.xlu0 %1532
        %1535 = vset.pattern.permute.xlu0 1
        %1536 = vperm.xlu0 %1535, %v1084
        %v1537 = vpop.permute.xlu0 %1536
        %v1539 = vsel %vm453, %v1413, -inf
        %v1540 = vsel %vm454, %v1413, -inf
        %v1541 = vsel %vm455, %v1417, -inf
        %v1542 = vsel %vm456, %v1417, -inf
        %v1543 = vsel %vm457, %v1421, -inf
        %v1544 = vsel %vm458, %v1421, -inf
        %v1545 = vsel %vm459, %v1425, -inf
        %v1546 = vsel %vm460, %v1425, -inf
        %v1547 = vsel %vm461, %v1429, -inf
        %v1548 = vsel %vm462, %v1429, -inf
        %v1549 = vsel %vm463, %v1433, -inf
        %v1550 = vsel %vm464, %v1433, -inf
        %v1551 = vsel %vm465, %v1437, -inf
        %v1552 = vsel %vm466, %v1437, -inf
        %v1553 = vsel %vm467, %v1441, -inf
        %v1554 = vsel %vm468, %v1441, -inf
        %v1555 = vsel %vm469, %v1445, -inf
        %v1556 = vsel %vm470, %v1445, -inf
        %v1557 = vsel %vm471, %v1449, -inf
        %v1558 = vsel %vm472, %v1449, -inf
        %v1559 = vsel %vm473, %v1453, -inf
        %v1560 = vsel %vm474, %v1453, -inf
        %v1561 = vsel %vm475, %v1457, -inf
        %v1562 = vsel %vm476, %v1457, -inf
        %v1563 = vsel %vm477, %v1461, -inf
        %v1564 = vsel %vm478, %v1461, -inf
        %v1565 = vsel %vm479, %v1465, -inf
        %v1566 = vsel %vm480, %v1465, -inf
        %v1567 = vsel %vm481, %v1469, -inf
        %v1568 = vsel %vm482, %v1469, -inf
        %v1569 = vsel %vm483, %v1473, -inf
        %v1570 = vsel %vm484, %v1473, -inf
        %v1571 = vsel %vm485, %v1477, -inf
        %v1572 = vsel %vm486, %v1477, -inf
        %v1573 = vsel %vm487, %v1481, -inf
        %v1574 = vsel %vm488, %v1481, -inf
        %v1575 = vsel %vm489, %v1485, -inf
        %v1576 = vsel %vm490, %v1485, -inf
        %v1577 = vsel %vm491, %v1489, -inf
        %v1578 = vsel %vm492, %v1489, -inf
        %v1579 = vsel %vm493, %v1493, -inf
        %v1580 = vsel %vm494, %v1493, -inf
        %v1581 = vsel %vm495, %v1497, -inf
        %v1582 = vsel %vm496, %v1497, -inf
        %v1583 = vsel %vm497, %v1501, -inf
        %v1584 = vsel %vm498, %v1501, -inf
        %v1585 = vsel %vm499, %v1505, -inf
        %v1586 = vsel %vm500, %v1505, -inf
        %v1587 = vsel %vm501, %v1509, -inf
        %v1588 = vsel %vm502, %v1509, -inf
        %v1589 = vsel %vm503, %v1513, -inf
        %v1590 = vsel %vm504, %v1513, -inf
        %v1591 = vsel %vm505, %v1517, -inf
        %v1592 = vsel %vm506, %v1517, -inf
        %v1593 = vsel %vm507, %v1521, -inf
        %v1594 = vsel %vm508, %v1521, -inf
        %v1595 = vsel %vm509, %v1525, -inf
        %v1596 = vsel %vm510, %v1525, -inf
        %v1597 = vsel %vm511, %v1529, -inf
        %v1598 = vsel %vm512, %v1529, -inf
        %v1599 = vsel %vm513, %v1533, -inf
        %v1600 = vsel %vm514, %v1533, -inf
        %v1601 = vsel %vm515, %v1537, -inf
        %v1602 = vsel %vm516, %v1537, -inf
        %v1603 = vmax.f32 %v1539, %v1543
        %v1604 = vmax.f32 %v1541, %v1545
        %v1605 = vmax.f32 %v1603, %v1547
        %v1606 = vmax.f32 %v1604, %v1549
        %v1607 = vmax.f32 %v1605, %v1551
        %v1608 = vmax.f32 %v1606, %v1553
        %v1609 = vmax.f32 %v1607, %v1555
        %v1610 = vmax.f32 %v1608, %v1557
        %v1611 = vmax.f32 %v1609, %v1559
        %v1612 = vmax.f32 %v1610, %v1561
        %v1613 = vmax.f32 %v1611, %v1563
        %v1614 = vmax.f32 %v1612, %v1565
        %v1615 = vmax.f32 %v1613, %v1567
        %v1616 = vmax.f32 %v1614, %v1569
        %v1617 = vmax.f32 %v1615, %v1571
        %v1618 = vmax.f32 %v1616, %v1573
        %v1619 = vmax.f32 %v1617, %v1575
        %v1620 = vmax.f32 %v1618, %v1577
        %v1621 = vmax.f32 %v1619, %v1579
        %v1622 = vmax.f32 %v1620, %v1581
        %v1623 = vmax.f32 %v1621, %v1583
        %v1624 = vmax.f32 %v1622, %v1585
        %v1625 = vmax.f32 %v1623, %v1587
        %v1626 = vmax.f32 %v1624, %v1589
        %v1627 = vmax.f32 %v1625, %v1591
        %v1628 = vmax.f32 %v1626, %v1593
        %v1629 = vmax.f32 %v1627, %v1595
        %v1630 = vmax.f32 %v1628, %v1597
        %v1631 = vmax.f32 %v1629, %v1599
        %v1632 = vmax.f32 %v1630, %v1601
        %v1633 = vmax.f32 %v1631, %v1632
        %v1634 = vrot.slane %v1633, 4
        %v1635 = vmax.f32 %v1633, %v1634
        %v1636 = vrot.slane %v1635, 2
        %v1637 = vmax.f32 %v1635, %v1636
        %v1638 = vrot.slane %v1637, 1
        %v1639 = vmax.f32 %v1637, %v1638
        %v1640 = vmax.f32 %v1540, %v1544
        %v1641 = vmax.f32 %v1542, %v1546
        %v1642 = vmax.f32 %v1640, %v1548
        %v1643 = vmax.f32 %v1641, %v1550
        %v1644 = vmax.f32 %v1642, %v1552
        %v1645 = vmax.f32 %v1643, %v1554
        %v1646 = vmax.f32 %v1644, %v1556
        %v1647 = vmax.f32 %v1645, %v1558
        %v1648 = vmax.f32 %v1646, %v1560
        %v1649 = vmax.f32 %v1647, %v1562
        %v1650 = vmax.f32 %v1648, %v1564
        %v1651 = vmax.f32 %v1649, %v1566
        %v1652 = vmax.f32 %v1650, %v1568
        %v1653 = vmax.f32 %v1651, %v1570
        %v1654 = vmax.f32 %v1652, %v1572
        %v1655 = vmax.f32 %v1653, %v1574
        %v1656 = vmax.f32 %v1654, %v1576
        %v1657 = vmax.f32 %v1655, %v1578
        %v1658 = vmax.f32 %v1656, %v1580
        %v1659 = vmax.f32 %v1657, %v1582
        %v1660 = vmax.f32 %v1658, %v1584
        %v1661 = vmax.f32 %v1659, %v1586
        %v1662 = vmax.f32 %v1660, %v1588
        %v1663 = vmax.f32 %v1661, %v1590
        %v1664 = vmax.f32 %v1662, %v1592
        %v1665 = vmax.f32 %v1663, %v1594
        %v1666 = vmax.f32 %v1664, %v1596
        %v1667 = vmax.f32 %v1665, %v1598
        %v1668 = vmax.f32 %v1666, %v1600
        %v1669 = vmax.f32 %v1667, %v1602
        %v1670 = vmax.f32 %v1668, %v1669
        %v1671 = vrot.slane %v1670, 4
        %v1672 = vmax.f32 %v1670, %v1671
        %v1673 = vrot.slane %v1672, 2
        %v1674 = vmax.f32 %v1672, %v1673
        %v1675 = vrot.slane %v1674, 1
        %v1676 = vmax.f32 %v1674, %v1675
        %s1677 = scalar_lea.vmem %s289, 1 [#allocation3]
        %v1678 = vld [vmem:[%s1677] ss:$8 sm:$0x3]
        %v1681 = vcombine.low %v1639, %v1676
        %v1683 = vunpack.c.l.s4 1966171168
        %v1684 = vunpack.c.0.s8 %v1683
        %v1685 = vlaneseq
        %v1686 = vshrl.u32 %v1685, 7
        %v1687 = vsub.s32 %v1684, %v1686
        %v1688 = vrot.slane %v1681, %v1687
        %v1690 = vunpack.c.l.s4 1966171168
        %v1691 = vunpack.c.0.s8 %v1690
        %v1692 = vlaneseq
        %v1693 = vshrl.u32 %v1692, 7
        %v1694 = vsub.s32 %v1691, %v1693
        %v1695 = vrot.slane %v1688, %v1694
        %v1697 = vmax.f32 %v1678, %v1695
        %1698 = vst.msk [vmem:[%s1677] ss:$8 sm:$0x3] %vm1408, %v1697
        %1699 = vst.msk [vmem:[%s1677] ss:$8 sm:$0x0] %vm1408, %v1697
        %1700 = vset.pattern.permute.xlu0 2
        %1701 = vperm.xlu0 %1700, %v929
        %v1702 = vpop.permute.xlu0 %1701
        %1704 = vset.pattern.permute.xlu0 2
        %1705 = vperm.xlu0 %1704, %v934
        %v1706 = vpop.permute.xlu0 %1705
        %1708 = vset.pattern.permute.xlu0 2
        %1709 = vperm.xlu0 %1708, %v939
        %v1710 = vpop.permute.xlu0 %1709
        %1712 = vset.pattern.permute.xlu0 2
        %1713 = vperm.xlu0 %1712, %v944
        %v1714 = vpop.permute.xlu0 %1713
        %1716 = vset.pattern.permute.xlu0 2
        %1717 = vperm.xlu0 %1716, %v949
        %v1718 = vpop.permute.xlu0 %1717
        %1720 = vset.pattern.permute.xlu0 2
        %1721 = vperm.xlu0 %1720, %v954
        %v1722 = vpop.permute.xlu0 %1721
        %1724 = vset.pattern.permute.xlu0 2
        %1725 = vperm.xlu0 %1724, %v959
        %v1726 = vpop.permute.xlu0 %1725
        %1728 = vset.pattern.permute.xlu0 2
        %1729 = vperm.xlu0 %1728, %v964
        %v1730 = vpop.permute.xlu0 %1729
        %1732 = vset.pattern.permute.xlu0 2
        %1733 = vperm.xlu0 %1732, %v969
        %v1734 = vpop.permute.xlu0 %1733
        %1736 = vset.pattern.permute.xlu0 2
        %1737 = vperm.xlu0 %1736, %v974
        %v1738 = vpop.permute.xlu0 %1737
        %1740 = vset.pattern.permute.xlu0 2
        %1741 = vperm.xlu0 %1740, %v979
        %v1742 = vpop.permute.xlu0 %1741
        %1744 = vset.pattern.permute.xlu0 2
        %1745 = vperm.xlu0 %1744, %v984
        %v1746 = vpop.permute.xlu0 %1745
        %1748 = vset.pattern.permute.xlu0 2
        %1749 = vperm.xlu0 %1748, %v989
        %v1750 = vpop.permute.xlu0 %1749
        %1752 = vset.pattern.permute.xlu0 2
        %1753 = vperm.xlu0 %1752, %v994
        %v1754 = vpop.permute.xlu0 %1753
        %1756 = vset.pattern.permute.xlu0 2
        %1757 = vperm.xlu0 %1756, %v999
        %v1758 = vpop.permute.xlu0 %1757
        %1760 = vset.pattern.permute.xlu0 2
        %1761 = vperm.xlu0 %1760, %v1004
        %v1762 = vpop.permute.xlu0 %1761
        %1764 = vset.pattern.permute.xlu0 2
        %1765 = vperm.xlu0 %1764, %v1009
        %v1766 = vpop.permute.xlu0 %1765
        %1768 = vset.pattern.permute.xlu0 2
        %1769 = vperm.xlu0 %1768, %v1014
        %v1770 = vpop.permute.xlu0 %1769
        %1772 = vset.pattern.permute.xlu0 2
        %1773 = vperm.xlu0 %1772, %v1019
        %v1774 = vpop.permute.xlu0 %1773
        %1776 = vset.pattern.permute.xlu0 2
        %1777 = vperm.xlu0 %1776, %v1024
        %v1778 = vpop.permute.xlu0 %1777
        %1780 = vset.pattern.permute.xlu0 2
        %1781 = vperm.xlu0 %1780, %v1029
        %v1782 = vpop.permute.xlu0 %1781
        %1784 = vset.pattern.permute.xlu0 2
        %1785 = vperm.xlu0 %1784, %v1034
        %v1786 = vpop.permute.xlu0 %1785
        %1788 = vset.pattern.permute.xlu0 2
        %1789 = vperm.xlu0 %1788, %v1039
        %v1790 = vpop.permute.xlu0 %1789
        %1792 = vset.pattern.permute.xlu0 2
        %1793 = vperm.xlu0 %1792, %v1044
        %v1794 = vpop.permute.xlu0 %1793
        %1796 = vset.pattern.permute.xlu0 2
        %1797 = vperm.xlu0 %1796, %v1049
        %v1798 = vpop.permute.xlu0 %1797
        %1800 = vset.pattern.permute.xlu0 2
        %1801 = vperm.xlu0 %1800, %v1054
        %v1802 = vpop.permute.xlu0 %1801
        %1804 = vset.pattern.permute.xlu0 2
        %1805 = vperm.xlu0 %1804, %v1059
        %v1806 = vpop.permute.xlu0 %1805
        %1808 = vset.pattern.permute.xlu0 2
        %1809 = vperm.xlu0 %1808, %v1064
        %v1810 = vpop.permute.xlu0 %1809
        %1812 = vset.pattern.permute.xlu0 2
        %1813 = vperm.xlu0 %1812, %v1069
        %v1814 = vpop.permute.xlu0 %1813
        %1816 = vset.pattern.permute.xlu0 2
        %1817 = vperm.xlu0 %1816, %v1074
        %v1818 = vpop.permute.xlu0 %1817
        %1820 = vset.pattern.permute.xlu0 2
        %1821 = vperm.xlu0 %1820, %v1079
        %v1822 = vpop.permute.xlu0 %1821
        %1824 = vset.pattern.permute.xlu0 2
        %1825 = vperm.xlu0 %1824, %v1084
        %v1826 = vpop.permute.xlu0 %1825
        %v1828 = vsel %vm453, %v1702, -inf
        %v1829 = vsel %vm454, %v1702, -inf
        %v1830 = vsel %vm455, %v1706, -inf
        %v1831 = vsel %vm456, %v1706, -inf
        %v1832 = vsel %vm457, %v1710, -inf
        %v1833 = vsel %vm458, %v1710, -inf
        %v1834 = vsel %vm459, %v1714, -inf
        %v1835 = vsel %vm460, %v1714, -inf
        %v1836 = vsel %vm461, %v1718, -inf
        %v1837 = vsel %vm462, %v1718, -inf
        %v1838 = vsel %vm463, %v1722, -inf
        %v1839 = vsel %vm464, %v1722, -inf
        %v1840 = vsel %vm465, %v1726, -inf
        %v1841 = vsel %vm466, %v1726, -inf
        %v1842 = vsel %vm467, %v1730, -inf
        %v1843 = vsel %vm468, %v1730, -inf
        %v1844 = vsel %vm469, %v1734, -inf
        %v1845 = vsel %vm470, %v1734, -inf
        %v1846 = vsel %vm471, %v1738, -inf
        %v1847 = vsel %vm472, %v1738, -inf
        %v1848 = vsel %vm473, %v1742, -inf
        %v1849 = vsel %vm474, %v1742, -inf
        %v1850 = vsel %vm475, %v1746, -inf
        %v1851 = vsel %vm476, %v1746, -inf
        %v1852 = vsel %vm477, %v1750, -inf
        %v1853 = vsel %vm478, %v1750, -inf
        %v1854 = vsel %vm479, %v1754, -inf
        %v1855 = vsel %vm480, %v1754, -inf
        %v1856 = vsel %vm481, %v1758, -inf
        %v1857 = vsel %vm482, %v1758, -inf
        %v1858 = vsel %vm483, %v1762, -inf
        %v1859 = vsel %vm484, %v1762, -inf
        %v1860 = vsel %vm485, %v1766, -inf
        %v1861 = vsel %vm486, %v1766, -inf
        %v1862 = vsel %vm487, %v1770, -inf
        %v1863 = vsel %vm488, %v1770, -inf
        %v1864 = vsel %vm489, %v1774, -inf
        %v1865 = vsel %vm490, %v1774, -inf
        %v1866 = vsel %vm491, %v1778, -inf
        %v1867 = vsel %vm492, %v1778, -inf
        %v1868 = vsel %vm493, %v1782, -inf
        %v1869 = vsel %vm494, %v1782, -inf
        %v1870 = vsel %vm495, %v1786, -inf
        %v1871 = vsel %vm496, %v1786, -inf
        %v1872 = vsel %vm497, %v1790, -inf
        %v1873 = vsel %vm498, %v1790, -inf
        %v1874 = vsel %vm499, %v1794, -inf
        %v1875 = vsel %vm500, %v1794, -inf
        %v1876 = vsel %vm501, %v1798, -inf
        %v1877 = vsel %vm502, %v1798, -inf
        %v1878 = vsel %vm503, %v1802, -inf
        %v1879 = vsel %vm504, %v1802, -inf
        %v1880 = vsel %vm505, %v1806, -inf
        %v1881 = vsel %vm506, %v1806, -inf
        %v1882 = vsel %vm507, %v1810, -inf
        %v1883 = vsel %vm508, %v1810, -inf
        %v1884 = vsel %vm509, %v1814, -inf
        %v1885 = vsel %vm510, %v1814, -inf
        %v1886 = vsel %vm511, %v1818, -inf
        %v1887 = vsel %vm512, %v1818, -inf
        %v1888 = vsel %vm513, %v1822, -inf
        %v1889 = vsel %vm514, %v1822, -inf
        %v1890 = vsel %vm515, %v1826, -inf
        %v1891 = vsel %vm516, %v1826, -inf
        %v1892 = vmax.f32 %v1828, %v1832
        %v1893 = vmax.f32 %v1830, %v1834
        %v1894 = vmax.f32 %v1892, %v1836
        %v1895 = vmax.f32 %v1893, %v1838
        %v1896 = vmax.f32 %v1894, %v1840
        %v1897 = vmax.f32 %v1895, %v1842
        %v1898 = vmax.f32 %v1896, %v1844
        %v1899 = vmax.f32 %v1897, %v1846
        %v1900 = vmax.f32 %v1898, %v1848
        %v1901 = vmax.f32 %v1899, %v1850
        %v1902 = vmax.f32 %v1900, %v1852
        %v1903 = vmax.f32 %v1901, %v1854
        %v1904 = vmax.f32 %v1902, %v1856
        %v1905 = vmax.f32 %v1903, %v1858
        %v1906 = vmax.f32 %v1904, %v1860
        %v1907 = vmax.f32 %v1905, %v1862
        %v1908 = vmax.f32 %v1906, %v1864
        %v1909 = vmax.f32 %v1907, %v1866
        %v1910 = vmax.f32 %v1908, %v1868
        %v1911 = vmax.f32 %v1909, %v1870
        %v1912 = vmax.f32 %v1910, %v1872
        %v1913 = vmax.f32 %v1911, %v1874
        %v1914 = vmax.f32 %v1912, %v1876
        %v1915 = vmax.f32 %v1913, %v1878
        %v1916 = vmax.f32 %v1914, %v1880
        %v1917 = vmax.f32 %v1915, %v1882
        %v1918 = vmax.f32 %v1916, %v1884
        %v1919 = vmax.f32 %v1917, %v1886
        %v1920 = vmax.f32 %v1918, %v1888
        %v1921 = vmax.f32 %v1919, %v1890
        %v1922 = vmax.f32 %v1920, %v1921
        %v1923 = vrot.slane %v1922, 4
        %v1924 = vmax.f32 %v1922, %v1923
        %v1925 = vrot.slane %v1924, 2
        %v1926 = vmax.f32 %v1924, %v1925
        %v1927 = vrot.slane %v1926, 1
        %v1928 = vmax.f32 %v1926, %v1927
        %v1929 = vmax.f32 %v1829, %v1833
        %v1930 = vmax.f32 %v1831, %v1835
        %v1931 = vmax.f32 %v1929, %v1837
        %v1932 = vmax.f32 %v1930, %v1839
        %v1933 = vmax.f32 %v1931, %v1841
        %v1934 = vmax.f32 %v1932, %v1843
        %v1935 = vmax.f32 %v1933, %v1845
        %v1936 = vmax.f32 %v1934, %v1847
        %v1937 = vmax.f32 %v1935, %v1849
        %v1938 = vmax.f32 %v1936, %v1851
        %v1939 = vmax.f32 %v1937, %v1853
        %v1940 = vmax.f32 %v1938, %v1855
        %v1941 = vmax.f32 %v1939, %v1857
        %v1942 = vmax.f32 %v1940, %v1859
        %v1943 = vmax.f32 %v1941, %v1861
        %v1944 = vmax.f32 %v1942, %v1863
        %v1945 = vmax.f32 %v1943, %v1865
        %v1946 = vmax.f32 %v1944, %v1867
        %v1947 = vmax.f32 %v1945, %v1869
        %v1948 = vmax.f32 %v1946, %v1871
        %v1949 = vmax.f32 %v1947, %v1873
        %v1950 = vmax.f32 %v1948, %v1875
        %v1951 = vmax.f32 %v1949, %v1877
        %v1952 = vmax.f32 %v1950, %v1879
        %v1953 = vmax.f32 %v1951, %v1881
        %v1954 = vmax.f32 %v1952, %v1883
        %v1955 = vmax.f32 %v1953, %v1885
        %v1956 = vmax.f32 %v1954, %v1887
        %v1957 = vmax.f32 %v1955, %v1889
        %v1958 = vmax.f32 %v1956, %v1891
        %v1959 = vmax.f32 %v1957, %v1958
        %v1960 = vrot.slane %v1959, 4
        %v1961 = vmax.f32 %v1959, %v1960
        %v1962 = vrot.slane %v1961, 2
        %v1963 = vmax.f32 %v1961, %v1962
        %v1964 = vrot.slane %v1963, 1
        %v1965 = vmax.f32 %v1963, %v1964
        %s1966 = scalar_lea.vmem %s289, 2 [#allocation3]
        %v1967 = vld [vmem:[%s1966] ss:$8 sm:$0x3]
        %v1970 = vcombine.low %v1928, %v1965
        %v1972 = vunpack.c.l.s4 1966171168
        %v1973 = vunpack.c.0.s8 %v1972
        %v1974 = vlaneseq
        %v1975 = vshrl.u32 %v1974, 7
        %v1976 = vsub.s32 %v1973, %v1975
        %v1977 = vrot.slane %v1970, %v1976
        %v1979 = vunpack.c.l.s4 1966171168
        %v1980 = vunpack.c.0.s8 %v1979
        %v1981 = vlaneseq
        %v1982 = vshrl.u32 %v1981, 7
        %v1983 = vsub.s32 %v1980, %v1982
        %v1984 = vrot.slane %v1977, %v1983
        %v1986 = vmax.f32 %v1967, %v1984
        %1987 = vst.msk [vmem:[%s1966] ss:$8 sm:$0x3] %vm1408, %v1986
        %1988 = vst.msk [vmem:[%s1966] ss:$8 sm:$0x0] %vm1408, %v1986
        %1989 = vset.pattern.permute.xlu0 3
        %1990 = vperm.xlu0 %1989, %v929
        %v1991 = vpop.permute.xlu0 %1990
        %1993 = vset.pattern.permute.xlu0 3
        %1994 = vperm.xlu0 %1993, %v934
        %v1995 = vpop.permute.xlu0 %1994
        %1997 = vset.pattern.permute.xlu0 3
        %1998 = vperm.xlu0 %1997, %v939
        %v1999 = vpop.permute.xlu0 %1998
        %2001 = vset.pattern.permute.xlu0 3
        %2002 = vperm.xlu0 %2001, %v944
        %v2003 = vpop.permute.xlu0 %2002
        %2005 = vset.pattern.permute.xlu0 3
        %2006 = vperm.xlu0 %2005, %v949
        %v2007 = vpop.permute.xlu0 %2006
        %2009 = vset.pattern.permute.xlu0 3
        %2010 = vperm.xlu0 %2009, %v954
        %v2011 = vpop.permute.xlu0 %2010
        %2013 = vset.pattern.permute.xlu0 3
        %2014 = vperm.xlu0 %2013, %v959
        %v2015 = vpop.permute.xlu0 %2014
        %2017 = vset.pattern.permute.xlu0 3
        %2018 = vperm.xlu0 %2017, %v964
        %v2019 = vpop.permute.xlu0 %2018
        %2021 = vset.pattern.permute.xlu0 3
        %2022 = vperm.xlu0 %2021, %v969
        %v2023 = vpop.permute.xlu0 %2022
        %2025 = vset.pattern.permute.xlu0 3
        %2026 = vperm.xlu0 %2025, %v974
        %v2027 = vpop.permute.xlu0 %2026
        %2029 = vset.pattern.permute.xlu0 3
        %2030 = vperm.xlu0 %2029, %v979
        %v2031 = vpop.permute.xlu0 %2030
        %2033 = vset.pattern.permute.xlu0 3
        %2034 = vperm.xlu0 %2033, %v984
        %v2035 = vpop.permute.xlu0 %2034
        %2037 = vset.pattern.permute.xlu0 3
        %2038 = vperm.xlu0 %2037, %v989
        %v2039 = vpop.permute.xlu0 %2038
        %2041 = vset.pattern.permute.xlu0 3
        %2042 = vperm.xlu0 %2041, %v994
        %v2043 = vpop.permute.xlu0 %2042
        %2045 = vset.pattern.permute.xlu0 3
        %2046 = vperm.xlu0 %2045, %v999
        %v2047 = vpop.permute.xlu0 %2046
        %2049 = vset.pattern.permute.xlu0 3
        %2050 = vperm.xlu0 %2049, %v1004
        %v2051 = vpop.permute.xlu0 %2050
        %2053 = vset.pattern.permute.xlu0 3
        %2054 = vperm.xlu0 %2053, %v1009
        %v2055 = vpop.permute.xlu0 %2054
        %2057 = vset.pattern.permute.xlu0 3
        %2058 = vperm.xlu0 %2057, %v1014
        %v2059 = vpop.permute.xlu0 %2058
        %2061 = vset.pattern.permute.xlu0 3
        %2062 = vperm.xlu0 %2061, %v1019
        %v2063 = vpop.permute.xlu0 %2062
        %2065 = vset.pattern.permute.xlu0 3
        %2066 = vperm.xlu0 %2065, %v1024
        %v2067 = vpop.permute.xlu0 %2066
        %2069 = vset.pattern.permute.xlu0 3
        %2070 = vperm.xlu0 %2069, %v1029
        %v2071 = vpop.permute.xlu0 %2070
        %2073 = vset.pattern.permute.xlu0 3
        %2074 = vperm.xlu0 %2073, %v1034
        %v2075 = vpop.permute.xlu0 %2074
        %2077 = vset.pattern.permute.xlu0 3
        %2078 = vperm.xlu0 %2077, %v1039
        %v2079 = vpop.permute.xlu0 %2078
        %2081 = vset.pattern.permute.xlu0 3
        %2082 = vperm.xlu0 %2081, %v1044
        %v2083 = vpop.permute.xlu0 %2082
        %2085 = vset.pattern.permute.xlu0 3
        %2086 = vperm.xlu0 %2085, %v1049
        %v2087 = vpop.permute.xlu0 %2086
        %2089 = vset.pattern.permute.xlu0 3
        %2090 = vperm.xlu0 %2089, %v1054
        %v2091 = vpop.permute.xlu0 %2090
        %2093 = vset.pattern.permute.xlu0 3
        %2094 = vperm.xlu0 %2093, %v1059
        %v2095 = vpop.permute.xlu0 %2094
        %2097 = vset.pattern.permute.xlu0 3
        %2098 = vperm.xlu0 %2097, %v1064
        %v2099 = vpop.permute.xlu0 %2098
        %2101 = vset.pattern.permute.xlu0 3
        %2102 = vperm.xlu0 %2101, %v1069
        %v2103 = vpop.permute.xlu0 %2102
        %2105 = vset.pattern.permute.xlu0 3
        %2106 = vperm.xlu0 %2105, %v1074
        %v2107 = vpop.permute.xlu0 %2106
        %2109 = vset.pattern.permute.xlu0 3
        %2110 = vperm.xlu0 %2109, %v1079
        %v2111 = vpop.permute.xlu0 %2110
        %2113 = vset.pattern.permute.xlu0 3
        %2114 = vperm.xlu0 %2113, %v1084
        %v2115 = vpop.permute.xlu0 %2114
        %v2117 = vsel %vm453, %v1991, -inf
        %v2118 = vsel %vm454, %v1991, -inf
        %v2119 = vsel %vm455, %v1995, -inf
        %v2120 = vsel %vm456, %v1995, -inf
        %v2121 = vsel %vm457, %v1999, -inf
        %v2122 = vsel %vm458, %v1999, -inf
        %v2123 = vsel %vm459, %v2003, -inf
        %v2124 = vsel %vm460, %v2003, -inf
        %v2125 = vsel %vm461, %v2007, -inf
        %v2126 = vsel %vm462, %v2007, -inf
        %v2127 = vsel %vm463, %v2011, -inf
        %v2128 = vsel %vm464, %v2011, -inf
        %v2129 = vsel %vm465, %v2015, -inf
        %v2130 = vsel %vm466, %v2015, -inf
        %v2131 = vsel %vm467, %v2019, -inf
        %v2132 = vsel %vm468, %v2019, -inf
        %v2133 = vsel %vm469, %v2023, -inf
        %v2134 = vsel %vm470, %v2023, -inf
        %v2135 = vsel %vm471, %v2027, -inf
        %v2136 = vsel %vm472, %v2027, -inf
        %v2137 = vsel %vm473, %v2031, -inf
        %v2138 = vsel %vm474, %v2031, -inf
        %v2139 = vsel %vm475, %v2035, -inf
        %v2140 = vsel %vm476, %v2035, -inf
        %v2141 = vsel %vm477, %v2039, -inf
        %v2142 = vsel %vm478, %v2039, -inf
        %v2143 = vsel %vm479, %v2043, -inf
        %v2144 = vsel %vm480, %v2043, -inf
        %v2145 = vsel %vm481, %v2047, -inf
        %v2146 = vsel %vm482, %v2047, -inf
        %v2147 = vsel %vm483, %v2051, -inf
        %v2148 = vsel %vm484, %v2051, -inf
        %v2149 = vsel %vm485, %v2055, -inf
        %v2150 = vsel %vm486, %v2055, -inf
        %v2151 = vsel %vm487, %v2059, -inf
        %v2152 = vsel %vm488, %v2059, -inf
        %v2153 = vsel %vm489, %v2063, -inf
        %v2154 = vsel %vm490, %v2063, -inf
        %v2155 = vsel %vm491, %v2067, -inf
        %v2156 = vsel %vm492, %v2067, -inf
        %v2157 = vsel %vm493, %v2071, -inf
        %v2158 = vsel %vm494, %v2071, -inf
        %v2159 = vsel %vm495, %v2075, -inf
        %v2160 = vsel %vm496, %v2075, -inf
        %v2161 = vsel %vm497, %v2079, -inf
        %v2162 = vsel %vm498, %v2079, -inf
        %v2163 = vsel %vm499, %v2083, -inf
        %v2164 = vsel %vm500, %v2083, -inf
        %v2165 = vsel %vm501, %v2087, -inf
        %v2166 = vsel %vm502, %v2087, -inf
        %v2167 = vsel %vm503, %v2091, -inf
        %v2168 = vsel %vm504, %v2091, -inf
        %v2169 = vsel %vm505, %v2095, -inf
        %v2170 = vsel %vm506, %v2095, -inf
        %v2171 = vsel %vm507, %v2099, -inf
        %v2172 = vsel %vm508, %v2099, -inf
        %v2173 = vsel %vm509, %v2103, -inf
        %v2174 = vsel %vm510, %v2103, -inf
        %v2175 = vsel %vm511, %v2107, -inf
        %v2176 = vsel %vm512, %v2107, -inf
        %v2177 = vsel %vm513, %v2111, -inf
        %v2178 = vsel %vm514, %v2111, -inf
        %v2179 = vsel %vm515, %v2115, -inf
        %v2180 = vsel %vm516, %v2115, -inf
        %v2181 = vmax.f32 %v2117, %v2121
        %v2182 = vmax.f32 %v2119, %v2123
        %v2183 = vmax.f32 %v2181, %v2125
        %v2184 = vmax.f32 %v2182, %v2127
        %v2185 = vmax.f32 %v2183, %v2129
        %v2186 = vmax.f32 %v2184, %v2131
        %v2187 = vmax.f32 %v2185, %v2133
        %v2188 = vmax.f32 %v2186, %v2135
        %v2189 = vmax.f32 %v2187, %v2137
        %v2190 = vmax.f32 %v2188, %v2139
        %v2191 = vmax.f32 %v2189, %v2141
        %v2192 = vmax.f32 %v2190, %v2143
        %v2193 = vmax.f32 %v2191, %v2145
        %v2194 = vmax.f32 %v2192, %v2147
        %v2195 = vmax.f32 %v2193, %v2149
        %v2196 = vmax.f32 %v2194, %v2151
        %v2197 = vmax.f32 %v2195, %v2153
        %v2198 = vmax.f32 %v2196, %v2155
        %v2199 = vmax.f32 %v2197, %v2157
        %v2200 = vmax.f32 %v2198, %v2159
        %v2201 = vmax.f32 %v2199, %v2161
        %v2202 = vmax.f32 %v2200, %v2163
        %v2203 = vmax.f32 %v2201, %v2165
        %v2204 = vmax.f32 %v2202, %v2167
        %v2205 = vmax.f32 %v2203, %v2169
        %v2206 = vmax.f32 %v2204, %v2171
        %v2207 = vmax.f32 %v2205, %v2173
        %v2208 = vmax.f32 %v2206, %v2175
        %v2209 = vmax.f32 %v2207, %v2177
        %v2210 = vmax.f32 %v2208, %v2179
        %v2211 = vmax.f32 %v2209, %v2210
        %v2212 = vrot.slane %v2211, 4
        %v2213 = vmax.f32 %v2211, %v2212
        %v2214 = vrot.slane %v2213, 2
        %v2215 = vmax.f32 %v2213, %v2214
        %v2216 = vrot.slane %v2215, 1
        %v2217 = vmax.f32 %v2215, %v2216
        %v2218 = vmax.f32 %v2118, %v2122
        %v2219 = vmax.f32 %v2120, %v2124
        %v2220 = vmax.f32 %v2218, %v2126
        %v2221 = vmax.f32 %v2219, %v2128
        %v2222 = vmax.f32 %v2220, %v2130
        %v2223 = vmax.f32 %v2221, %v2132
        %v2224 = vmax.f32 %v2222, %v2134
        %v2225 = vmax.f32 %v2223, %v2136
        %v2226 = vmax.f32 %v2224, %v2138
        %v2227 = vmax.f32 %v2225, %v2140
        %v2228 = vmax.f32 %v2226, %v2142
        %v2229 = vmax.f32 %v2227, %v2144
        %v2230 = vmax.f32 %v2228, %v2146
        %v2231 = vmax.f32 %v2229, %v2148
        %v2232 = vmax.f32 %v2230, %v2150
        %v2233 = vmax.f32 %v2231, %v2152
        %v2234 = vmax.f32 %v2232, %v2154
        %v2235 = vmax.f32 %v2233, %v2156
        %v2236 = vmax.f32 %v2234, %v2158
        %v2237 = vmax.f32 %v2235, %v2160
        %v2238 = vmax.f32 %v2236, %v2162
        %v2239 = vmax.f32 %v2237, %v2164
        %v2240 = vmax.f32 %v2238, %v2166
        %v2241 = vmax.f32 %v2239, %v2168
        %v2242 = vmax.f32 %v2240, %v2170
        %v2243 = vmax.f32 %v2241, %v2172
        %v2244 = vmax.f32 %v2242, %v2174
        %v2245 = vmax.f32 %v2243, %v2176
        %v2246 = vmax.f32 %v2244, %v2178
        %v2247 = vmax.f32 %v2245, %v2180
        %v2248 = vmax.f32 %v2246, %v2247
        %v2249 = vrot.slane %v2248, 4
        %v2250 = vmax.f32 %v2248, %v2249
        %v2251 = vrot.slane %v2250, 2
        %v2252 = vmax.f32 %v2250, %v2251
        %v2253 = vrot.slane %v2252, 1
        %v2254 = vmax.f32 %v2252, %v2253
        %s2255 = scalar_lea.vmem %s289, 3 [#allocation3]
        %v2256 = vld [vmem:[%s2255] ss:$8 sm:$0x3]
        %v2259 = vcombine.low %v2217, %v2254
        %v2261 = vunpack.c.l.s4 1966171168
        %v2262 = vunpack.c.0.s8 %v2261
        %v2263 = vlaneseq
        %v2264 = vshrl.u32 %v2263, 7
        %v2265 = vsub.s32 %v2262, %v2264
        %v2266 = vrot.slane %v2259, %v2265
        %v2268 = vunpack.c.l.s4 1966171168
        %v2269 = vunpack.c.0.s8 %v2268
        %v2270 = vlaneseq
        %v2271 = vshrl.u32 %v2270, 7
        %v2272 = vsub.s32 %v2269, %v2271
        %v2273 = vrot.slane %v2266, %v2272
        %v2275 = vmax.f32 %v2256, %v2273
        %2276 = vst.msk [vmem:[%s2255] ss:$8 sm:$0x3] %vm1408, %v2275
        %2277 = vst.msk [vmem:[%s2255] ss:$8 sm:$0x0] %vm1408, %v2275
        %2278 = vset.pattern.permute.xlu0 4
        %2279 = vperm.xlu0 %2278, %v929
        %v2280 = vpop.permute.xlu0 %2279
        %2282 = vset.pattern.permute.xlu0 4
        %2283 = vperm.xlu0 %2282, %v934
        %v2284 = vpop.permute.xlu0 %2283
        %2286 = vset.pattern.permute.xlu0 4
        %2287 = vperm.xlu0 %2286, %v939
        %v2288 = vpop.permute.xlu0 %2287
        %2290 = vset.pattern.permute.xlu0 4
        %2291 = vperm.xlu0 %2290, %v944
        %v2292 = vpop.permute.xlu0 %2291
        %2294 = vset.pattern.permute.xlu0 4
        %2295 = vperm.xlu0 %2294, %v949
        %v2296 = vpop.permute.xlu0 %2295
        %2298 = vset.pattern.permute.xlu0 4
        %2299 = vperm.xlu0 %2298, %v954
        %v2300 = vpop.permute.xlu0 %2299
        %2302 = vset.pattern.permute.xlu0 4
        %2303 = vperm.xlu0 %2302, %v959
        %v2304 = vpop.permute.xlu0 %2303
        %2306 = vset.pattern.permute.xlu0 4
        %2307 = vperm.xlu0 %2306, %v964
        %v2308 = vpop.permute.xlu0 %2307
        %2310 = vset.pattern.permute.xlu0 4
        %2311 = vperm.xlu0 %2310, %v969
        %v2312 = vpop.permute.xlu0 %2311
        %2314 = vset.pattern.permute.xlu0 4
        %2315 = vperm.xlu0 %2314, %v974
        %v2316 = vpop.permute.xlu0 %2315
        %2318 = vset.pattern.permute.xlu0 4
        %2319 = vperm.xlu0 %2318, %v979
        %v2320 = vpop.permute.xlu0 %2319
        %2322 = vset.pattern.permute.xlu0 4
        %2323 = vperm.xlu0 %2322, %v984
        %v2324 = vpop.permute.xlu0 %2323
        %2326 = vset.pattern.permute.xlu0 4
        %2327 = vperm.xlu0 %2326, %v989
        %v2328 = vpop.permute.xlu0 %2327
        %2330 = vset.pattern.permute.xlu0 4
        %2331 = vperm.xlu0 %2330, %v994
        %v2332 = vpop.permute.xlu0 %2331
        %2334 = vset.pattern.permute.xlu0 4
        %2335 = vperm.xlu0 %2334, %v999
        %v2336 = vpop.permute.xlu0 %2335
        %2338 = vset.pattern.permute.xlu0 4
        %2339 = vperm.xlu0 %2338, %v1004
        %v2340 = vpop.permute.xlu0 %2339
        %2342 = vset.pattern.permute.xlu0 4
        %2343 = vperm.xlu0 %2342, %v1009
        %v2344 = vpop.permute.xlu0 %2343
        %2346 = vset.pattern.permute.xlu0 4
        %2347 = vperm.xlu0 %2346, %v1014
        %v2348 = vpop.permute.xlu0 %2347
        %2350 = vset.pattern.permute.xlu0 4
        %2351 = vperm.xlu0 %2350, %v1019
        %v2352 = vpop.permute.xlu0 %2351
        %2354 = vset.pattern.permute.xlu0 4
        %2355 = vperm.xlu0 %2354, %v1024
        %v2356 = vpop.permute.xlu0 %2355
        %2358 = vset.pattern.permute.xlu0 4
        %2359 = vperm.xlu0 %2358, %v1029
        %v2360 = vpop.permute.xlu0 %2359
        %2362 = vset.pattern.permute.xlu0 4
        %2363 = vperm.xlu0 %2362, %v1034
        %v2364 = vpop.permute.xlu0 %2363
        %2366 = vset.pattern.permute.xlu0 4
        %2367 = vperm.xlu0 %2366, %v1039
        %v2368 = vpop.permute.xlu0 %2367
        %2370 = vset.pattern.permute.xlu0 4
        %2371 = vperm.xlu0 %2370, %v1044
        %v2372 = vpop.permute.xlu0 %2371
        %2374 = vset.pattern.permute.xlu0 4
        %2375 = vperm.xlu0 %2374, %v1049
        %v2376 = vpop.permute.xlu0 %2375
        %2378 = vset.pattern.permute.xlu0 4
        %2379 = vperm.xlu0 %2378, %v1054
        %v2380 = vpop.permute.xlu0 %2379
        %2382 = vset.pattern.permute.xlu0 4
        %2383 = vperm.xlu0 %2382, %v1059
        %v2384 = vpop.permute.xlu0 %2383
        %2386 = vset.pattern.permute.xlu0 4
        %2387 = vperm.xlu0 %2386, %v1064
        %v2388 = vpop.permute.xlu0 %2387
        %2390 = vset.pattern.permute.xlu0 4
        %2391 = vperm.xlu0 %2390, %v1069
        %v2392 = vpop.permute.xlu0 %2391
        %2394 = vset.pattern.permute.xlu0 4
        %2395 = vperm.xlu0 %2394, %v1074
        %v2396 = vpop.permute.xlu0 %2395
        %2398 = vset.pattern.permute.xlu0 4
        %2399 = vperm.xlu0 %2398, %v1079
        %v2400 = vpop.permute.xlu0 %2399
        %2402 = vset.pattern.permute.xlu0 4
        %2403 = vperm.xlu0 %2402, %v1084
        %v2404 = vpop.permute.xlu0 %2403
        %v2406 = vsel %vm453, %v2280, -inf
        %v2407 = vsel %vm454, %v2280, -inf
        %v2408 = vsel %vm455, %v2284, -inf
        %v2409 = vsel %vm456, %v2284, -inf
        %v2410 = vsel %vm457, %v2288, -inf
        %v2411 = vsel %vm458, %v2288, -inf
        %v2412 = vsel %vm459, %v2292, -inf
        %v2413 = vsel %vm460, %v2292, -inf
        %v2414 = vsel %vm461, %v2296, -inf
        %v2415 = vsel %vm462, %v2296, -inf
        %v2416 = vsel %vm463, %v2300, -inf
        %v2417 = vsel %vm464, %v2300, -inf
        %v2418 = vsel %vm465, %v2304, -inf
        %v2419 = vsel %vm466, %v2304, -inf
        %v2420 = vsel %vm467, %v2308, -inf
        %v2421 = vsel %vm468, %v2308, -inf
        %v2422 = vsel %vm469, %v2312, -inf
        %v2423 = vsel %vm470, %v2312, -inf
        %v2424 = vsel %vm471, %v2316, -inf
        %v2425 = vsel %vm472, %v2316, -inf
        %v2426 = vsel %vm473, %v2320, -inf
        %v2427 = vsel %vm474, %v2320, -inf
        %v2428 = vsel %vm475, %v2324, -inf
        %v2429 = vsel %vm476, %v2324, -inf
        %v2430 = vsel %vm477, %v2328, -inf
        %v2431 = vsel %vm478, %v2328, -inf
        %v2432 = vsel %vm479, %v2332, -inf
        %v2433 = vsel %vm480, %v2332, -inf
        %v2434 = vsel %vm481, %v2336, -inf
        %v2435 = vsel %vm482, %v2336, -inf
        %v2436 = vsel %vm483, %v2340, -inf
        %v2437 = vsel %vm484, %v2340, -inf
        %v2438 = vsel %vm485, %v2344, -inf
        %v2439 = vsel %vm486, %v2344, -inf
        %v2440 = vsel %vm487, %v2348, -inf
        %v2441 = vsel %vm488, %v2348, -inf
        %v2442 = vsel %vm489, %v2352, -inf
        %v2443 = vsel %vm490, %v2352, -inf
        %v2444 = vsel %vm491, %v2356, -inf
        %v2445 = vsel %vm492, %v2356, -inf
        %v2446 = vsel %vm493, %v2360, -inf
        %v2447 = vsel %vm494, %v2360, -inf
        %v2448 = vsel %vm495, %v2364, -inf
        %v2449 = vsel %vm496, %v2364, -inf
        %v2450 = vsel %vm497, %v2368, -inf
        %v2451 = vsel %vm498, %v2368, -inf
        %v2452 = vsel %vm499, %v2372, -inf
        %v2453 = vsel %vm500, %v2372, -inf
        %v2454 = vsel %vm501, %v2376, -inf
        %v2455 = vsel %vm502, %v2376, -inf
        %v2456 = vsel %vm503, %v2380, -inf
        %v2457 = vsel %vm504, %v2380, -inf
        %v2458 = vsel %vm505, %v2384, -inf
        %v2459 = vsel %vm506, %v2384, -inf
        %v2460 = vsel %vm507, %v2388, -inf
        %v2461 = vsel %vm508, %v2388, -inf
        %v2462 = vsel %vm509, %v2392, -inf
        %v2463 = vsel %vm510, %v2392, -inf
        %v2464 = vsel %vm511, %v2396, -inf
        %v2465 = vsel %vm512, %v2396, -inf
        %v2466 = vsel %vm513, %v2400, -inf
        %v2467 = vsel %vm514, %v2400, -inf
        %v2468 = vsel %vm515, %v2404, -inf
        %v2469 = vsel %vm516, %v2404, -inf
        %v2470 = vmax.f32 %v2406, %v2410
        %v2471 = vmax.f32 %v2408, %v2412
        %v2472 = vmax.f32 %v2470, %v2414
        %v2473 = vmax.f32 %v2471, %v2416
        %v2474 = vmax.f32 %v2472, %v2418
        %v2475 = vmax.f32 %v2473, %v2420
        %v2476 = vmax.f32 %v2474, %v2422
        %v2477 = vmax.f32 %v2475, %v2424
        %v2478 = vmax.f32 %v2476, %v2426
        %v2479 = vmax.f32 %v2477, %v2428
        %v2480 = vmax.f32 %v2478, %v2430
        %v2481 = vmax.f32 %v2479, %v2432
        %v2482 = vmax.f32 %v2480, %v2434
        %v2483 = vmax.f32 %v2481, %v2436
        %v2484 = vmax.f32 %v2482, %v2438
        %v2485 = vmax.f32 %v2483, %v2440
        %v2486 = vmax.f32 %v2484, %v2442
        %v2487 = vmax.f32 %v2485, %v2444
        %v2488 = vmax.f32 %v2486, %v2446
        %v2489 = vmax.f32 %v2487, %v2448
        %v2490 = vmax.f32 %v2488, %v2450
        %v2491 = vmax.f32 %v2489, %v2452
        %v2492 = vmax.f32 %v2490, %v2454
        %v2493 = vmax.f32 %v2491, %v2456
        %v2494 = vmax.f32 %v2492, %v2458
        %v2495 = vmax.f32 %v2493, %v2460
        %v2496 = vmax.f32 %v2494, %v2462
        %v2497 = vmax.f32 %v2495, %v2464
        %v2498 = vmax.f32 %v2496, %v2466
        %v2499 = vmax.f32 %v2497, %v2468
        %v2500 = vmax.f32 %v2498, %v2499
        %v2501 = vrot.slane %v2500, 4
        %v2502 = vmax.f32 %v2500, %v2501
        %v2503 = vrot.slane %v2502, 2
        %v2504 = vmax.f32 %v2502, %v2503
        %v2505 = vrot.slane %v2504, 1
        %v2506 = vmax.f32 %v2504, %v2505
        %v2507 = vmax.f32 %v2407, %v2411
        %v2508 = vmax.f32 %v2409, %v2413
        %v2509 = vmax.f32 %v2507, %v2415
        %v2510 = vmax.f32 %v2508, %v2417
        %v2511 = vmax.f32 %v2509, %v2419
        %v2512 = vmax.f32 %v2510, %v2421
        %v2513 = vmax.f32 %v2511, %v2423
        %v2514 = vmax.f32 %v2512, %v2425
        %v2515 = vmax.f32 %v2513, %v2427
        %v2516 = vmax.f32 %v2514, %v2429
        %v2517 = vmax.f32 %v2515, %v2431
        %v2518 = vmax.f32 %v2516, %v2433
        %v2519 = vmax.f32 %v2517, %v2435
        %v2520 = vmax.f32 %v2518, %v2437
        %v2521 = vmax.f32 %v2519, %v2439
        %v2522 = vmax.f32 %v2520, %v2441
        %v2523 = vmax.f32 %v2521, %v2443
        %v2524 = vmax.f32 %v2522, %v2445
        %v2525 = vmax.f32 %v2523, %v2447
        %v2526 = vmax.f32 %v2524, %v2449
        %v2527 = vmax.f32 %v2525, %v2451
        %v2528 = vmax.f32 %v2526, %v2453
        %v2529 = vmax.f32 %v2527, %v2455
        %v2530 = vmax.f32 %v2528, %v2457
        %v2531 = vmax.f32 %v2529, %v2459
        %v2532 = vmax.f32 %v2530, %v2461
        %v2533 = vmax.f32 %v2531, %v2463
        %v2534 = vmax.f32 %v2532, %v2465
        %v2535 = vmax.f32 %v2533, %v2467
        %v2536 = vmax.f32 %v2534, %v2469
        %v2537 = vmax.f32 %v2535, %v2536
        %v2538 = vrot.slane %v2537, 4
        %v2539 = vmax.f32 %v2537, %v2538
        %v2540 = vrot.slane %v2539, 2
        %v2541 = vmax.f32 %v2539, %v2540
        %v2542 = vrot.slane %v2541, 1
        %v2543 = vmax.f32 %v2541, %v2542
        %s2544 = scalar_lea.vmem %s289, 4 [#allocation3]
        %v2545 = vld [vmem:[%s2544] ss:$8 sm:$0x3]
        %v2548 = vcombine.low %v2506, %v2543
        %v2550 = vunpack.c.l.s4 1966171168
        %v2551 = vunpack.c.0.s8 %v2550
        %v2552 = vlaneseq
        %v2553 = vshrl.u32 %v2552, 7
        %v2554 = vsub.s32 %v2551, %v2553
        %v2555 = vrot.slane %v2548, %v2554
        %v2557 = vunpack.c.l.s4 1966171168
        %v2558 = vunpack.c.0.s8 %v2557
        %v2559 = vlaneseq
        %v2560 = vshrl.u32 %v2559, 7
        %v2561 = vsub.s32 %v2558, %v2560
        %v2562 = vrot.slane %v2555, %v2561
        %v2564 = vmax.f32 %v2545, %v2562
        %2565 = vst.msk [vmem:[%s2544] ss:$8 sm:$0x3] %vm1408, %v2564
        %2566 = vst.msk [vmem:[%s2544] ss:$8 sm:$0x0] %vm1408, %v2564
        %2567 = vset.pattern.permute.xlu0 5
        %2568 = vperm.xlu0 %2567, %v929
        %v2569 = vpop.permute.xlu0 %2568
        %2571 = vset.pattern.permute.xlu0 5
        %2572 = vperm.xlu0 %2571, %v934
        %v2573 = vpop.permute.xlu0 %2572
        %2575 = vset.pattern.permute.xlu0 5
        %2576 = vperm.xlu0 %2575, %v939
        %v2577 = vpop.permute.xlu0 %2576
        %2579 = vset.pattern.permute.xlu0 5
        %2580 = vperm.xlu0 %2579, %v944
        %v2581 = vpop.permute.xlu0 %2580
        %2583 = vset.pattern.permute.xlu0 5
        %2584 = vperm.xlu0 %2583, %v949
        %v2585 = vpop.permute.xlu0 %2584
        %2587 = vset.pattern.permute.xlu0 5
        %2588 = vperm.xlu0 %2587, %v954
        %v2589 = vpop.permute.xlu0 %2588
        %2591 = vset.pattern.permute.xlu0 5
        %2592 = vperm.xlu0 %2591, %v959
        %v2593 = vpop.permute.xlu0 %2592
        %2595 = vset.pattern.permute.xlu0 5
        %2596 = vperm.xlu0 %2595, %v964
        %v2597 = vpop.permute.xlu0 %2596
        %2599 = vset.pattern.permute.xlu0 5
        %2600 = vperm.xlu0 %2599, %v969
        %v2601 = vpop.permute.xlu0 %2600
        %2603 = vset.pattern.permute.xlu0 5
        %2604 = vperm.xlu0 %2603, %v974
        %v2605 = vpop.permute.xlu0 %2604
        %2607 = vset.pattern.permute.xlu0 5
        %2608 = vperm.xlu0 %2607, %v979
        %v2609 = vpop.permute.xlu0 %2608
        %2611 = vset.pattern.permute.xlu0 5
        %2612 = vperm.xlu0 %2611, %v984
        %v2613 = vpop.permute.xlu0 %2612
        %2615 = vset.pattern.permute.xlu0 5
        %2616 = vperm.xlu0 %2615, %v989
        %v2617 = vpop.permute.xlu0 %2616
        %2619 = vset.pattern.permute.xlu0 5
        %2620 = vperm.xlu0 %2619, %v994
        %v2621 = vpop.permute.xlu0 %2620
        %2623 = vset.pattern.permute.xlu0 5
        %2624 = vperm.xlu0 %2623, %v999
        %v2625 = vpop.permute.xlu0 %2624
        %2627 = vset.pattern.permute.xlu0 5
        %2628 = vperm.xlu0 %2627, %v1004
        %v2629 = vpop.permute.xlu0 %2628
        %2631 = vset.pattern.permute.xlu0 5
        %2632 = vperm.xlu0 %2631, %v1009
        %v2633 = vpop.permute.xlu0 %2632
        %2635 = vset.pattern.permute.xlu0 5
        %2636 = vperm.xlu0 %2635, %v1014
        %v2637 = vpop.permute.xlu0 %2636
        %2639 = vset.pattern.permute.xlu0 5
        %2640 = vperm.xlu0 %2639, %v1019
        %v2641 = vpop.permute.xlu0 %2640
        %2643 = vset.pattern.permute.xlu0 5
        %2644 = vperm.xlu0 %2643, %v1024
        %v2645 = vpop.permute.xlu0 %2644
        %2647 = vset.pattern.permute.xlu0 5
        %2648 = vperm.xlu0 %2647, %v1029
        %v2649 = vpop.permute.xlu0 %2648
        %2651 = vset.pattern.permute.xlu0 5
        %2652 = vperm.xlu0 %2651, %v1034
        %v2653 = vpop.permute.xlu0 %2652
        %2655 = vset.pattern.permute.xlu0 5
        %2656 = vperm.xlu0 %2655, %v1039
        %v2657 = vpop.permute.xlu0 %2656
        %2659 = vset.pattern.permute.xlu0 5
        %2660 = vperm.xlu0 %2659, %v1044
        %v2661 = vpop.permute.xlu0 %2660
        %2663 = vset.pattern.permute.xlu0 5
        %2664 = vperm.xlu0 %2663, %v1049
        %v2665 = vpop.permute.xlu0 %2664
        %2667 = vset.pattern.permute.xlu0 5
        %2668 = vperm.xlu0 %2667, %v1054
        %v2669 = vpop.permute.xlu0 %2668
        %2671 = vset.pattern.permute.xlu0 5
        %2672 = vperm.xlu0 %2671, %v1059
        %v2673 = vpop.permute.xlu0 %2672
        %2675 = vset.pattern.permute.xlu0 5
        %2676 = vperm.xlu0 %2675, %v1064
        %v2677 = vpop.permute.xlu0 %2676
        %2679 = vset.pattern.permute.xlu0 5
        %2680 = vperm.xlu0 %2679, %v1069
        %v2681 = vpop.permute.xlu0 %2680
        %2683 = vset.pattern.permute.xlu0 5
        %2684 = vperm.xlu0 %2683, %v1074
        %v2685 = vpop.permute.xlu0 %2684
        %2687 = vset.pattern.permute.xlu0 5
        %2688 = vperm.xlu0 %2687, %v1079
        %v2689 = vpop.permute.xlu0 %2688
        %2691 = vset.pattern.permute.xlu0 5
        %2692 = vperm.xlu0 %2691, %v1084
        %v2693 = vpop.permute.xlu0 %2692
        %v2695 = vsel %vm453, %v2569, -inf
        %v2696 = vsel %vm454, %v2569, -inf
        %v2697 = vsel %vm455, %v2573, -inf
        %v2698 = vsel %vm456, %v2573, -inf
        %v2699 = vsel %vm457, %v2577, -inf
        %v2700 = vsel %vm458, %v2577, -inf
        %v2701 = vsel %vm459, %v2581, -inf
        %v2702 = vsel %vm460, %v2581, -inf
        %v2703 = vsel %vm461, %v2585, -inf
        %v2704 = vsel %vm462, %v2585, -inf
        %v2705 = vsel %vm463, %v2589, -inf
        %v2706 = vsel %vm464, %v2589, -inf
        %v2707 = vsel %vm465, %v2593, -inf
        %v2708 = vsel %vm466, %v2593, -inf
        %v2709 = vsel %vm467, %v2597, -inf
        %v2710 = vsel %vm468, %v2597, -inf
        %v2711 = vsel %vm469, %v2601, -inf
        %v2712 = vsel %vm470, %v2601, -inf
        %v2713 = vsel %vm471, %v2605, -inf
        %v2714 = vsel %vm472, %v2605, -inf
        %v2715 = vsel %vm473, %v2609, -inf
        %v2716 = vsel %vm474, %v2609, -inf
        %v2717 = vsel %vm475, %v2613, -inf
        %v2718 = vsel %vm476, %v2613, -inf
        %v2719 = vsel %vm477, %v2617, -inf
        %v2720 = vsel %vm478, %v2617, -inf
        %v2721 = vsel %vm479, %v2621, -inf
        %v2722 = vsel %vm480, %v2621, -inf
        %v2723 = vsel %vm481, %v2625, -inf
        %v2724 = vsel %vm482, %v2625, -inf
        %v2725 = vsel %vm483, %v2629, -inf
        %v2726 = vsel %vm484, %v2629, -inf
        %v2727 = vsel %vm485, %v2633, -inf
        %v2728 = vsel %vm486, %v2633, -inf
        %v2729 = vsel %vm487, %v2637, -inf
        %v2730 = vsel %vm488, %v2637, -inf
        %v2731 = vsel %vm489, %v2641, -inf
        %v2732 = vsel %vm490, %v2641, -inf
        %v2733 = vsel %vm491, %v2645, -inf
        %v2734 = vsel %vm492, %v2645, -inf
        %v2735 = vsel %vm493, %v2649, -inf
        %v2736 = vsel %vm494, %v2649, -inf
        %v2737 = vsel %vm495, %v2653, -inf
        %v2738 = vsel %vm496, %v2653, -inf
        %v2739 = vsel %vm497, %v2657, -inf
        %v2740 = vsel %vm498, %v2657, -inf
        %v2741 = vsel %vm499, %v2661, -inf
        %v2742 = vsel %vm500, %v2661, -inf
        %v2743 = vsel %vm501, %v2665, -inf
        %v2744 = vsel %vm502, %v2665, -inf
        %v2745 = vsel %vm503, %v2669, -inf
        %v2746 = vsel %vm504, %v2669, -inf
        %v2747 = vsel %vm505, %v2673, -inf
        %v2748 = vsel %vm506, %v2673, -inf
        %v2749 = vsel %vm507, %v2677, -inf
        %v2750 = vsel %vm508, %v2677, -inf
        %v2751 = vsel %vm509, %v2681, -inf
        %v2752 = vsel %vm510, %v2681, -inf
        %v2753 = vsel %vm511, %v2685, -inf
        %v2754 = vsel %vm512, %v2685, -inf
        %v2755 = vsel %vm513, %v2689, -inf
        %v2756 = vsel %vm514, %v2689, -inf
        %v2757 = vsel %vm515, %v2693, -inf
        %v2758 = vsel %vm516, %v2693, -inf
        %v2759 = vmax.f32 %v2695, %v2699
        %v2760 = vmax.f32 %v2697, %v2701
        %v2761 = vmax.f32 %v2759, %v2703
        %v2762 = vmax.f32 %v2760, %v2705
        %v2763 = vmax.f32 %v2761, %v2707
        %v2764 = vmax.f32 %v2762, %v2709
        %v2765 = vmax.f32 %v2763, %v2711
        %v2766 = vmax.f32 %v2764, %v2713
        %v2767 = vmax.f32 %v2765, %v2715
        %v2768 = vmax.f32 %v2766, %v2717
        %v2769 = vmax.f32 %v2767, %v2719
        %v2770 = vmax.f32 %v2768, %v2721
        %v2771 = vmax.f32 %v2769, %v2723
        %v2772 = vmax.f32 %v2770, %v2725
        %v2773 = vmax.f32 %v2771, %v2727
        %v2774 = vmax.f32 %v2772, %v2729
        %v2775 = vmax.f32 %v2773, %v2731
        %v2776 = vmax.f32 %v2774, %v2733
        %v2777 = vmax.f32 %v2775, %v2735
        %v2778 = vmax.f32 %v2776, %v2737
        %v2779 = vmax.f32 %v2777, %v2739
        %v2780 = vmax.f32 %v2778, %v2741
        %v2781 = vmax.f32 %v2779, %v2743
        %v2782 = vmax.f32 %v2780, %v2745
        %v2783 = vmax.f32 %v2781, %v2747
        %v2784 = vmax.f32 %v2782, %v2749
        %v2785 = vmax.f32 %v2783, %v2751
        %v2786 = vmax.f32 %v2784, %v2753
        %v2787 = vmax.f32 %v2785, %v2755
        %v2788 = vmax.f32 %v2786, %v2757
        %v2789 = vmax.f32 %v2787, %v2788
        %v2790 = vrot.slane %v2789, 4
        %v2791 = vmax.f32 %v2789, %v2790
        %v2792 = vrot.slane %v2791, 2
        %v2793 = vmax.f32 %v2791, %v2792
        %v2794 = vrot.slane %v2793, 1
        %v2795 = vmax.f32 %v2793, %v2794
        %v2796 = vmax.f32 %v2696, %v2700
        %v2797 = vmax.f32 %v2698, %v2702
        %v2798 = vmax.f32 %v2796, %v2704
        %v2799 = vmax.f32 %v2797, %v2706
        %v2800 = vmax.f32 %v2798, %v2708
        %v2801 = vmax.f32 %v2799, %v2710
        %v2802 = vmax.f32 %v2800, %v2712
        %v2803 = vmax.f32 %v2801, %v2714
        %v2804 = vmax.f32 %v2802, %v2716
        %v2805 = vmax.f32 %v2803, %v2718
        %v2806 = vmax.f32 %v2804, %v2720
        %v2807 = vmax.f32 %v2805, %v2722
        %v2808 = vmax.f32 %v2806, %v2724
        %v2809 = vmax.f32 %v2807, %v2726
        %v2810 = vmax.f32 %v2808, %v2728
        %v2811 = vmax.f32 %v2809, %v2730
        %v2812 = vmax.f32 %v2810, %v2732
        %v2813 = vmax.f32 %v2811, %v2734
        %v2814 = vmax.f32 %v2812, %v2736
        %v2815 = vmax.f32 %v2813, %v2738
        %v2816 = vmax.f32 %v2814, %v2740
        %v2817 = vmax.f32 %v2815, %v2742
        %v2818 = vmax.f32 %v2816, %v2744
        %v2819 = vmax.f32 %v2817, %v2746
        %v2820 = vmax.f32 %v2818, %v2748
        %v2821 = vmax.f32 %v2819, %v2750
        %v2822 = vmax.f32 %v2820, %v2752
        %v2823 = vmax.f32 %v2821, %v2754
        %v2824 = vmax.f32 %v2822, %v2756
        %v2825 = vmax.f32 %v2823, %v2758
        %v2826 = vmax.f32 %v2824, %v2825
        %v2827 = vrot.slane %v2826, 4
        %v2828 = vmax.f32 %v2826, %v2827
        %v2829 = vrot.slane %v2828, 2
        %v2830 = vmax.f32 %v2828, %v2829
        %v2831 = vrot.slane %v2830, 1
        %v2832 = vmax.f32 %v2830, %v2831
        %s2833 = scalar_lea.vmem %s289, 5 [#allocation3]
        %v2834 = vld [vmem:[%s2833] ss:$8 sm:$0x3]
        %v2837 = vcombine.low %v2795, %v2832
        %v2839 = vunpack.c.l.s4 1966171168
        %v2840 = vunpack.c.0.s8 %v2839
        %v2841 = vlaneseq
        %v2842 = vshrl.u32 %v2841, 7
        %v2843 = vsub.s32 %v2840, %v2842
        %v2844 = vrot.slane %v2837, %v2843
        %v2846 = vunpack.c.l.s4 1966171168
        %v2847 = vunpack.c.0.s8 %v2846
        %v2848 = vlaneseq
        %v2849 = vshrl.u32 %v2848, 7
        %v2850 = vsub.s32 %v2847, %v2849
        %v2851 = vrot.slane %v2844, %v2850
        %v2853 = vmax.f32 %v2834, %v2851
        %2854 = vst.msk [vmem:[%s2833] ss:$8 sm:$0x3] %vm1408, %v2853
        %2855 = vst.msk [vmem:[%s2833] ss:$8 sm:$0x0] %vm1408, %v2853
        %2856 = vset.pattern.permute.xlu0 6
        %2857 = vperm.xlu0 %2856, %v929
        %v2858 = vpop.permute.xlu0 %2857
        %2860 = vset.pattern.permute.xlu0 6
        %2861 = vperm.xlu0 %2860, %v934
        %v2862 = vpop.permute.xlu0 %2861
        %2864 = vset.pattern.permute.xlu0 6
        %2865 = vperm.xlu0 %2864, %v939
        %v2866 = vpop.permute.xlu0 %2865
        %2868 = vset.pattern.permute.xlu0 6
        %2869 = vperm.xlu0 %2868, %v944
        %v2870 = vpop.permute.xlu0 %2869
        %2872 = vset.pattern.permute.xlu0 6
        %2873 = vperm.xlu0 %2872, %v949
        %v2874 = vpop.permute.xlu0 %2873
        %2876 = vset.pattern.permute.xlu0 6
        %2877 = vperm.xlu0 %2876, %v954
        %v2878 = vpop.permute.xlu0 %2877
        %2880 = vset.pattern.permute.xlu0 6
        %2881 = vperm.xlu0 %2880, %v959
        %v2882 = vpop.permute.xlu0 %2881
        %2884 = vset.pattern.permute.xlu0 6
        %2885 = vperm.xlu0 %2884, %v964
        %v2886 = vpop.permute.xlu0 %2885
        %2888 = vset.pattern.permute.xlu0 6
        %2889 = vperm.xlu0 %2888, %v969
        %v2890 = vpop.permute.xlu0 %2889
        %2892 = vset.pattern.permute.xlu0 6
        %2893 = vperm.xlu0 %2892, %v974
        %v2894 = vpop.permute.xlu0 %2893
        %2896 = vset.pattern.permute.xlu0 6
        %2897 = vperm.xlu0 %2896, %v979
        %v2898 = vpop.permute.xlu0 %2897
        %2900 = vset.pattern.permute.xlu0 6
        %2901 = vperm.xlu0 %2900, %v984
        %v2902 = vpop.permute.xlu0 %2901
        %2904 = vset.pattern.permute.xlu0 6
        %2905 = vperm.xlu0 %2904, %v989
        %v2906 = vpop.permute.xlu0 %2905
        %2908 = vset.pattern.permute.xlu0 6
        %2909 = vperm.xlu0 %2908, %v994
        %v2910 = vpop.permute.xlu0 %2909
        %2912 = vset.pattern.permute.xlu0 6
        %2913 = vperm.xlu0 %2912, %v999
        %v2914 = vpop.permute.xlu0 %2913
        %2916 = vset.pattern.permute.xlu0 6
        %2917 = vperm.xlu0 %2916, %v1004
        %v2918 = vpop.permute.xlu0 %2917
        %2920 = vset.pattern.permute.xlu0 6
        %2921 = vperm.xlu0 %2920, %v1009
        %v2922 = vpop.permute.xlu0 %2921
        %2924 = vset.pattern.permute.xlu0 6
        %2925 = vperm.xlu0 %2924, %v1014
        %v2926 = vpop.permute.xlu0 %2925
        %2928 = vset.pattern.permute.xlu0 6
        %2929 = vperm.xlu0 %2928, %v1019
        %v2930 = vpop.permute.xlu0 %2929
        %2932 = vset.pattern.permute.xlu0 6
        %2933 = vperm.xlu0 %2932, %v1024
        %v2934 = vpop.permute.xlu0 %2933
        %2936 = vset.pattern.permute.xlu0 6
        %2937 = vperm.xlu0 %2936, %v1029
        %v2938 = vpop.permute.xlu0 %2937
        %2940 = vset.pattern.permute.xlu0 6
        %2941 = vperm.xlu0 %2940, %v1034
        %v2942 = vpop.permute.xlu0 %2941
        %2944 = vset.pattern.permute.xlu0 6
        %2945 = vperm.xlu0 %2944, %v1039
        %v2946 = vpop.permute.xlu0 %2945
        %2948 = vset.pattern.permute.xlu0 6
        %2949 = vperm.xlu0 %2948, %v1044
        %v2950 = vpop.permute.xlu0 %2949
        %2952 = vset.pattern.permute.xlu0 6
        %2953 = vperm.xlu0 %2952, %v1049
        %v2954 = vpop.permute.xlu0 %2953
        %2956 = vset.pattern.permute.xlu0 6
        %2957 = vperm.xlu0 %2956, %v1054
        %v2958 = vpop.permute.xlu0 %2957
        %2960 = vset.pattern.permute.xlu0 6
        %2961 = vperm.xlu0 %2960, %v1059
        %v2962 = vpop.permute.xlu0 %2961
        %2964 = vset.pattern.permute.xlu0 6
        %2965 = vperm.xlu0 %2964, %v1064
        %v2966 = vpop.permute.xlu0 %2965
        %2968 = vset.pattern.permute.xlu0 6
        %2969 = vperm.xlu0 %2968, %v1069
        %v2970 = vpop.permute.xlu0 %2969
        %2972 = vset.pattern.permute.xlu0 6
        %2973 = vperm.xlu0 %2972, %v1074
        %v2974 = vpop.permute.xlu0 %2973
        %2976 = vset.pattern.permute.xlu0 6
        %2977 = vperm.xlu0 %2976, %v1079
        %v2978 = vpop.permute.xlu0 %2977
        %2980 = vset.pattern.permute.xlu0 6
        %2981 = vperm.xlu0 %2980, %v1084
        %v2982 = vpop.permute.xlu0 %2981
        %v2984 = vsel %vm453, %v2858, -inf
        %v2985 = vsel %vm454, %v2858, -inf
        %v2986 = vsel %vm455, %v2862, -inf
        %v2987 = vsel %vm456, %v2862, -inf
        %v2988 = vsel %vm457, %v2866, -inf
        %v2989 = vsel %vm458, %v2866, -inf
        %v2990 = vsel %vm459, %v2870, -inf
        %v2991 = vsel %vm460, %v2870, -inf
        %v2992 = vsel %vm461, %v2874, -inf
        %v2993 = vsel %vm462, %v2874, -inf
        %v2994 = vsel %vm463, %v2878, -inf
        %v2995 = vsel %vm464, %v2878, -inf
        %v2996 = vsel %vm465, %v2882, -inf
        %v2997 = vsel %vm466, %v2882, -inf
        %v2998 = vsel %vm467, %v2886, -inf
        %v2999 = vsel %vm468, %v2886, -inf
        %v3000 = vsel %vm469, %v2890, -inf
        %v3001 = vsel %vm470, %v2890, -inf
        %v3002 = vsel %vm471, %v2894, -inf
        %v3003 = vsel %vm472, %v2894, -inf
        %v3004 = vsel %vm473, %v2898, -inf
        %v3005 = vsel %vm474, %v2898, -inf
        %v3006 = vsel %vm475, %v2902, -inf
        %v3007 = vsel %vm476, %v2902, -inf
        %v3008 = vsel %vm477, %v2906, -inf
        %v3009 = vsel %vm478, %v2906, -inf
        %v3010 = vsel %vm479, %v2910, -inf
        %v3011 = vsel %vm480, %v2910, -inf
        %v3012 = vsel %vm481, %v2914, -inf
        %v3013 = vsel %vm482, %v2914, -inf
        %v3014 = vsel %vm483, %v2918, -inf
        %v3015 = vsel %vm484, %v2918, -inf
        %v3016 = vsel %vm485, %v2922, -inf
        %v3017 = vsel %vm486, %v2922, -inf
        %v3018 = vsel %vm487, %v2926, -inf
        %v3019 = vsel %vm488, %v2926, -inf
        %v3020 = vsel %vm489, %v2930, -inf
        %v3021 = vsel %vm490, %v2930, -inf
        %v3022 = vsel %vm491, %v2934, -inf
        %v3023 = vsel %vm492, %v2934, -inf
        %v3024 = vsel %vm493, %v2938, -inf
        %v3025 = vsel %vm494, %v2938, -inf
        %v3026 = vsel %vm495, %v2942, -inf
        %v3027 = vsel %vm496, %v2942, -inf
        %v3028 = vsel %vm497, %v2946, -inf
        %v3029 = vsel %vm498, %v2946, -inf
        %v3030 = vsel %vm499, %v2950, -inf
        %v3031 = vsel %vm500, %v2950, -inf
        %v3032 = vsel %vm501, %v2954, -inf
        %v3033 = vsel %vm502, %v2954, -inf
        %v3034 = vsel %vm503, %v2958, -inf
        %v3035 = vsel %vm504, %v2958, -inf
        %v3036 = vsel %vm505, %v2962, -inf
        %v3037 = vsel %vm506, %v2962, -inf
        %v3038 = vsel %vm507, %v2966, -inf
        %v3039 = vsel %vm508, %v2966, -inf
        %v3040 = vsel %vm509, %v2970, -inf
        %v3041 = vsel %vm510, %v2970, -inf
        %v3042 = vsel %vm511, %v2974, -inf
        %v3043 = vsel %vm512, %v2974, -inf
        %v3044 = vsel %vm513, %v2978, -inf
        %v3045 = vsel %vm514, %v2978, -inf
        %v3046 = vsel %vm515, %v2982, -inf
        %v3047 = vsel %vm516, %v2982, -inf
        %v3048 = vmax.f32 %v2984, %v2988
        %v3049 = vmax.f32 %v2986, %v2990
        %v3050 = vmax.f32 %v3048, %v2992
        %v3051 = vmax.f32 %v3049, %v2994
        %v3052 = vmax.f32 %v3050, %v2996
        %v3053 = vmax.f32 %v3051, %v2998
        %v3054 = vmax.f32 %v3052, %v3000
        %v3055 = vmax.f32 %v3053, %v3002
        %v3056 = vmax.f32 %v3054, %v3004
        %v3057 = vmax.f32 %v3055, %v3006
        %v3058 = vmax.f32 %v3056, %v3008
        %v3059 = vmax.f32 %v3057, %v3010
        %v3060 = vmax.f32 %v3058, %v3012
        %v3061 = vmax.f32 %v3059, %v3014
        %v3062 = vmax.f32 %v3060, %v3016
        %v3063 = vmax.f32 %v3061, %v3018
        %v3064 = vmax.f32 %v3062, %v3020
        %v3065 = vmax.f32 %v3063, %v3022
        %v3066 = vmax.f32 %v3064, %v3024
        %v3067 = vmax.f32 %v3065, %v3026
        %v3068 = vmax.f32 %v3066, %v3028
        %v3069 = vmax.f32 %v3067, %v3030
        %v3070 = vmax.f32 %v3068, %v3032
        %v3071 = vmax.f32 %v3069, %v3034
        %v3072 = vmax.f32 %v3070, %v3036
        %v3073 = vmax.f32 %v3071, %v3038
        %v3074 = vmax.f32 %v3072, %v3040
        %v3075 = vmax.f32 %v3073, %v3042
        %v3076 = vmax.f32 %v3074, %v3044
        %v3077 = vmax.f32 %v3075, %v3046
        %v3078 = vmax.f32 %v3076, %v3077
        %v3079 = vrot.slane %v3078, 4
        %v3080 = vmax.f32 %v3078, %v3079
        %v3081 = vrot.slane %v3080, 2
        %v3082 = vmax.f32 %v3080, %v3081
        %v3083 = vrot.slane %v3082, 1
        %v3084 = vmax.f32 %v3082, %v3083
        %v3085 = vmax.f32 %v2985, %v2989
        %v3086 = vmax.f32 %v2987, %v2991
        %v3087 = vmax.f32 %v3085, %v2993
        %v3088 = vmax.f32 %v3086, %v2995
        %v3089 = vmax.f32 %v3087, %v2997
        %v3090 = vmax.f32 %v3088, %v2999
        %v3091 = vmax.f32 %v3089, %v3001
        %v3092 = vmax.f32 %v3090, %v3003
        %v3093 = vmax.f32 %v3091, %v3005
        %v3094 = vmax.f32 %v3092, %v3007
        %v3095 = vmax.f32 %v3093, %v3009
        %v3096 = vmax.f32 %v3094, %v3011
        %v3097 = vmax.f32 %v3095, %v3013
        %v3098 = vmax.f32 %v3096, %v3015
        %v3099 = vmax.f32 %v3097, %v3017
        %v3100 = vmax.f32 %v3098, %v3019
        %v3101 = vmax.f32 %v3099, %v3021
        %v3102 = vmax.f32 %v3100, %v3023
        %v3103 = vmax.f32 %v3101, %v3025
        %v3104 = vmax.f32 %v3102, %v3027
        %v3105 = vmax.f32 %v3103, %v3029
        %v3106 = vmax.f32 %v3104, %v3031
        %v3107 = vmax.f32 %v3105, %v3033
        %v3108 = vmax.f32 %v3106, %v3035
        %v3109 = vmax.f32 %v3107, %v3037
        %v3110 = vmax.f32 %v3108, %v3039
        %v3111 = vmax.f32 %v3109, %v3041
        %v3112 = vmax.f32 %v3110, %v3043
        %v3113 = vmax.f32 %v3111, %v3045
        %v3114 = vmax.f32 %v3112, %v3047
        %v3115 = vmax.f32 %v3113, %v3114
        %v3116 = vrot.slane %v3115, 4
        %v3117 = vmax.f32 %v3115, %v3116
        %v3118 = vrot.slane %v3117, 2
        %v3119 = vmax.f32 %v3117, %v3118
        %v3120 = vrot.slane %v3119, 1
        %v3121 = vmax.f32 %v3119, %v3120
        %s3122 = scalar_lea.vmem %s289, 6 [#allocation3]
        %v3123 = vld [vmem:[%s3122] ss:$8 sm:$0x3]
        %v3126 = vcombine.low %v3084, %v3121
        %v3128 = vunpack.c.l.s4 1966171168
        %v3129 = vunpack.c.0.s8 %v3128
        %v3130 = vlaneseq
        %v3131 = vshrl.u32 %v3130, 7
        %v3132 = vsub.s32 %v3129, %v3131
        %v3133 = vrot.slane %v3126, %v3132
        %v3135 = vunpack.c.l.s4 1966171168
        %v3136 = vunpack.c.0.s8 %v3135
        %v3137 = vlaneseq
        %v3138 = vshrl.u32 %v3137, 7
        %v3139 = vsub.s32 %v3136, %v3138
        %v3140 = vrot.slane %v3133, %v3139
        %v3142 = vmax.f32 %v3123, %v3140
        %3143 = vst.msk [vmem:[%s3122] ss:$8 sm:$0x3] %vm1408, %v3142
        %3144 = vst.msk [vmem:[%s3122] ss:$8 sm:$0x0] %vm1408, %v3142
        %3145 = vset.pattern.permute.xlu0 7
        %3146 = vperm.xlu0 %3145, %v929
        %v3147 = vpop.permute.xlu0 %3146
        %3149 = vset.pattern.permute.xlu0 7
        %3150 = vperm.xlu0 %3149, %v934
        %v3151 = vpop.permute.xlu0 %3150
        %3153 = vset.pattern.permute.xlu0 7
        %3154 = vperm.xlu0 %3153, %v939
        %v3155 = vpop.permute.xlu0 %3154
        %3157 = vset.pattern.permute.xlu0 7
        %3158 = vperm.xlu0 %3157, %v944
        %v3159 = vpop.permute.xlu0 %3158
        %3161 = vset.pattern.permute.xlu0 7
        %3162 = vperm.xlu0 %3161, %v949
        %v3163 = vpop.permute.xlu0 %3162
        %3165 = vset.pattern.permute.xlu0 7
        %3166 = vperm.xlu0 %3165, %v954
        %v3167 = vpop.permute.xlu0 %3166
        %3169 = vset.pattern.permute.xlu0 7
        %3170 = vperm.xlu0 %3169, %v959
        %v3171 = vpop.permute.xlu0 %3170
        %3173 = vset.pattern.permute.xlu0 7
        %3174 = vperm.xlu0 %3173, %v964
        %v3175 = vpop.permute.xlu0 %3174
        %3177 = vset.pattern.permute.xlu0 7
        %3178 = vperm.xlu0 %3177, %v969
        %v3179 = vpop.permute.xlu0 %3178
        %3181 = vset.pattern.permute.xlu0 7
        %3182 = vperm.xlu0 %3181, %v974
        %v3183 = vpop.permute.xlu0 %3182
        %3185 = vset.pattern.permute.xlu0 7
        %3186 = vperm.xlu0 %3185, %v979
        %v3187 = vpop.permute.xlu0 %3186
        %3189 = vset.pattern.permute.xlu0 7
        %3190 = vperm.xlu0 %3189, %v984
        %v3191 = vpop.permute.xlu0 %3190
        %3193 = vset.pattern.permute.xlu0 7
        %3194 = vperm.xlu0 %3193, %v989
        %v3195 = vpop.permute.xlu0 %3194
        %3197 = vset.pattern.permute.xlu0 7
        %3198 = vperm.xlu0 %3197, %v994
        %v3199 = vpop.permute.xlu0 %3198
        %3201 = vset.pattern.permute.xlu0 7
        %3202 = vperm.xlu0 %3201, %v999
        %v3203 = vpop.permute.xlu0 %3202
        %3205 = vset.pattern.permute.xlu0 7
        %3206 = vperm.xlu0 %3205, %v1004
        %v3207 = vpop.permute.xlu0 %3206
        %3209 = vset.pattern.permute.xlu0 7
        %3210 = vperm.xlu0 %3209, %v1009
        %v3211 = vpop.permute.xlu0 %3210
        %3213 = vset.pattern.permute.xlu0 7
        %3214 = vperm.xlu0 %3213, %v1014
        %v3215 = vpop.permute.xlu0 %3214
        %3217 = vset.pattern.permute.xlu0 7
        %3218 = vperm.xlu0 %3217, %v1019
        %v3219 = vpop.permute.xlu0 %3218
        %3221 = vset.pattern.permute.xlu0 7
        %3222 = vperm.xlu0 %3221, %v1024
        %v3223 = vpop.permute.xlu0 %3222
        %3225 = vset.pattern.permute.xlu0 7
        %3226 = vperm.xlu0 %3225, %v1029
        %v3227 = vpop.permute.xlu0 %3226
        %3229 = vset.pattern.permute.xlu0 7
        %3230 = vperm.xlu0 %3229, %v1034
        %v3231 = vpop.permute.xlu0 %3230
        %3233 = vset.pattern.permute.xlu0 7
        %3234 = vperm.xlu0 %3233, %v1039
        %v3235 = vpop.permute.xlu0 %3234
        %3237 = vset.pattern.permute.xlu0 7
        %3238 = vperm.xlu0 %3237, %v1044
        %v3239 = vpop.permute.xlu0 %3238
        %3241 = vset.pattern.permute.xlu0 7
        %3242 = vperm.xlu0 %3241, %v1049
        %v3243 = vpop.permute.xlu0 %3242
        %3245 = vset.pattern.permute.xlu0 7
        %3246 = vperm.xlu0 %3245, %v1054
        %v3247 = vpop.permute.xlu0 %3246
        %3249 = vset.pattern.permute.xlu0 7
        %3250 = vperm.xlu0 %3249, %v1059
        %v3251 = vpop.permute.xlu0 %3250
        %3253 = vset.pattern.permute.xlu0 7
        %3254 = vperm.xlu0 %3253, %v1064
        %v3255 = vpop.permute.xlu0 %3254
        %3257 = vset.pattern.permute.xlu0 7
        %3258 = vperm.xlu0 %3257, %v1069
        %v3259 = vpop.permute.xlu0 %3258
        %3261 = vset.pattern.permute.xlu0 7
        %3262 = vperm.xlu0 %3261, %v1074
        %v3263 = vpop.permute.xlu0 %3262
        %3265 = vset.pattern.permute.xlu0 7
        %3266 = vperm.xlu0 %3265, %v1079
        %v3267 = vpop.permute.xlu0 %3266
        %3269 = vset.pattern.permute.xlu0 7
        %3270 = vperm.xlu0 %3269, %v1084
        %v3271 = vpop.permute.xlu0 %3270
        %v3273 = vsel %vm453, %v3147, -inf
        %v3274 = vsel %vm454, %v3147, -inf
        %v3275 = vsel %vm455, %v3151, -inf
        %v3276 = vsel %vm456, %v3151, -inf
        %v3277 = vsel %vm457, %v3155, -inf
        %v3278 = vsel %vm458, %v3155, -inf
        %v3279 = vsel %vm459, %v3159, -inf
        %v3280 = vsel %vm460, %v3159, -inf
        %v3281 = vsel %vm461, %v3163, -inf
        %v3282 = vsel %vm462, %v3163, -inf
        %v3283 = vsel %vm463, %v3167, -inf
        %v3284 = vsel %vm464, %v3167, -inf
        %v3285 = vsel %vm465, %v3171, -inf
        %v3286 = vsel %vm466, %v3171, -inf
        %v3287 = vsel %vm467, %v3175, -inf
        %v3288 = vsel %vm468, %v3175, -inf
        %v3289 = vsel %vm469, %v3179, -inf
        %v3290 = vsel %vm470, %v3179, -inf
        %v3291 = vsel %vm471, %v3183, -inf
        %v3292 = vsel %vm472, %v3183, -inf
        %v3293 = vsel %vm473, %v3187, -inf
        %v3294 = vsel %vm474, %v3187, -inf
        %v3295 = vsel %vm475, %v3191, -inf
        %v3296 = vsel %vm476, %v3191, -inf
        %v3297 = vsel %vm477, %v3195, -inf
        %v3298 = vsel %vm478, %v3195, -inf
        %v3299 = vsel %vm479, %v3199, -inf
        %v3300 = vsel %vm480, %v3199, -inf
        %v3301 = vsel %vm481, %v3203, -inf
        %v3302 = vsel %vm482, %v3203, -inf
        %v3303 = vsel %vm483, %v3207, -inf
        %v3304 = vsel %vm484, %v3207, -inf
        %v3305 = vsel %vm485, %v3211, -inf
        %v3306 = vsel %vm486, %v3211, -inf
        %v3307 = vsel %vm487, %v3215, -inf
        %v3308 = vsel %vm488, %v3215, -inf
        %v3309 = vsel %vm489, %v3219, -inf
        %v3310 = vsel %vm490, %v3219, -inf
        %v3311 = vsel %vm491, %v3223, -inf
        %v3312 = vsel %vm492, %v3223, -inf
        %v3313 = vsel %vm493, %v3227, -inf
        %v3314 = vsel %vm494, %v3227, -inf
        %v3315 = vsel %vm495, %v3231, -inf
        %v3316 = vsel %vm496, %v3231, -inf
        %v3317 = vsel %vm497, %v3235, -inf
        %v3318 = vsel %vm498, %v3235, -inf
        %v3319 = vsel %vm499, %v3239, -inf
        %v3320 = vsel %vm500, %v3239, -inf
        %v3321 = vsel %vm501, %v3243, -inf
        %v3322 = vsel %vm502, %v3243, -inf
        %v3323 = vsel %vm503, %v3247, -inf
        %v3324 = vsel %vm504, %v3247, -inf
        %v3325 = vsel %vm505, %v3251, -inf
        %v3326 = vsel %vm506, %v3251, -inf
        %v3327 = vsel %vm507, %v3255, -inf
        %v3328 = vsel %vm508, %v3255, -inf
        %v3329 = vsel %vm509, %v3259, -inf
        %v3330 = vsel %vm510, %v3259, -inf
        %v3331 = vsel %vm511, %v3263, -inf
        %v3332 = vsel %vm512, %v3263, -inf
        %v3333 = vsel %vm513, %v3267, -inf
        %v3334 = vsel %vm514, %v3267, -inf
        %v3335 = vsel %vm515, %v3271, -inf
        %v3336 = vsel %vm516, %v3271, -inf
        %v3337 = vmax.f32 %v3273, %v3277
        %v3338 = vmax.f32 %v3275, %v3279
        %v3339 = vmax.f32 %v3337, %v3281
        %v3340 = vmax.f32 %v3338, %v3283
        %v3341 = vmax.f32 %v3339, %v3285
        %v3342 = vmax.f32 %v3340, %v3287
        %v3343 = vmax.f32 %v3341, %v3289
        %v3344 = vmax.f32 %v3342, %v3291
        %v3345 = vmax.f32 %v3343, %v3293
        %v3346 = vmax.f32 %v3344, %v3295
        %v3347 = vmax.f32 %v3345, %v3297
        %v3348 = vmax.f32 %v3346, %v3299
        %v3349 = vmax.f32 %v3347, %v3301
        %v3350 = vmax.f32 %v3348, %v3303
        %v3351 = vmax.f32 %v3349, %v3305
        %v3352 = vmax.f32 %v3350, %v3307
        %v3353 = vmax.f32 %v3351, %v3309
        %v3354 = vmax.f32 %v3352, %v3311
        %v3355 = vmax.f32 %v3353, %v3313
        %v3356 = vmax.f32 %v3354, %v3315
        %v3357 = vmax.f32 %v3355, %v3317
        %v3358 = vmax.f32 %v3356, %v3319
        %v3359 = vmax.f32 %v3357, %v3321
        %v3360 = vmax.f32 %v3358, %v3323
        %v3361 = vmax.f32 %v3359, %v3325
        %v3362 = vmax.f32 %v3360, %v3327
        %v3363 = vmax.f32 %v3361, %v3329
        %v3364 = vmax.f32 %v3362, %v3331
        %v3365 = vmax.f32 %v3363, %v3333
        %v3366 = vmax.f32 %v3364, %v3335
        %v3367 = vmax.f32 %v3365, %v3366
        %v3368 = vrot.slane %v3367, 4
        %v3369 = vmax.f32 %v3367, %v3368
        %v3370 = vrot.slane %v3369, 2
        %v3371 = vmax.f32 %v3369, %v3370
        %v3372 = vrot.slane %v3371, 1
        %v3373 = vmax.f32 %v3371, %v3372
        %v3374 = vmax.f32 %v3274, %v3278
        %v3375 = vmax.f32 %v3276, %v3280
        %v3376 = vmax.f32 %v3374, %v3282
        %v3377 = vmax.f32 %v3375, %v3284
        %v3378 = vmax.f32 %v3376, %v3286
        %v3379 = vmax.f32 %v3377, %v3288
        %v3380 = vmax.f32 %v3378, %v3290
        %v3381 = vmax.f32 %v3379, %v3292
        %v3382 = vmax.f32 %v3380, %v3294
        %v3383 = vmax.f32 %v3381, %v3296
        %v3384 = vmax.f32 %v3382, %v3298
        %v3385 = vmax.f32 %v3383, %v3300
        %v3386 = vmax.f32 %v3384, %v3302
        %v3387 = vmax.f32 %v3385, %v3304
        %v3388 = vmax.f32 %v3386, %v3306
        %v3389 = vmax.f32 %v3387, %v3308
        %v3390 = vmax.f32 %v3388, %v3310
        %v3391 = vmax.f32 %v3389, %v3312
        %v3392 = vmax.f32 %v3390, %v3314
        %v3393 = vmax.f32 %v3391, %v3316
        %v3394 = vmax.f32 %v3392, %v3318
        %v3395 = vmax.f32 %v3393, %v3320
        %v3396 = vmax.f32 %v3394, %v3322
        %v3397 = vmax.f32 %v3395, %v3324
        %v3398 = vmax.f32 %v3396, %v3326
        %v3399 = vmax.f32 %v3397, %v3328
        %v3400 = vmax.f32 %v3398, %v3330
        %v3401 = vmax.f32 %v3399, %v3332
        %v3402 = vmax.f32 %v3400, %v3334
        %v3403 = vmax.f32 %v3401, %v3336
        %v3404 = vmax.f32 %v3402, %v3403
        %v3405 = vrot.slane %v3404, 4
        %v3406 = vmax.f32 %v3404, %v3405
        %v3407 = vrot.slane %v3406, 2
        %v3408 = vmax.f32 %v3406, %v3407
        %v3409 = vrot.slane %v3408, 1
        %v3410 = vmax.f32 %v3408, %v3409
        %s3411 = scalar_lea.vmem %s289, 7 [#allocation3]
        %v3412 = vld [vmem:[%s3411] ss:$8 sm:$0x3]
        %v3415 = vcombine.low %v3373, %v3410
        %v3417 = vunpack.c.l.s4 1966171168
        %v3418 = vunpack.c.0.s8 %v3417
        %v3419 = vlaneseq
        %v3420 = vshrl.u32 %v3419, 7
        %v3421 = vsub.s32 %v3418, %v3420
        %v3422 = vrot.slane %v3415, %v3421
        %v3424 = vunpack.c.l.s4 1966171168
        %v3425 = vunpack.c.0.s8 %v3424
        %v3426 = vlaneseq
        %v3427 = vshrl.u32 %v3426, 7
        %v3428 = vsub.s32 %v3425, %v3427
        %v3429 = vrot.slane %v3422, %v3428
        %v3431 = vmax.f32 %v3412, %v3429
        %3432 = vst.msk [vmem:[%s3411] ss:$8 sm:$0x3] %vm1408, %v3431
        %3433 = vst.msk [vmem:[%s3411] ss:$8 sm:$0x0] %vm1408, %v3431
        %3434 = vset.pattern.permute.xlu0 8
        %3435 = vperm.xlu0 %3434, %v929
        %v3436 = vpop.permute.xlu0 %3435
        %3438 = vset.pattern.permute.xlu0 8
        %3439 = vperm.xlu0 %3438, %v934
        %v3440 = vpop.permute.xlu0 %3439
        %3442 = vset.pattern.permute.xlu0 8
        %3443 = vperm.xlu0 %3442, %v939
        %v3444 = vpop.permute.xlu0 %3443
        %3446 = vset.pattern.permute.xlu0 8
        %3447 = vperm.xlu0 %3446, %v944
        %v3448 = vpop.permute.xlu0 %3447
        %3450 = vset.pattern.permute.xlu0 8
        %3451 = vperm.xlu0 %3450, %v949
        %v3452 = vpop.permute.xlu0 %3451
        %3454 = vset.pattern.permute.xlu0 8
        %3455 = vperm.xlu0 %3454, %v954
        %v3456 = vpop.permute.xlu0 %3455
        %3458 = vset.pattern.permute.xlu0 8
        %3459 = vperm.xlu0 %3458, %v959
        %v3460 = vpop.permute.xlu0 %3459
        %3462 = vset.pattern.permute.xlu0 8
        %3463 = vperm.xlu0 %3462, %v964
        %v3464 = vpop.permute.xlu0 %3463
        %3466 = vset.pattern.permute.xlu0 8
        %3467 = vperm.xlu0 %3466, %v969
        %v3468 = vpop.permute.xlu0 %3467
        %3470 = vset.pattern.permute.xlu0 8
        %3471 = vperm.xlu0 %3470, %v974
        %v3472 = vpop.permute.xlu0 %3471
        %3474 = vset.pattern.permute.xlu0 8
        %3475 = vperm.xlu0 %3474, %v979
        %v3476 = vpop.permute.xlu0 %3475
        %3478 = vset.pattern.permute.xlu0 8
        %3479 = vperm.xlu0 %3478, %v984
        %v3480 = vpop.permute.xlu0 %3479
        %3482 = vset.pattern.permute.xlu0 8
        %3483 = vperm.xlu0 %3482, %v989
        %v3484 = vpop.permute.xlu0 %3483
        %3486 = vset.pattern.permute.xlu0 8
        %3487 = vperm.xlu0 %3486, %v994
        %v3488 = vpop.permute.xlu0 %3487
        %3490 = vset.pattern.permute.xlu0 8
        %3491 = vperm.xlu0 %3490, %v999
        %v3492 = vpop.permute.xlu0 %3491
        %3494 = vset.pattern.permute.xlu0 8
        %3495 = vperm.xlu0 %3494, %v1004
        %v3496 = vpop.permute.xlu0 %3495
        %3498 = vset.pattern.permute.xlu0 8
        %3499 = vperm.xlu0 %3498, %v1009
        %v3500 = vpop.permute.xlu0 %3499
        %3502 = vset.pattern.permute.xlu0 8
        %3503 = vperm.xlu0 %3502, %v1014
        %v3504 = vpop.permute.xlu0 %3503
        %3506 = vset.pattern.permute.xlu0 8
        %3507 = vperm.xlu0 %3506, %v1019
        %v3508 = vpop.permute.xlu0 %3507
        %3510 = vset.pattern.permute.xlu0 8
        %3511 = vperm.xlu0 %3510, %v1024
        %v3512 = vpop.permute.xlu0 %3511
        %3514 = vset.pattern.permute.xlu0 8
        %3515 = vperm.xlu0 %3514, %v1029
        %v3516 = vpop.permute.xlu0 %3515
        %3518 = vset.pattern.permute.xlu0 8
        %3519 = vperm.xlu0 %3518, %v1034
        %v3520 = vpop.permute.xlu0 %3519
        %3522 = vset.pattern.permute.xlu0 8
        %3523 = vperm.xlu0 %3522, %v1039
        %v3524 = vpop.permute.xlu0 %3523
        %3526 = vset.pattern.permute.xlu0 8
        %3527 = vperm.xlu0 %3526, %v1044
        %v3528 = vpop.permute.xlu0 %3527
        %3530 = vset.pattern.permute.xlu0 8
        %3531 = vperm.xlu0 %3530, %v1049
        %v3532 = vpop.permute.xlu0 %3531
        %3534 = vset.pattern.permute.xlu0 8
        %3535 = vperm.xlu0 %3534, %v1054
        %v3536 = vpop.permute.xlu0 %3535
        %3538 = vset.pattern.permute.xlu0 8
        %3539 = vperm.xlu0 %3538, %v1059
        %v3540 = vpop.permute.xlu0 %3539
        %3542 = vset.pattern.permute.xlu0 8
        %3543 = vperm.xlu0 %3542, %v1064
        %v3544 = vpop.permute.xlu0 %3543
        %3546 = vset.pattern.permute.xlu0 8
        %3547 = vperm.xlu0 %3546, %v1069
        %v3548 = vpop.permute.xlu0 %3547
        %3550 = vset.pattern.permute.xlu0 8
        %3551 = vperm.xlu0 %3550, %v1074
        %v3552 = vpop.permute.xlu0 %3551
        %3554 = vset.pattern.permute.xlu0 8
        %3555 = vperm.xlu0 %3554, %v1079
        %v3556 = vpop.permute.xlu0 %3555
        %3558 = vset.pattern.permute.xlu0 8
        %3559 = vperm.xlu0 %3558, %v1084
        %v3560 = vpop.permute.xlu0 %3559
        %v3562 = vsel %vm453, %v3436, -inf
        %v3563 = vsel %vm454, %v3436, -inf
        %v3564 = vsel %vm455, %v3440, -inf
        %v3565 = vsel %vm456, %v3440, -inf
        %v3566 = vsel %vm457, %v3444, -inf
        %v3567 = vsel %vm458, %v3444, -inf
        %v3568 = vsel %vm459, %v3448, -inf
        %v3569 = vsel %vm460, %v3448, -inf
        %v3570 = vsel %vm461, %v3452, -inf
        %v3571 = vsel %vm462, %v3452, -inf
        %v3572 = vsel %vm463, %v3456, -inf
        %v3573 = vsel %vm464, %v3456, -inf
        %v3574 = vsel %vm465, %v3460, -inf
        %v3575 = vsel %vm466, %v3460, -inf
        %v3576 = vsel %vm467, %v3464, -inf
        %v3577 = vsel %vm468, %v3464, -inf
        %v3578 = vsel %vm469, %v3468, -inf
        %v3579 = vsel %vm470, %v3468, -inf
        %v3580 = vsel %vm471, %v3472, -inf
        %v3581 = vsel %vm472, %v3472, -inf
        %v3582 = vsel %vm473, %v3476, -inf
        %v3583 = vsel %vm474, %v3476, -inf
        %v3584 = vsel %vm475, %v3480, -inf
        %v3585 = vsel %vm476, %v3480, -inf
        %v3586 = vsel %vm477, %v3484, -inf
        %v3587 = vsel %vm478, %v3484, -inf
        %v3588 = vsel %vm479, %v3488, -inf
        %v3589 = vsel %vm480, %v3488, -inf
        %v3590 = vsel %vm481, %v3492, -inf
        %v3591 = vsel %vm482, %v3492, -inf
        %v3592 = vsel %vm483, %v3496, -inf
        %v3593 = vsel %vm484, %v3496, -inf
        %v3594 = vsel %vm485, %v3500, -inf
        %v3595 = vsel %vm486, %v3500, -inf
        %v3596 = vsel %vm487, %v3504, -inf
        %v3597 = vsel %vm488, %v3504, -inf
        %v3598 = vsel %vm489, %v3508, -inf
        %v3599 = vsel %vm490, %v3508, -inf
        %v3600 = vsel %vm491, %v3512, -inf
        %v3601 = vsel %vm492, %v3512, -inf
        %v3602 = vsel %vm493, %v3516, -inf
        %v3603 = vsel %vm494, %v3516, -inf
        %v3604 = vsel %vm495, %v3520, -inf
        %v3605 = vsel %vm496, %v3520, -inf
        %v3606 = vsel %vm497, %v3524, -inf
        %v3607 = vsel %vm498, %v3524, -inf
        %v3608 = vsel %vm499, %v3528, -inf
        %v3609 = vsel %vm500, %v3528, -inf
        %v3610 = vsel %vm501, %v3532, -inf
        %v3611 = vsel %vm502, %v3532, -inf
        %v3612 = vsel %vm503, %v3536, -inf
        %v3613 = vsel %vm504, %v3536, -inf
        %v3614 = vsel %vm505, %v3540, -inf
        %v3615 = vsel %vm506, %v3540, -inf
        %v3616 = vsel %vm507, %v3544, -inf
        %v3617 = vsel %vm508, %v3544, -inf
        %v3618 = vsel %vm509, %v3548, -inf
        %v3619 = vsel %vm510, %v3548, -inf
        %v3620 = vsel %vm511, %v3552, -inf
        %v3621 = vsel %vm512, %v3552, -inf
        %v3622 = vsel %vm513, %v3556, -inf
        %v3623 = vsel %vm514, %v3556, -inf
        %v3624 = vsel %vm515, %v3560, -inf
        %v3625 = vsel %vm516, %v3560, -inf
        %v3626 = vmax.f32 %v3562, %v3566
        %v3627 = vmax.f32 %v3564, %v3568
        %v3628 = vmax.f32 %v3626, %v3570
        %v3629 = vmax.f32 %v3627, %v3572
        %v3630 = vmax.f32 %v3628, %v3574
        %v3631 = vmax.f32 %v3629, %v3576
        %v3632 = vmax.f32 %v3630, %v3578
        %v3633 = vmax.f32 %v3631, %v3580
        %v3634 = vmax.f32 %v3632, %v3582
        %v3635 = vmax.f32 %v3633, %v3584
        %v3636 = vmax.f32 %v3634, %v3586
        %v3637 = vmax.f32 %v3635, %v3588
        %v3638 = vmax.f32 %v3636, %v3590
        %v3639 = vmax.f32 %v3637, %v3592
        %v3640 = vmax.f32 %v3638, %v3594
        %v3641 = vmax.f32 %v3639, %v3596
        %v3642 = vmax.f32 %v3640, %v3598
        %v3643 = vmax.f32 %v3641, %v3600
        %v3644 = vmax.f32 %v3642, %v3602
        %v3645 = vmax.f32 %v3643, %v3604
        %v3646 = vmax.f32 %v3644, %v3606
        %v3647 = vmax.f32 %v3645, %v3608
        %v3648 = vmax.f32 %v3646, %v3610
        %v3649 = vmax.f32 %v3647, %v3612
        %v3650 = vmax.f32 %v3648, %v3614
        %v3651 = vmax.f32 %v3649, %v3616
        %v3652 = vmax.f32 %v3650, %v3618
        %v3653 = vmax.f32 %v3651, %v3620
        %v3654 = vmax.f32 %v3652, %v3622
        %v3655 = vmax.f32 %v3653, %v3624
        %v3656 = vmax.f32 %v3654, %v3655
        %v3657 = vrot.slane %v3656, 4
        %v3658 = vmax.f32 %v3656, %v3657
        %v3659 = vrot.slane %v3658, 2
        %v3660 = vmax.f32 %v3658, %v3659
        %v3661 = vrot.slane %v3660, 1
        %v3662 = vmax.f32 %v3660, %v3661
        %v3663 = vmax.f32 %v3563, %v3567
        %v3664 = vmax.f32 %v3565, %v3569
        %v3665 = vmax.f32 %v3663, %v3571
        %v3666 = vmax.f32 %v3664, %v3573
        %v3667 = vmax.f32 %v3665, %v3575
        %v3668 = vmax.f32 %v3666, %v3577
        %v3669 = vmax.f32 %v3667, %v3579
        %v3670 = vmax.f32 %v3668, %v3581
        %v3671 = vmax.f32 %v3669, %v3583
        %v3672 = vmax.f32 %v3670, %v3585
        %v3673 = vmax.f32 %v3671, %v3587
        %v3674 = vmax.f32 %v3672, %v3589
        %v3675 = vmax.f32 %v3673, %v3591
        %v3676 = vmax.f32 %v3674, %v3593
        %v3677 = vmax.f32 %v3675, %v3595
        %v3678 = vmax.f32 %v3676, %v3597
        %v3679 = vmax.f32 %v3677, %v3599
        %v3680 = vmax.f32 %v3678, %v3601
        %v3681 = vmax.f32 %v3679, %v3603
        %v3682 = vmax.f32 %v3680, %v3605
        %v3683 = vmax.f32 %v3681, %v3607
        %v3684 = vmax.f32 %v3682, %v3609
        %v3685 = vmax.f32 %v3683, %v3611
        %v3686 = vmax.f32 %v3684, %v3613
        %v3687 = vmax.f32 %v3685, %v3615
        %v3688 = vmax.f32 %v3686, %v3617
        %v3689 = vmax.f32 %v3687, %v3619
        %v3690 = vmax.f32 %v3688, %v3621
        %v3691 = vmax.f32 %v3689, %v3623
        %v3692 = vmax.f32 %v3690, %v3625
        %v3693 = vmax.f32 %v3691, %v3692
        %v3694 = vrot.slane %v3693, 4
        %v3695 = vmax.f32 %v3693, %v3694
        %v3696 = vrot.slane %v3695, 2
        %v3697 = vmax.f32 %v3695, %v3696
        %v3698 = vrot.slane %v3697, 1
        %v3699 = vmax.f32 %v3697, %v3698
        %s3700 = scalar_lea.vmem %s289, 16 [#allocation3]
        %v3701 = vld [vmem:[%s3700] ss:$8 sm:$0x3]
        %v3704 = vcombine.low %v3662, %v3699
        %v3706 = vunpack.c.l.s4 1966171168
        %v3707 = vunpack.c.0.s8 %v3706
        %v3708 = vlaneseq
        %v3709 = vshrl.u32 %v3708, 7
        %v3710 = vsub.s32 %v3707, %v3709
        %v3711 = vrot.slane %v3704, %v3710
        %v3713 = vunpack.c.l.s4 1966171168
        %v3714 = vunpack.c.0.s8 %v3713
        %v3715 = vlaneseq
        %v3716 = vshrl.u32 %v3715, 7
        %v3717 = vsub.s32 %v3714, %v3716
        %v3718 = vrot.slane %v3711, %v3717
        %v3720 = vmax.f32 %v3701, %v3718
        %3721 = vst.msk [vmem:[%s3700] ss:$8 sm:$0x3] %vm1408, %v3720
        %3722 = vst.msk [vmem:[%s3700] ss:$8 sm:$0x0] %vm1408, %v3720
        %3723 = vset.pattern.permute.xlu0 9
        %3724 = vperm.xlu0 %3723, %v929
        %v3725 = vpop.permute.xlu0 %3724
        %3727 = vset.pattern.permute.xlu0 9
        %3728 = vperm.xlu0 %3727, %v934
        %v3729 = vpop.permute.xlu0 %3728
        %3731 = vset.pattern.permute.xlu0 9
        %3732 = vperm.xlu0 %3731, %v939
        %v3733 = vpop.permute.xlu0 %3732
        %3735 = vset.pattern.permute.xlu0 9
        %3736 = vperm.xlu0 %3735, %v944
        %v3737 = vpop.permute.xlu0 %3736
        %3739 = vset.pattern.permute.xlu0 9
        %3740 = vperm.xlu0 %3739, %v949
        %v3741 = vpop.permute.xlu0 %3740
        %3743 = vset.pattern.permute.xlu0 9
        %3744 = vperm.xlu0 %3743, %v954
        %v3745 = vpop.permute.xlu0 %3744
        %3747 = vset.pattern.permute.xlu0 9
        %3748 = vperm.xlu0 %3747, %v959
        %v3749 = vpop.permute.xlu0 %3748
        %3751 = vset.pattern.permute.xlu0 9
        %3752 = vperm.xlu0 %3751, %v964
        %v3753 = vpop.permute.xlu0 %3752
        %3755 = vset.pattern.permute.xlu0 9
        %3756 = vperm.xlu0 %3755, %v969
        %v3757 = vpop.permute.xlu0 %3756
        %3759 = vset.pattern.permute.xlu0 9
        %3760 = vperm.xlu0 %3759, %v974
        %v3761 = vpop.permute.xlu0 %3760
        %3763 = vset.pattern.permute.xlu0 9
        %3764 = vperm.xlu0 %3763, %v979
        %v3765 = vpop.permute.xlu0 %3764
        %3767 = vset.pattern.permute.xlu0 9
        %3768 = vperm.xlu0 %3767, %v984
        %v3769 = vpop.permute.xlu0 %3768
        %3771 = vset.pattern.permute.xlu0 9
        %3772 = vperm.xlu0 %3771, %v989
        %v3773 = vpop.permute.xlu0 %3772
        %3775 = vset.pattern.permute.xlu0 9
        %3776 = vperm.xlu0 %3775, %v994
        %v3777 = vpop.permute.xlu0 %3776
        %3779 = vset.pattern.permute.xlu0 9
        %3780 = vperm.xlu0 %3779, %v999
        %v3781 = vpop.permute.xlu0 %3780
        %3783 = vset.pattern.permute.xlu0 9
        %3784 = vperm.xlu0 %3783, %v1004
        %v3785 = vpop.permute.xlu0 %3784
        %3787 = vset.pattern.permute.xlu0 9
        %3788 = vperm.xlu0 %3787, %v1009
        %v3789 = vpop.permute.xlu0 %3788
        %3791 = vset.pattern.permute.xlu0 9
        %3792 = vperm.xlu0 %3791, %v1014
        %v3793 = vpop.permute.xlu0 %3792
        %3795 = vset.pattern.permute.xlu0 9
        %3796 = vperm.xlu0 %3795, %v1019
        %v3797 = vpop.permute.xlu0 %3796
        %3799 = vset.pattern.permute.xlu0 9
        %3800 = vperm.xlu0 %3799, %v1024
        %v3801 = vpop.permute.xlu0 %3800
        %3803 = vset.pattern.permute.xlu0 9
        %3804 = vperm.xlu0 %3803, %v1029
        %v3805 = vpop.permute.xlu0 %3804
        %3807 = vset.pattern.permute.xlu0 9
        %3808 = vperm.xlu0 %3807, %v1034
        %v3809 = vpop.permute.xlu0 %3808
        %3811 = vset.pattern.permute.xlu0 9
        %3812 = vperm.xlu0 %3811, %v1039
        %v3813 = vpop.permute.xlu0 %3812
        %3815 = vset.pattern.permute.xlu0 9
        %3816 = vperm.xlu0 %3815, %v1044
        %v3817 = vpop.permute.xlu0 %3816
        %3819 = vset.pattern.permute.xlu0 9
        %3820 = vperm.xlu0 %3819, %v1049
        %v3821 = vpop.permute.xlu0 %3820
        %3823 = vset.pattern.permute.xlu0 9
        %3824 = vperm.xlu0 %3823, %v1054
        %v3825 = vpop.permute.xlu0 %3824
        %3827 = vset.pattern.permute.xlu0 9
        %3828 = vperm.xlu0 %3827, %v1059
        %v3829 = vpop.permute.xlu0 %3828
        %3831 = vset.pattern.permute.xlu0 9
        %3832 = vperm.xlu0 %3831, %v1064
        %v3833 = vpop.permute.xlu0 %3832
        %3835 = vset.pattern.permute.xlu0 9
        %3836 = vperm.xlu0 %3835, %v1069
        %v3837 = vpop.permute.xlu0 %3836
        %3839 = vset.pattern.permute.xlu0 9
        %3840 = vperm.xlu0 %3839, %v1074
        %v3841 = vpop.permute.xlu0 %3840
        %3843 = vset.pattern.permute.xlu0 9
        %3844 = vperm.xlu0 %3843, %v1079
        %v3845 = vpop.permute.xlu0 %3844
        %3847 = vset.pattern.permute.xlu0 9
        %3848 = vperm.xlu0 %3847, %v1084
        %v3849 = vpop.permute.xlu0 %3848
        %v3851 = vsel %vm453, %v3725, -inf
        %v3852 = vsel %vm454, %v3725, -inf
        %v3853 = vsel %vm455, %v3729, -inf
        %v3854 = vsel %vm456, %v3729, -inf
        %v3855 = vsel %vm457, %v3733, -inf
        %v3856 = vsel %vm458, %v3733, -inf
        %v3857 = vsel %vm459, %v3737, -inf
        %v3858 = vsel %vm460, %v3737, -inf
        %v3859 = vsel %vm461, %v3741, -inf
        %v3860 = vsel %vm462, %v3741, -inf
        %v3861 = vsel %vm463, %v3745, -inf
        %v3862 = vsel %vm464, %v3745, -inf
        %v3863 = vsel %vm465, %v3749, -inf
        %v3864 = vsel %vm466, %v3749, -inf
        %v3865 = vsel %vm467, %v3753, -inf
        %v3866 = vsel %vm468, %v3753, -inf
        %v3867 = vsel %vm469, %v3757, -inf
        %v3868 = vsel %vm470, %v3757, -inf
        %v3869 = vsel %vm471, %v3761, -inf
        %v3870 = vsel %vm472, %v3761, -inf
        %v3871 = vsel %vm473, %v3765, -inf
        %v3872 = vsel %vm474, %v3765, -inf
        %v3873 = vsel %vm475, %v3769, -inf
        %v3874 = vsel %vm476, %v3769, -inf
        %v3875 = vsel %vm477, %v3773, -inf
        %v3876 = vsel %vm478, %v3773, -inf
        %v3877 = vsel %vm479, %v3777, -inf
        %v3878 = vsel %vm480, %v3777, -inf
        %v3879 = vsel %vm481, %v3781, -inf
        %v3880 = vsel %vm482, %v3781, -inf
        %v3881 = vsel %vm483, %v3785, -inf
        %v3882 = vsel %vm484, %v3785, -inf
        %v3883 = vsel %vm485, %v3789, -inf
        %v3884 = vsel %vm486, %v3789, -inf
        %v3885 = vsel %vm487, %v3793, -inf
        %v3886 = vsel %vm488, %v3793, -inf
        %v3887 = vsel %vm489, %v3797, -inf
        %v3888 = vsel %vm490, %v3797, -inf
        %v3889 = vsel %vm491, %v3801, -inf
        %v3890 = vsel %vm492, %v3801, -inf
        %v3891 = vsel %vm493, %v3805, -inf
        %v3892 = vsel %vm494, %v3805, -inf
        %v3893 = vsel %vm495, %v3809, -inf
        %v3894 = vsel %vm496, %v3809, -inf
        %v3895 = vsel %vm497, %v3813, -inf
        %v3896 = vsel %vm498, %v3813, -inf
        %v3897 = vsel %vm499, %v3817, -inf
        %v3898 = vsel %vm500, %v3817, -inf
        %v3899 = vsel %vm501, %v3821, -inf
        %v3900 = vsel %vm502, %v3821, -inf
        %v3901 = vsel %vm503, %v3825, -inf
        %v3902 = vsel %vm504, %v3825, -inf
        %v3903 = vsel %vm505, %v3829, -inf
        %v3904 = vsel %vm506, %v3829, -inf
        %v3905 = vsel %vm507, %v3833, -inf
        %v3906 = vsel %vm508, %v3833, -inf
        %v3907 = vsel %vm509, %v3837, -inf
        %v3908 = vsel %vm510, %v3837, -inf
        %v3909 = vsel %vm511, %v3841, -inf
        %v3910 = vsel %vm512, %v3841, -inf
        %v3911 = vsel %vm513, %v3845, -inf
        %v3912 = vsel %vm514, %v3845, -inf
        %v3913 = vsel %vm515, %v3849, -inf
        %v3914 = vsel %vm516, %v3849, -inf
        %v3915 = vmax.f32 %v3851, %v3855
        %v3916 = vmax.f32 %v3853, %v3857
        %v3917 = vmax.f32 %v3915, %v3859
        %v3918 = vmax.f32 %v3916, %v3861
        %v3919 = vmax.f32 %v3917, %v3863
        %v3920 = vmax.f32 %v3918, %v3865
        %v3921 = vmax.f32 %v3919, %v3867
        %v3922 = vmax.f32 %v3920, %v3869
        %v3923 = vmax.f32 %v3921, %v3871
        %v3924 = vmax.f32 %v3922, %v3873
        %v3925 = vmax.f32 %v3923, %v3875
        %v3926 = vmax.f32 %v3924, %v3877
        %v3927 = vmax.f32 %v3925, %v3879
        %v3928 = vmax.f32 %v3926, %v3881
        %v3929 = vmax.f32 %v3927, %v3883
        %v3930 = vmax.f32 %v3928, %v3885
        %v3931 = vmax.f32 %v3929, %v3887
        %v3932 = vmax.f32 %v3930, %v3889
        %v3933 = vmax.f32 %v3931, %v3891
        %v3934 = vmax.f32 %v3932, %v3893
        %v3935 = vmax.f32 %v3933, %v3895
        %v3936 = vmax.f32 %v3934, %v3897
        %v3937 = vmax.f32 %v3935, %v3899
        %v3938 = vmax.f32 %v3936, %v3901
        %v3939 = vmax.f32 %v3937, %v3903
        %v3940 = vmax.f32 %v3938, %v3905
        %v3941 = vmax.f32 %v3939, %v3907
        %v3942 = vmax.f32 %v3940, %v3909
        %v3943 = vmax.f32 %v3941, %v3911
        %v3944 = vmax.f32 %v3942, %v3913
        %v3945 = vmax.f32 %v3943, %v3944
        %v3946 = vrot.slane %v3945, 4
        %v3947 = vmax.f32 %v3945, %v3946
        %v3948 = vrot.slane %v3947, 2
        %v3949 = vmax.f32 %v3947, %v3948
        %v3950 = vrot.slane %v3949, 1
        %v3951 = vmax.f32 %v3949, %v3950
        %v3952 = vmax.f32 %v3852, %v3856
        %v3953 = vmax.f32 %v3854, %v3858
        %v3954 = vmax.f32 %v3952, %v3860
        %v3955 = vmax.f32 %v3953, %v3862
        %v3956 = vmax.f32 %v3954, %v3864
        %v3957 = vmax.f32 %v3955, %v3866
        %v3958 = vmax.f32 %v3956, %v3868
        %v3959 = vmax.f32 %v3957, %v3870
        %v3960 = vmax.f32 %v3958, %v3872
        %v3961 = vmax.f32 %v3959, %v3874
        %v3962 = vmax.f32 %v3960, %v3876
        %v3963 = vmax.f32 %v3961, %v3878
        %v3964 = vmax.f32 %v3962, %v3880
        %v3965 = vmax.f32 %v3963, %v3882
        %v3966 = vmax.f32 %v3964, %v3884
        %v3967 = vmax.f32 %v3965, %v3886
        %v3968 = vmax.f32 %v3966, %v3888
        %v3969 = vmax.f32 %v3967, %v3890
        %v3970 = vmax.f32 %v3968, %v3892
        %v3971 = vmax.f32 %v3969, %v3894
        %v3972 = vmax.f32 %v3970, %v3896
        %v3973 = vmax.f32 %v3971, %v3898
        %v3974 = vmax.f32 %v3972, %v3900
        %v3975 = vmax.f32 %v3973, %v3902
        %v3976 = vmax.f32 %v3974, %v3904
        %v3977 = vmax.f32 %v3975, %v3906
        %v3978 = vmax.f32 %v3976, %v3908
        %v3979 = vmax.f32 %v3977, %v3910
        %v3980 = vmax.f32 %v3978, %v3912
        %v3981 = vmax.f32 %v3979, %v3914
        %v3982 = vmax.f32 %v3980, %v3981
        %v3983 = vrot.slane %v3982, 4
        %v3984 = vmax.f32 %v3982, %v3983
        %v3985 = vrot.slane %v3984, 2
        %v3986 = vmax.f32 %v3984, %v3985
        %v3987 = vrot.slane %v3986, 1
        %v3988 = vmax.f32 %v3986, %v3987
        %s3989 = scalar_lea.vmem %s289, 17 [#allocation3]
        %v3990 = vld [vmem:[%s3989] ss:$8 sm:$0x3]
        %v3993 = vcombine.low %v3951, %v3988
        %v3995 = vunpack.c.l.s4 1966171168
        %v3996 = vunpack.c.0.s8 %v3995
        %v3997 = vlaneseq
        %v3998 = vshrl.u32 %v3997, 7
        %v3999 = vsub.s32 %v3996, %v3998
        %v4000 = vrot.slane %v3993, %v3999
        %v4002 = vunpack.c.l.s4 1966171168
        %v4003 = vunpack.c.0.s8 %v4002
        %v4004 = vlaneseq
        %v4005 = vshrl.u32 %v4004, 7
        %v4006 = vsub.s32 %v4003, %v4005
        %v4007 = vrot.slane %v4000, %v4006
        %v4009 = vmax.f32 %v3990, %v4007
        %4010 = vst.msk [vmem:[%s3989] ss:$8 sm:$0x3] %vm1408, %v4009
        %4011 = vst.msk [vmem:[%s3989] ss:$8 sm:$0x0] %vm1408, %v4009
        %4012 = vset.pattern.permute.xlu0 10
        %4013 = vperm.xlu0 %4012, %v929
        %v4014 = vpop.permute.xlu0 %4013
        %4016 = vset.pattern.permute.xlu0 10
        %4017 = vperm.xlu0 %4016, %v934
        %v4018 = vpop.permute.xlu0 %4017
        %4020 = vset.pattern.permute.xlu0 10
        %4021 = vperm.xlu0 %4020, %v939
        %v4022 = vpop.permute.xlu0 %4021
        %4024 = vset.pattern.permute.xlu0 10
        %4025 = vperm.xlu0 %4024, %v944
        %v4026 = vpop.permute.xlu0 %4025
        %4028 = vset.pattern.permute.xlu0 10
        %4029 = vperm.xlu0 %4028, %v949
        %v4030 = vpop.permute.xlu0 %4029
        %4032 = vset.pattern.permute.xlu0 10
        %4033 = vperm.xlu0 %4032, %v954
        %v4034 = vpop.permute.xlu0 %4033
        %4036 = vset.pattern.permute.xlu0 10
        %4037 = vperm.xlu0 %4036, %v959
        %v4038 = vpop.permute.xlu0 %4037
        %4040 = vset.pattern.permute.xlu0 10
        %4041 = vperm.xlu0 %4040, %v964
        %v4042 = vpop.permute.xlu0 %4041
        %4044 = vset.pattern.permute.xlu0 10
        %4045 = vperm.xlu0 %4044, %v969
        %v4046 = vpop.permute.xlu0 %4045
        %4048 = vset.pattern.permute.xlu0 10
        %4049 = vperm.xlu0 %4048, %v974
        %v4050 = vpop.permute.xlu0 %4049
        %4052 = vset.pattern.permute.xlu0 10
        %4053 = vperm.xlu0 %4052, %v979
        %v4054 = vpop.permute.xlu0 %4053
        %4056 = vset.pattern.permute.xlu0 10
        %4057 = vperm.xlu0 %4056, %v984
        %v4058 = vpop.permute.xlu0 %4057
        %4060 = vset.pattern.permute.xlu0 10
        %4061 = vperm.xlu0 %4060, %v989
        %v4062 = vpop.permute.xlu0 %4061
        %4064 = vset.pattern.permute.xlu0 10
        %4065 = vperm.xlu0 %4064, %v994
        %v4066 = vpop.permute.xlu0 %4065
        %4068 = vset.pattern.permute.xlu0 10
        %4069 = vperm.xlu0 %4068, %v999
        %v4070 = vpop.permute.xlu0 %4069
        %4072 = vset.pattern.permute.xlu0 10
        %4073 = vperm.xlu0 %4072, %v1004
        %v4074 = vpop.permute.xlu0 %4073
        %4076 = vset.pattern.permute.xlu0 10
        %4077 = vperm.xlu0 %4076, %v1009
        %v4078 = vpop.permute.xlu0 %4077
        %4080 = vset.pattern.permute.xlu0 10
        %4081 = vperm.xlu0 %4080, %v1014
        %v4082 = vpop.permute.xlu0 %4081
        %4084 = vset.pattern.permute.xlu0 10
        %4085 = vperm.xlu0 %4084, %v1019
        %v4086 = vpop.permute.xlu0 %4085
        %4088 = vset.pattern.permute.xlu0 10
        %4089 = vperm.xlu0 %4088, %v1024
        %v4090 = vpop.permute.xlu0 %4089
        %4092 = vset.pattern.permute.xlu0 10
        %4093 = vperm.xlu0 %4092, %v1029
        %v4094 = vpop.permute.xlu0 %4093
        %4096 = vset.pattern.permute.xlu0 10
        %4097 = vperm.xlu0 %4096, %v1034
        %v4098 = vpop.permute.xlu0 %4097
        %4100 = vset.pattern.permute.xlu0 10
        %4101 = vperm.xlu0 %4100, %v1039
        %v4102 = vpop.permute.xlu0 %4101
        %4104 = vset.pattern.permute.xlu0 10
        %4105 = vperm.xlu0 %4104, %v1044
        %v4106 = vpop.permute.xlu0 %4105
        %4108 = vset.pattern.permute.xlu0 10
        %4109 = vperm.xlu0 %4108, %v1049
        %v4110 = vpop.permute.xlu0 %4109
        %4112 = vset.pattern.permute.xlu0 10
        %4113 = vperm.xlu0 %4112, %v1054
        %v4114 = vpop.permute.xlu0 %4113
        %4116 = vset.pattern.permute.xlu0 10
        %4117 = vperm.xlu0 %4116, %v1059
        %v4118 = vpop.permute.xlu0 %4117
        %4120 = vset.pattern.permute.xlu0 10
        %4121 = vperm.xlu0 %4120, %v1064
        %v4122 = vpop.permute.xlu0 %4121
        %4124 = vset.pattern.permute.xlu0 10
        %4125 = vperm.xlu0 %4124, %v1069
        %v4126 = vpop.permute.xlu0 %4125
        %4128 = vset.pattern.permute.xlu0 10
        %4129 = vperm.xlu0 %4128, %v1074
        %v4130 = vpop.permute.xlu0 %4129
        %4132 = vset.pattern.permute.xlu0 10
        %4133 = vperm.xlu0 %4132, %v1079
        %v4134 = vpop.permute.xlu0 %4133
        %4136 = vset.pattern.permute.xlu0 10
        %4137 = vperm.xlu0 %4136, %v1084
        %v4138 = vpop.permute.xlu0 %4137
        %v4140 = vsel %vm453, %v4014, -inf
        %v4141 = vsel %vm454, %v4014, -inf
        %v4142 = vsel %vm455, %v4018, -inf
        %v4143 = vsel %vm456, %v4018, -inf
        %v4144 = vsel %vm457, %v4022, -inf
        %v4145 = vsel %vm458, %v4022, -inf
        %v4146 = vsel %vm459, %v4026, -inf
        %v4147 = vsel %vm460, %v4026, -inf
        %v4148 = vsel %vm461, %v4030, -inf
        %v4149 = vsel %vm462, %v4030, -inf
        %v4150 = vsel %vm463, %v4034, -inf
        %v4151 = vsel %vm464, %v4034, -inf
        %v4152 = vsel %vm465, %v4038, -inf
        %v4153 = vsel %vm466, %v4038, -inf
        %v4154 = vsel %vm467, %v4042, -inf
        %v4155 = vsel %vm468, %v4042, -inf
        %v4156 = vsel %vm469, %v4046, -inf
        %v4157 = vsel %vm470, %v4046, -inf
        %v4158 = vsel %vm471, %v4050, -inf
        %v4159 = vsel %vm472, %v4050, -inf
        %v4160 = vsel %vm473, %v4054, -inf
        %v4161 = vsel %vm474, %v4054, -inf
        %v4162 = vsel %vm475, %v4058, -inf
        %v4163 = vsel %vm476, %v4058, -inf
        %v4164 = vsel %vm477, %v4062, -inf
        %v4165 = vsel %vm478, %v4062, -inf
        %v4166 = vsel %vm479, %v4066, -inf
        %v4167 = vsel %vm480, %v4066, -inf
        %v4168 = vsel %vm481, %v4070, -inf
        %v4169 = vsel %vm482, %v4070, -inf
        %v4170 = vsel %vm483, %v4074, -inf
        %v4171 = vsel %vm484, %v4074, -inf
        %v4172 = vsel %vm485, %v4078, -inf
        %v4173 = vsel %vm486, %v4078, -inf
        %v4174 = vsel %vm487, %v4082, -inf
        %v4175 = vsel %vm488, %v4082, -inf
        %v4176 = vsel %vm489, %v4086, -inf
        %v4177 = vsel %vm490, %v4086, -inf
        %v4178 = vsel %vm491, %v4090, -inf
        %v4179 = vsel %vm492, %v4090, -inf
        %v4180 = vsel %vm493, %v4094, -inf
        %v4181 = vsel %vm494, %v4094, -inf
        %v4182 = vsel %vm495, %v4098, -inf
        %v4183 = vsel %vm496, %v4098, -inf
        %v4184 = vsel %vm497, %v4102, -inf
        %v4185 = vsel %vm498, %v4102, -inf
        %v4186 = vsel %vm499, %v4106, -inf
        %v4187 = vsel %vm500, %v4106, -inf
        %v4188 = vsel %vm501, %v4110, -inf
        %v4189 = vsel %vm502, %v4110, -inf
        %v4190 = vsel %vm503, %v4114, -inf
        %v4191 = vsel %vm504, %v4114, -inf
        %v4192 = vsel %vm505, %v4118, -inf
        %v4193 = vsel %vm506, %v4118, -inf
        %v4194 = vsel %vm507, %v4122, -inf
        %v4195 = vsel %vm508, %v4122, -inf
        %v4196 = vsel %vm509, %v4126, -inf
        %v4197 = vsel %vm510, %v4126, -inf
        %v4198 = vsel %vm511, %v4130, -inf
        %v4199 = vsel %vm512, %v4130, -inf
        %v4200 = vsel %vm513, %v4134, -inf
        %v4201 = vsel %vm514, %v4134, -inf
        %v4202 = vsel %vm515, %v4138, -inf
        %v4203 = vsel %vm516, %v4138, -inf
        %v4204 = vmax.f32 %v4140, %v4144
        %v4205 = vmax.f32 %v4142, %v4146
        %v4206 = vmax.f32 %v4204, %v4148
        %v4207 = vmax.f32 %v4205, %v4150
        %v4208 = vmax.f32 %v4206, %v4152
        %v4209 = vmax.f32 %v4207, %v4154
        %v4210 = vmax.f32 %v4208, %v4156
        %v4211 = vmax.f32 %v4209, %v4158
        %v4212 = vmax.f32 %v4210, %v4160
        %v4213 = vmax.f32 %v4211, %v4162
        %v4214 = vmax.f32 %v4212, %v4164
        %v4215 = vmax.f32 %v4213, %v4166
        %v4216 = vmax.f32 %v4214, %v4168
        %v4217 = vmax.f32 %v4215, %v4170
        %v4218 = vmax.f32 %v4216, %v4172
        %v4219 = vmax.f32 %v4217, %v4174
        %v4220 = vmax.f32 %v4218, %v4176
        %v4221 = vmax.f32 %v4219, %v4178
        %v4222 = vmax.f32 %v4220, %v4180
        %v4223 = vmax.f32 %v4221, %v4182
        %v4224 = vmax.f32 %v4222, %v4184
        %v4225 = vmax.f32 %v4223, %v4186
        %v4226 = vmax.f32 %v4224, %v4188
        %v4227 = vmax.f32 %v4225, %v4190
        %v4228 = vmax.f32 %v4226, %v4192
        %v4229 = vmax.f32 %v4227, %v4194
        %v4230 = vmax.f32 %v4228, %v4196
        %v4231 = vmax.f32 %v4229, %v4198
        %v4232 = vmax.f32 %v4230, %v4200
        %v4233 = vmax.f32 %v4231, %v4202
        %v4234 = vmax.f32 %v4232, %v4233
        %v4235 = vrot.slane %v4234, 4
        %v4236 = vmax.f32 %v4234, %v4235
        %v4237 = vrot.slane %v4236, 2
        %v4238 = vmax.f32 %v4236, %v4237
        %v4239 = vrot.slane %v4238, 1
        %v4240 = vmax.f32 %v4238, %v4239
        %v4241 = vmax.f32 %v4141, %v4145
        %v4242 = vmax.f32 %v4143, %v4147
        %v4243 = vmax.f32 %v4241, %v4149
        %v4244 = vmax.f32 %v4242, %v4151
        %v4245 = vmax.f32 %v4243, %v4153
        %v4246 = vmax.f32 %v4244, %v4155
        %v4247 = vmax.f32 %v4245, %v4157
        %v4248 = vmax.f32 %v4246, %v4159
        %v4249 = vmax.f32 %v4247, %v4161
        %v4250 = vmax.f32 %v4248, %v4163
        %v4251 = vmax.f32 %v4249, %v4165
        %v4252 = vmax.f32 %v4250, %v4167
        %v4253 = vmax.f32 %v4251, %v4169
        %v4254 = vmax.f32 %v4252, %v4171
        %v4255 = vmax.f32 %v4253, %v4173
        %v4256 = vmax.f32 %v4254, %v4175
        %v4257 = vmax.f32 %v4255, %v4177
        %v4258 = vmax.f32 %v4256, %v4179
        %v4259 = vmax.f32 %v4257, %v4181
        %v4260 = vmax.f32 %v4258, %v4183
        %v4261 = vmax.f32 %v4259, %v4185
        %v4262 = vmax.f32 %v4260, %v4187
        %v4263 = vmax.f32 %v4261, %v4189
        %v4264 = vmax.f32 %v4262, %v4191
        %v4265 = vmax.f32 %v4263, %v4193
        %v4266 = vmax.f32 %v4264, %v4195
        %v4267 = vmax.f32 %v4265, %v4197
        %v4268 = vmax.f32 %v4266, %v4199
        %v4269 = vmax.f32 %v4267, %v4201
        %v4270 = vmax.f32 %v4268, %v4203
        %v4271 = vmax.f32 %v4269, %v4270
        %v4272 = vrot.slane %v4271, 4
        %v4273 = vmax.f32 %v4271, %v4272
        %v4274 = vrot.slane %v4273, 2
        %v4275 = vmax.f32 %v4273, %v4274
        %v4276 = vrot.slane %v4275, 1
        %v4277 = vmax.f32 %v4275, %v4276
        %s4278 = scalar_lea.vmem %s289, 18 [#allocation3]
        %v4279 = vld [vmem:[%s4278] ss:$8 sm:$0x3]
        %v4282 = vcombine.low %v4240, %v4277
        %v4284 = vunpack.c.l.s4 1966171168
        %v4285 = vunpack.c.0.s8 %v4284
        %v4286 = vlaneseq
        %v4287 = vshrl.u32 %v4286, 7
        %v4288 = vsub.s32 %v4285, %v4287
        %v4289 = vrot.slane %v4282, %v4288
        %v4291 = vunpack.c.l.s4 1966171168
        %v4292 = vunpack.c.0.s8 %v4291
        %v4293 = vlaneseq
        %v4294 = vshrl.u32 %v4293, 7
        %v4295 = vsub.s32 %v4292, %v4294
        %v4296 = vrot.slane %v4289, %v4295
        %v4298 = vmax.f32 %v4279, %v4296
        %4299 = vst.msk [vmem:[%s4278] ss:$8 sm:$0x3] %vm1408, %v4298
        %4300 = vst.msk [vmem:[%s4278] ss:$8 sm:$0x0] %vm1408, %v4298
        %4301 = vset.pattern.permute.xlu0 11
        %4302 = vperm.xlu0 %4301, %v929
        %v4303 = vpop.permute.xlu0 %4302
        %4305 = vset.pattern.permute.xlu0 11
        %4306 = vperm.xlu0 %4305, %v934
        %v4307 = vpop.permute.xlu0 %4306
        %4309 = vset.pattern.permute.xlu0 11
        %4310 = vperm.xlu0 %4309, %v939
        %v4311 = vpop.permute.xlu0 %4310
        %4313 = vset.pattern.permute.xlu0 11
        %4314 = vperm.xlu0 %4313, %v944
        %v4315 = vpop.permute.xlu0 %4314
        %4317 = vset.pattern.permute.xlu0 11
        %4318 = vperm.xlu0 %4317, %v949
        %v4319 = vpop.permute.xlu0 %4318
        %4321 = vset.pattern.permute.xlu0 11
        %4322 = vperm.xlu0 %4321, %v954
        %v4323 = vpop.permute.xlu0 %4322
        %4325 = vset.pattern.permute.xlu0 11
        %4326 = vperm.xlu0 %4325, %v959
        %v4327 = vpop.permute.xlu0 %4326
        %4329 = vset.pattern.permute.xlu0 11
        %4330 = vperm.xlu0 %4329, %v964
        %v4331 = vpop.permute.xlu0 %4330
        %4333 = vset.pattern.permute.xlu0 11
        %4334 = vperm.xlu0 %4333, %v969
        %v4335 = vpop.permute.xlu0 %4334
        %4337 = vset.pattern.permute.xlu0 11
        %4338 = vperm.xlu0 %4337, %v974
        %v4339 = vpop.permute.xlu0 %4338
        %4341 = vset.pattern.permute.xlu0 11
        %4342 = vperm.xlu0 %4341, %v979
        %v4343 = vpop.permute.xlu0 %4342
        %4345 = vset.pattern.permute.xlu0 11
        %4346 = vperm.xlu0 %4345, %v984
        %v4347 = vpop.permute.xlu0 %4346
        %4349 = vset.pattern.permute.xlu0 11
        %4350 = vperm.xlu0 %4349, %v989
        %v4351 = vpop.permute.xlu0 %4350
        %4353 = vset.pattern.permute.xlu0 11
        %4354 = vperm.xlu0 %4353, %v994
        %v4355 = vpop.permute.xlu0 %4354
        %4357 = vset.pattern.permute.xlu0 11
        %4358 = vperm.xlu0 %4357, %v999
        %v4359 = vpop.permute.xlu0 %4358
        %4361 = vset.pattern.permute.xlu0 11
        %4362 = vperm.xlu0 %4361, %v1004
        %v4363 = vpop.permute.xlu0 %4362
        %4365 = vset.pattern.permute.xlu0 11
        %4366 = vperm.xlu0 %4365, %v1009
        %v4367 = vpop.permute.xlu0 %4366
        %4369 = vset.pattern.permute.xlu0 11
        %4370 = vperm.xlu0 %4369, %v1014
        %v4371 = vpop.permute.xlu0 %4370
        %4373 = vset.pattern.permute.xlu0 11
        %4374 = vperm.xlu0 %4373, %v1019
        %v4375 = vpop.permute.xlu0 %4374
        %4377 = vset.pattern.permute.xlu0 11
        %4378 = vperm.xlu0 %4377, %v1024
        %v4379 = vpop.permute.xlu0 %4378
        %4381 = vset.pattern.permute.xlu0 11
        %4382 = vperm.xlu0 %4381, %v1029
        %v4383 = vpop.permute.xlu0 %4382
        %4385 = vset.pattern.permute.xlu0 11
        %4386 = vperm.xlu0 %4385, %v1034
        %v4387 = vpop.permute.xlu0 %4386
        %4389 = vset.pattern.permute.xlu0 11
        %4390 = vperm.xlu0 %4389, %v1039
        %v4391 = vpop.permute.xlu0 %4390
        %4393 = vset.pattern.permute.xlu0 11
        %4394 = vperm.xlu0 %4393, %v1044
        %v4395 = vpop.permute.xlu0 %4394
        %4397 = vset.pattern.permute.xlu0 11
        %4398 = vperm.xlu0 %4397, %v1049
        %v4399 = vpop.permute.xlu0 %4398
        %4401 = vset.pattern.permute.xlu0 11
        %4402 = vperm.xlu0 %4401, %v1054
        %v4403 = vpop.permute.xlu0 %4402
        %4405 = vset.pattern.permute.xlu0 11
        %4406 = vperm.xlu0 %4405, %v1059
        %v4407 = vpop.permute.xlu0 %4406
        %4409 = vset.pattern.permute.xlu0 11
        %4410 = vperm.xlu0 %4409, %v1064
        %v4411 = vpop.permute.xlu0 %4410
        %4413 = vset.pattern.permute.xlu0 11
        %4414 = vperm.xlu0 %4413, %v1069
        %v4415 = vpop.permute.xlu0 %4414
        %4417 = vset.pattern.permute.xlu0 11
        %4418 = vperm.xlu0 %4417, %v1074
        %v4419 = vpop.permute.xlu0 %4418
        %4421 = vset.pattern.permute.xlu0 11
        %4422 = vperm.xlu0 %4421, %v1079
        %v4423 = vpop.permute.xlu0 %4422
        %4425 = vset.pattern.permute.xlu0 11
        %4426 = vperm.xlu0 %4425, %v1084
        %v4427 = vpop.permute.xlu0 %4426
        %v4429 = vsel %vm453, %v4303, -inf
        %v4430 = vsel %vm454, %v4303, -inf
        %v4431 = vsel %vm455, %v4307, -inf
        %v4432 = vsel %vm456, %v4307, -inf
        %v4433 = vsel %vm457, %v4311, -inf
        %v4434 = vsel %vm458, %v4311, -inf
        %v4435 = vsel %vm459, %v4315, -inf
        %v4436 = vsel %vm460, %v4315, -inf
        %v4437 = vsel %vm461, %v4319, -inf
        %v4438 = vsel %vm462, %v4319, -inf
        %v4439 = vsel %vm463, %v4323, -inf
        %v4440 = vsel %vm464, %v4323, -inf
        %v4441 = vsel %vm465, %v4327, -inf
        %v4442 = vsel %vm466, %v4327, -inf
        %v4443 = vsel %vm467, %v4331, -inf
        %v4444 = vsel %vm468, %v4331, -inf
        %v4445 = vsel %vm469, %v4335, -inf
        %v4446 = vsel %vm470, %v4335, -inf
        %v4447 = vsel %vm471, %v4339, -inf
        %v4448 = vsel %vm472, %v4339, -inf
        %v4449 = vsel %vm473, %v4343, -inf
        %v4450 = vsel %vm474, %v4343, -inf
        %v4451 = vsel %vm475, %v4347, -inf
        %v4452 = vsel %vm476, %v4347, -inf
        %v4453 = vsel %vm477, %v4351, -inf
        %v4454 = vsel %vm478, %v4351, -inf
        %v4455 = vsel %vm479, %v4355, -inf
        %v4456 = vsel %vm480, %v4355, -inf
        %v4457 = vsel %vm481, %v4359, -inf
        %v4458 = vsel %vm482, %v4359, -inf
        %v4459 = vsel %vm483, %v4363, -inf
        %v4460 = vsel %vm484, %v4363, -inf
        %v4461 = vsel %vm485, %v4367, -inf
        %v4462 = vsel %vm486, %v4367, -inf
        %v4463 = vsel %vm487, %v4371, -inf
        %v4464 = vsel %vm488, %v4371, -inf
        %v4465 = vsel %vm489, %v4375, -inf
        %v4466 = vsel %vm490, %v4375, -inf
        %v4467 = vsel %vm491, %v4379, -inf
        %v4468 = vsel %vm492, %v4379, -inf
        %v4469 = vsel %vm493, %v4383, -inf
        %v4470 = vsel %vm494, %v4383, -inf
        %v4471 = vsel %vm495, %v4387, -inf
        %v4472 = vsel %vm496, %v4387, -inf
        %v4473 = vsel %vm497, %v4391, -inf
        %v4474 = vsel %vm498, %v4391, -inf
        %v4475 = vsel %vm499, %v4395, -inf
        %v4476 = vsel %vm500, %v4395, -inf
        %v4477 = vsel %vm501, %v4399, -inf
        %v4478 = vsel %vm502, %v4399, -inf
        %v4479 = vsel %vm503, %v4403, -inf
        %v4480 = vsel %vm504, %v4403, -inf
        %v4481 = vsel %vm505, %v4407, -inf
        %v4482 = vsel %vm506, %v4407, -inf
        %v4483 = vsel %vm507, %v4411, -inf
        %v4484 = vsel %vm508, %v4411, -inf
        %v4485 = vsel %vm509, %v4415, -inf
        %v4486 = vsel %vm510, %v4415, -inf
        %v4487 = vsel %vm511, %v4419, -inf
        %v4488 = vsel %vm512, %v4419, -inf
        %v4489 = vsel %vm513, %v4423, -inf
        %v4490 = vsel %vm514, %v4423, -inf
        %v4491 = vsel %vm515, %v4427, -inf
        %v4492 = vsel %vm516, %v4427, -inf
        %v4493 = vmax.f32 %v4429, %v4433
        %v4494 = vmax.f32 %v4431, %v4435
        %v4495 = vmax.f32 %v4493, %v4437
        %v4496 = vmax.f32 %v4494, %v4439
        %v4497 = vmax.f32 %v4495, %v4441
        %v4498 = vmax.f32 %v4496, %v4443
        %v4499 = vmax.f32 %v4497, %v4445
        %v4500 = vmax.f32 %v4498, %v4447
        %v4501 = vmax.f32 %v4499, %v4449
        %v4502 = vmax.f32 %v4500, %v4451
        %v4503 = vmax.f32 %v4501, %v4453
        %v4504 = vmax.f32 %v4502, %v4455
        %v4505 = vmax.f32 %v4503, %v4457
        %v4506 = vmax.f32 %v4504, %v4459
        %v4507 = vmax.f32 %v4505, %v4461
        %v4508 = vmax.f32 %v4506, %v4463
        %v4509 = vmax.f32 %v4507, %v4465
        %v4510 = vmax.f32 %v4508, %v4467
        %v4511 = vmax.f32 %v4509, %v4469
        %v4512 = vmax.f32 %v4510, %v4471
        %v4513 = vmax.f32 %v4511, %v4473
        %v4514 = vmax.f32 %v4512, %v4475
        %v4515 = vmax.f32 %v4513, %v4477
        %v4516 = vmax.f32 %v4514, %v4479
        %v4517 = vmax.f32 %v4515, %v4481
        %v4518 = vmax.f32 %v4516, %v4483
        %v4519 = vmax.f32 %v4517, %v4485
        %v4520 = vmax.f32 %v4518, %v4487
        %v4521 = vmax.f32 %v4519, %v4489
        %v4522 = vmax.f32 %v4520, %v4491
        %v4523 = vmax.f32 %v4521, %v4522
        %v4524 = vrot.slane %v4523, 4
        %v4525 = vmax.f32 %v4523, %v4524
        %v4526 = vrot.slane %v4525, 2
        %v4527 = vmax.f32 %v4525, %v4526
        %v4528 = vrot.slane %v4527, 1
        %v4529 = vmax.f32 %v4527, %v4528
        %v4530 = vmax.f32 %v4430, %v4434
        %v4531 = vmax.f32 %v4432, %v4436
        %v4532 = vmax.f32 %v4530, %v4438
        %v4533 = vmax.f32 %v4531, %v4440
        %v4534 = vmax.f32 %v4532, %v4442
        %v4535 = vmax.f32 %v4533, %v4444
        %v4536 = vmax.f32 %v4534, %v4446
        %v4537 = vmax.f32 %v4535, %v4448
        %v4538 = vmax.f32 %v4536, %v4450
        %v4539 = vmax.f32 %v4537, %v4452
        %v4540 = vmax.f32 %v4538, %v4454
        %v4541 = vmax.f32 %v4539, %v4456
        %v4542 = vmax.f32 %v4540, %v4458
        %v4543 = vmax.f32 %v4541, %v4460
        %v4544 = vmax.f32 %v4542, %v4462
        %v4545 = vmax.f32 %v4543, %v4464
        %v4546 = vmax.f32 %v4544, %v4466
        %v4547 = vmax.f32 %v4545, %v4468
        %v4548 = vmax.f32 %v4546, %v4470
        %v4549 = vmax.f32 %v4547, %v4472
        %v4550 = vmax.f32 %v4548, %v4474
        %v4551 = vmax.f32 %v4549, %v4476
        %v4552 = vmax.f32 %v4550, %v4478
        %v4553 = vmax.f32 %v4551, %v4480
        %v4554 = vmax.f32 %v4552, %v4482
        %v4555 = vmax.f32 %v4553, %v4484
        %v4556 = vmax.f32 %v4554, %v4486
        %v4557 = vmax.f32 %v4555, %v4488
        %v4558 = vmax.f32 %v4556, %v4490
        %v4559 = vmax.f32 %v4557, %v4492
        %v4560 = vmax.f32 %v4558, %v4559
        %v4561 = vrot.slane %v4560, 4
        %v4562 = vmax.f32 %v4560, %v4561
        %v4563 = vrot.slane %v4562, 2
        %v4564 = vmax.f32 %v4562, %v4563
        %v4565 = vrot.slane %v4564, 1
        %v4566 = vmax.f32 %v4564, %v4565
        %s4567 = scalar_lea.vmem %s289, 19 [#allocation3]
        %v4568 = vld [vmem:[%s4567] ss:$8 sm:$0x3]
        %v4571 = vcombine.low %v4529, %v4566
        %v4573 = vunpack.c.l.s4 1966171168
        %v4574 = vunpack.c.0.s8 %v4573
        %v4575 = vlaneseq
        %v4576 = vshrl.u32 %v4575, 7
        %v4577 = vsub.s32 %v4574, %v4576
        %v4578 = vrot.slane %v4571, %v4577
        %v4580 = vunpack.c.l.s4 1966171168
        %v4581 = vunpack.c.0.s8 %v4580
        %v4582 = vlaneseq
        %v4583 = vshrl.u32 %v4582, 7
        %v4584 = vsub.s32 %v4581, %v4583
        %v4585 = vrot.slane %v4578, %v4584
        %v4587 = vmax.f32 %v4568, %v4585
        %4588 = vst.msk [vmem:[%s4567] ss:$8 sm:$0x3] %vm1408, %v4587
        %4589 = vst.msk [vmem:[%s4567] ss:$8 sm:$0x0] %vm1408, %v4587
        %4590 = vset.pattern.permute.xlu0 12
        %4591 = vperm.xlu0 %4590, %v929
        %v4592 = vpop.permute.xlu0 %4591
        %4594 = vset.pattern.permute.xlu0 12
        %4595 = vperm.xlu0 %4594, %v934
        %v4596 = vpop.permute.xlu0 %4595
        %4598 = vset.pattern.permute.xlu0 12
        %4599 = vperm.xlu0 %4598, %v939
        %v4600 = vpop.permute.xlu0 %4599
        %4602 = vset.pattern.permute.xlu0 12
        %4603 = vperm.xlu0 %4602, %v944
        %v4604 = vpop.permute.xlu0 %4603
        %4606 = vset.pattern.permute.xlu0 12
        %4607 = vperm.xlu0 %4606, %v949
        %v4608 = vpop.permute.xlu0 %4607
        %4610 = vset.pattern.permute.xlu0 12
        %4611 = vperm.xlu0 %4610, %v954
        %v4612 = vpop.permute.xlu0 %4611
        %4614 = vset.pattern.permute.xlu0 12
        %4615 = vperm.xlu0 %4614, %v959
        %v4616 = vpop.permute.xlu0 %4615
        %4618 = vset.pattern.permute.xlu0 12
        %4619 = vperm.xlu0 %4618, %v964
        %v4620 = vpop.permute.xlu0 %4619
        %4622 = vset.pattern.permute.xlu0 12
        %4623 = vperm.xlu0 %4622, %v969
        %v4624 = vpop.permute.xlu0 %4623
        %4626 = vset.pattern.permute.xlu0 12
        %4627 = vperm.xlu0 %4626, %v974
        %v4628 = vpop.permute.xlu0 %4627
        %4630 = vset.pattern.permute.xlu0 12
        %4631 = vperm.xlu0 %4630, %v979
        %v4632 = vpop.permute.xlu0 %4631
        %4634 = vset.pattern.permute.xlu0 12
        %4635 = vperm.xlu0 %4634, %v984
        %v4636 = vpop.permute.xlu0 %4635
        %4638 = vset.pattern.permute.xlu0 12
        %4639 = vperm.xlu0 %4638, %v989
        %v4640 = vpop.permute.xlu0 %4639
        %4642 = vset.pattern.permute.xlu0 12
        %4643 = vperm.xlu0 %4642, %v994
        %v4644 = vpop.permute.xlu0 %4643
        %4646 = vset.pattern.permute.xlu0 12
        %4647 = vperm.xlu0 %4646, %v999
        %v4648 = vpop.permute.xlu0 %4647
        %4650 = vset.pattern.permute.xlu0 12
        %4651 = vperm.xlu0 %4650, %v1004
        %v4652 = vpop.permute.xlu0 %4651
        %4654 = vset.pattern.permute.xlu0 12
        %4655 = vperm.xlu0 %4654, %v1009
        %v4656 = vpop.permute.xlu0 %4655
        %4658 = vset.pattern.permute.xlu0 12
        %4659 = vperm.xlu0 %4658, %v1014
        %v4660 = vpop.permute.xlu0 %4659
        %4662 = vset.pattern.permute.xlu0 12
        %4663 = vperm.xlu0 %4662, %v1019
        %v4664 = vpop.permute.xlu0 %4663
        %4666 = vset.pattern.permute.xlu0 12
        %4667 = vperm.xlu0 %4666, %v1024
        %v4668 = vpop.permute.xlu0 %4667
        %4670 = vset.pattern.permute.xlu0 12
        %4671 = vperm.xlu0 %4670, %v1029
        %v4672 = vpop.permute.xlu0 %4671
        %4674 = vset.pattern.permute.xlu0 12
        %4675 = vperm.xlu0 %4674, %v1034
        %v4676 = vpop.permute.xlu0 %4675
        %4678 = vset.pattern.permute.xlu0 12
        %4679 = vperm.xlu0 %4678, %v1039
        %v4680 = vpop.permute.xlu0 %4679
        %4682 = vset.pattern.permute.xlu0 12
        %4683 = vperm.xlu0 %4682, %v1044
        %v4684 = vpop.permute.xlu0 %4683
        %4686 = vset.pattern.permute.xlu0 12
        %4687 = vperm.xlu0 %4686, %v1049
        %v4688 = vpop.permute.xlu0 %4687
        %4690 = vset.pattern.permute.xlu0 12
        %4691 = vperm.xlu0 %4690, %v1054
        %v4692 = vpop.permute.xlu0 %4691
        %4694 = vset.pattern.permute.xlu0 12
        %4695 = vperm.xlu0 %4694, %v1059
        %v4696 = vpop.permute.xlu0 %4695
        %4698 = vset.pattern.permute.xlu0 12
        %4699 = vperm.xlu0 %4698, %v1064
        %v4700 = vpop.permute.xlu0 %4699
        %4702 = vset.pattern.permute.xlu0 12
        %4703 = vperm.xlu0 %4702, %v1069
        %v4704 = vpop.permute.xlu0 %4703
        %4706 = vset.pattern.permute.xlu0 12
        %4707 = vperm.xlu0 %4706, %v1074
        %v4708 = vpop.permute.xlu0 %4707
        %4710 = vset.pattern.permute.xlu0 12
        %4711 = vperm.xlu0 %4710, %v1079
        %v4712 = vpop.permute.xlu0 %4711
        %4714 = vset.pattern.permute.xlu0 12
        %4715 = vperm.xlu0 %4714, %v1084
        %v4716 = vpop.permute.xlu0 %4715
        %v4718 = vsel %vm453, %v4592, -inf
        %v4719 = vsel %vm454, %v4592, -inf
        %v4720 = vsel %vm455, %v4596, -inf
        %v4721 = vsel %vm456, %v4596, -inf
        %v4722 = vsel %vm457, %v4600, -inf
        %v4723 = vsel %vm458, %v4600, -inf
        %v4724 = vsel %vm459, %v4604, -inf
        %v4725 = vsel %vm460, %v4604, -inf
        %v4726 = vsel %vm461, %v4608, -inf
        %v4727 = vsel %vm462, %v4608, -inf
        %v4728 = vsel %vm463, %v4612, -inf
        %v4729 = vsel %vm464, %v4612, -inf
        %v4730 = vsel %vm465, %v4616, -inf
        %v4731 = vsel %vm466, %v4616, -inf
        %v4732 = vsel %vm467, %v4620, -inf
        %v4733 = vsel %vm468, %v4620, -inf
        %v4734 = vsel %vm469, %v4624, -inf
        %v4735 = vsel %vm470, %v4624, -inf
        %v4736 = vsel %vm471, %v4628, -inf
        %v4737 = vsel %vm472, %v4628, -inf
        %v4738 = vsel %vm473, %v4632, -inf
        %v4739 = vsel %vm474, %v4632, -inf
        %v4740 = vsel %vm475, %v4636, -inf
        %v4741 = vsel %vm476, %v4636, -inf
        %v4742 = vsel %vm477, %v4640, -inf
        %v4743 = vsel %vm478, %v4640, -inf
        %v4744 = vsel %vm479, %v4644, -inf
        %v4745 = vsel %vm480, %v4644, -inf
        %v4746 = vsel %vm481, %v4648, -inf
        %v4747 = vsel %vm482, %v4648, -inf
        %v4748 = vsel %vm483, %v4652, -inf
        %v4749 = vsel %vm484, %v4652, -inf
        %v4750 = vsel %vm485, %v4656, -inf
        %v4751 = vsel %vm486, %v4656, -inf
        %v4752 = vsel %vm487, %v4660, -inf
        %v4753 = vsel %vm488, %v4660, -inf
        %v4754 = vsel %vm489, %v4664, -inf
        %v4755 = vsel %vm490, %v4664, -inf
        %v4756 = vsel %vm491, %v4668, -inf
        %v4757 = vsel %vm492, %v4668, -inf
        %v4758 = vsel %vm493, %v4672, -inf
        %v4759 = vsel %vm494, %v4672, -inf
        %v4760 = vsel %vm495, %v4676, -inf
        %v4761 = vsel %vm496, %v4676, -inf
        %v4762 = vsel %vm497, %v4680, -inf
        %v4763 = vsel %vm498, %v4680, -inf
        %v4764 = vsel %vm499, %v4684, -inf
        %v4765 = vsel %vm500, %v4684, -inf
        %v4766 = vsel %vm501, %v4688, -inf
        %v4767 = vsel %vm502, %v4688, -inf
        %v4768 = vsel %vm503, %v4692, -inf
        %v4769 = vsel %vm504, %v4692, -inf
        %v4770 = vsel %vm505, %v4696, -inf
        %v4771 = vsel %vm506, %v4696, -inf
        %v4772 = vsel %vm507, %v4700, -inf
        %v4773 = vsel %vm508, %v4700, -inf
        %v4774 = vsel %vm509, %v4704, -inf
        %v4775 = vsel %vm510, %v4704, -inf
        %v4776 = vsel %vm511, %v4708, -inf
        %v4777 = vsel %vm512, %v4708, -inf
        %v4778 = vsel %vm513, %v4712, -inf
        %v4779 = vsel %vm514, %v4712, -inf
        %v4780 = vsel %vm515, %v4716, -inf
        %v4781 = vsel %vm516, %v4716, -inf
        %v4782 = vmax.f32 %v4718, %v4722
        %v4783 = vmax.f32 %v4720, %v4724
        %v4784 = vmax.f32 %v4782, %v4726
        %v4785 = vmax.f32 %v4783, %v4728
        %v4786 = vmax.f32 %v4784, %v4730
        %v4787 = vmax.f32 %v4785, %v4732
        %v4788 = vmax.f32 %v4786, %v4734
        %v4789 = vmax.f32 %v4787, %v4736
        %v4790 = vmax.f32 %v4788, %v4738
        %v4791 = vmax.f32 %v4789, %v4740
        %v4792 = vmax.f32 %v4790, %v4742
        %v4793 = vmax.f32 %v4791, %v4744
        %v4794 = vmax.f32 %v4792, %v4746
        %v4795 = vmax.f32 %v4793, %v4748
        %v4796 = vmax.f32 %v4794, %v4750
        %v4797 = vmax.f32 %v4795, %v4752
        %v4798 = vmax.f32 %v4796, %v4754
        %v4799 = vmax.f32 %v4797, %v4756
        %v4800 = vmax.f32 %v4798, %v4758
        %v4801 = vmax.f32 %v4799, %v4760
        %v4802 = vmax.f32 %v4800, %v4762
        %v4803 = vmax.f32 %v4801, %v4764
        %v4804 = vmax.f32 %v4802, %v4766
        %v4805 = vmax.f32 %v4803, %v4768
        %v4806 = vmax.f32 %v4804, %v4770
        %v4807 = vmax.f32 %v4805, %v4772
        %v4808 = vmax.f32 %v4806, %v4774
        %v4809 = vmax.f32 %v4807, %v4776
        %v4810 = vmax.f32 %v4808, %v4778
        %v4811 = vmax.f32 %v4809, %v4780
        %v4812 = vmax.f32 %v4810, %v4811
        %v4813 = vrot.slane %v4812, 4
        %v4814 = vmax.f32 %v4812, %v4813
        %v4815 = vrot.slane %v4814, 2
        %v4816 = vmax.f32 %v4814, %v4815
        %v4817 = vrot.slane %v4816, 1
        %v4818 = vmax.f32 %v4816, %v4817
        %v4819 = vmax.f32 %v4719, %v4723
        %v4820 = vmax.f32 %v4721, %v4725
        %v4821 = vmax.f32 %v4819, %v4727
        %v4822 = vmax.f32 %v4820, %v4729
        %v4823 = vmax.f32 %v4821, %v4731
        %v4824 = vmax.f32 %v4822, %v4733
        %v4825 = vmax.f32 %v4823, %v4735
        %v4826 = vmax.f32 %v4824, %v4737
        %v4827 = vmax.f32 %v4825, %v4739
        %v4828 = vmax.f32 %v4826, %v4741
        %v4829 = vmax.f32 %v4827, %v4743
        %v4830 = vmax.f32 %v4828, %v4745
        %v4831 = vmax.f32 %v4829, %v4747
        %v4832 = vmax.f32 %v4830, %v4749
        %v4833 = vmax.f32 %v4831, %v4751
        %v4834 = vmax.f32 %v4832, %v4753
        %v4835 = vmax.f32 %v4833, %v4755
        %v4836 = vmax.f32 %v4834, %v4757
        %v4837 = vmax.f32 %v4835, %v4759
        %v4838 = vmax.f32 %v4836, %v4761
        %v4839 = vmax.f32 %v4837, %v4763
        %v4840 = vmax.f32 %v4838, %v4765
        %v4841 = vmax.f32 %v4839, %v4767
        %v4842 = vmax.f32 %v4840, %v4769
        %v4843 = vmax.f32 %v4841, %v4771
        %v4844 = vmax.f32 %v4842, %v4773
        %v4845 = vmax.f32 %v4843, %v4775
        %v4846 = vmax.f32 %v4844, %v4777
        %v4847 = vmax.f32 %v4845, %v4779
        %v4848 = vmax.f32 %v4846, %v4781
        %v4849 = vmax.f32 %v4847, %v4848
        %v4850 = vrot.slane %v4849, 4
        %v4851 = vmax.f32 %v4849, %v4850
        %v4852 = vrot.slane %v4851, 2
        %v4853 = vmax.f32 %v4851, %v4852
        %v4854 = vrot.slane %v4853, 1
        %v4855 = vmax.f32 %v4853, %v4854
        %s4856 = scalar_lea.vmem %s289, 20 [#allocation3]
        %v4857 = vld [vmem:[%s4856] ss:$8 sm:$0x3]
        %v4860 = vcombine.low %v4818, %v4855
        %v4862 = vunpack.c.l.s4 1966171168
        %v4863 = vunpack.c.0.s8 %v4862
        %v4864 = vlaneseq
        %v4865 = vshrl.u32 %v4864, 7
        %v4866 = vsub.s32 %v4863, %v4865
        %v4867 = vrot.slane %v4860, %v4866
        %v4869 = vunpack.c.l.s4 1966171168
        %v4870 = vunpack.c.0.s8 %v4869
        %v4871 = vlaneseq
        %v4872 = vshrl.u32 %v4871, 7
        %v4873 = vsub.s32 %v4870, %v4872
        %v4874 = vrot.slane %v4867, %v4873
        %v4876 = vmax.f32 %v4857, %v4874
        %4877 = vst.msk [vmem:[%s4856] ss:$8 sm:$0x3] %vm1408, %v4876
        %4878 = vst.msk [vmem:[%s4856] ss:$8 sm:$0x0] %vm1408, %v4876
        %4879 = vset.pattern.permute.xlu0 13
        %4880 = vperm.xlu0 %4879, %v929
        %v4881 = vpop.permute.xlu0 %4880
        %4883 = vset.pattern.permute.xlu0 13
        %4884 = vperm.xlu0 %4883, %v934
        %v4885 = vpop.permute.xlu0 %4884
        %4887 = vset.pattern.permute.xlu0 13
        %4888 = vperm.xlu0 %4887, %v939
        %v4889 = vpop.permute.xlu0 %4888
        %4891 = vset.pattern.permute.xlu0 13
        %4892 = vperm.xlu0 %4891, %v944
        %v4893 = vpop.permute.xlu0 %4892
        %4895 = vset.pattern.permute.xlu0 13
        %4896 = vperm.xlu0 %4895, %v949
        %v4897 = vpop.permute.xlu0 %4896
        %4899 = vset.pattern.permute.xlu0 13
        %4900 = vperm.xlu0 %4899, %v954
        %v4901 = vpop.permute.xlu0 %4900
        %4903 = vset.pattern.permute.xlu0 13
        %4904 = vperm.xlu0 %4903, %v959
        %v4905 = vpop.permute.xlu0 %4904
        %4907 = vset.pattern.permute.xlu0 13
        %4908 = vperm.xlu0 %4907, %v964
        %v4909 = vpop.permute.xlu0 %4908
        %4911 = vset.pattern.permute.xlu0 13
        %4912 = vperm.xlu0 %4911, %v969
        %v4913 = vpop.permute.xlu0 %4912
        %4915 = vset.pattern.permute.xlu0 13
        %4916 = vperm.xlu0 %4915, %v974
        %v4917 = vpop.permute.xlu0 %4916
        %4919 = vset.pattern.permute.xlu0 13
        %4920 = vperm.xlu0 %4919, %v979
        %v4921 = vpop.permute.xlu0 %4920
        %4923 = vset.pattern.permute.xlu0 13
        %4924 = vperm.xlu0 %4923, %v984
        %v4925 = vpop.permute.xlu0 %4924
        %4927 = vset.pattern.permute.xlu0 13
        %4928 = vperm.xlu0 %4927, %v989
        %v4929 = vpop.permute.xlu0 %4928
        %4931 = vset.pattern.permute.xlu0 13
        %4932 = vperm.xlu0 %4931, %v994
        %v4933 = vpop.permute.xlu0 %4932
        %4935 = vset.pattern.permute.xlu0 13
        %4936 = vperm.xlu0 %4935, %v999
        %v4937 = vpop.permute.xlu0 %4936
        %4939 = vset.pattern.permute.xlu0 13
        %4940 = vperm.xlu0 %4939, %v1004
        %v4941 = vpop.permute.xlu0 %4940
        %4943 = vset.pattern.permute.xlu0 13
        %4944 = vperm.xlu0 %4943, %v1009
        %v4945 = vpop.permute.xlu0 %4944
        %4947 = vset.pattern.permute.xlu0 13
        %4948 = vperm.xlu0 %4947, %v1014
        %v4949 = vpop.permute.xlu0 %4948
        %4951 = vset.pattern.permute.xlu0 13
        %4952 = vperm.xlu0 %4951, %v1019
        %v4953 = vpop.permute.xlu0 %4952
        %4955 = vset.pattern.permute.xlu0 13
        %4956 = vperm.xlu0 %4955, %v1024
        %v4957 = vpop.permute.xlu0 %4956
        %4959 = vset.pattern.permute.xlu0 13
        %4960 = vperm.xlu0 %4959, %v1029
        %v4961 = vpop.permute.xlu0 %4960
        %4963 = vset.pattern.permute.xlu0 13
        %4964 = vperm.xlu0 %4963, %v1034
        %v4965 = vpop.permute.xlu0 %4964
        %4967 = vset.pattern.permute.xlu0 13
        %4968 = vperm.xlu0 %4967, %v1039
        %v4969 = vpop.permute.xlu0 %4968
        %4971 = vset.pattern.permute.xlu0 13
        %4972 = vperm.xlu0 %4971, %v1044
        %v4973 = vpop.permute.xlu0 %4972
        %4975 = vset.pattern.permute.xlu0 13
        %4976 = vperm.xlu0 %4975, %v1049
        %v4977 = vpop.permute.xlu0 %4976
        %4979 = vset.pattern.permute.xlu0 13
        %4980 = vperm.xlu0 %4979, %v1054
        %v4981 = vpop.permute.xlu0 %4980
        %4983 = vset.pattern.permute.xlu0 13
        %4984 = vperm.xlu0 %4983, %v1059
        %v4985 = vpop.permute.xlu0 %4984
        %4987 = vset.pattern.permute.xlu0 13
        %4988 = vperm.xlu0 %4987, %v1064
        %v4989 = vpop.permute.xlu0 %4988
        %4991 = vset.pattern.permute.xlu0 13
        %4992 = vperm.xlu0 %4991, %v1069
        %v4993 = vpop.permute.xlu0 %4992
        %4995 = vset.pattern.permute.xlu0 13
        %4996 = vperm.xlu0 %4995, %v1074
        %v4997 = vpop.permute.xlu0 %4996
        %4999 = vset.pattern.permute.xlu0 13
        %5000 = vperm.xlu0 %4999, %v1079
        %v5001 = vpop.permute.xlu0 %5000
        %5003 = vset.pattern.permute.xlu0 13
        %5004 = vperm.xlu0 %5003, %v1084
        %v5005 = vpop.permute.xlu0 %5004
        %v5007 = vsel %vm453, %v4881, -inf
        %v5008 = vsel %vm454, %v4881, -inf
        %v5009 = vsel %vm455, %v4885, -inf
        %v5010 = vsel %vm456, %v4885, -inf
        %v5011 = vsel %vm457, %v4889, -inf
        %v5012 = vsel %vm458, %v4889, -inf
        %v5013 = vsel %vm459, %v4893, -inf
        %v5014 = vsel %vm460, %v4893, -inf
        %v5015 = vsel %vm461, %v4897, -inf
        %v5016 = vsel %vm462, %v4897, -inf
        %v5017 = vsel %vm463, %v4901, -inf
        %v5018 = vsel %vm464, %v4901, -inf
        %v5019 = vsel %vm465, %v4905, -inf
        %v5020 = vsel %vm466, %v4905, -inf
        %v5021 = vsel %vm467, %v4909, -inf
        %v5022 = vsel %vm468, %v4909, -inf
        %v5023 = vsel %vm469, %v4913, -inf
        %v5024 = vsel %vm470, %v4913, -inf
        %v5025 = vsel %vm471, %v4917, -inf
        %v5026 = vsel %vm472, %v4917, -inf
        %v5027 = vsel %vm473, %v4921, -inf
        %v5028 = vsel %vm474, %v4921, -inf
        %v5029 = vsel %vm475, %v4925, -inf
        %v5030 = vsel %vm476, %v4925, -inf
        %v5031 = vsel %vm477, %v4929, -inf
        %v5032 = vsel %vm478, %v4929, -inf
        %v5033 = vsel %vm479, %v4933, -inf
        %v5034 = vsel %vm480, %v4933, -inf
        %v5035 = vsel %vm481, %v4937, -inf
        %v5036 = vsel %vm482, %v4937, -inf
        %v5037 = vsel %vm483, %v4941, -inf
        %v5038 = vsel %vm484, %v4941, -inf
        %v5039 = vsel %vm485, %v4945, -inf
        %v5040 = vsel %vm486, %v4945, -inf
        %v5041 = vsel %vm487, %v4949, -inf
        %v5042 = vsel %vm488, %v4949, -inf
        %v5043 = vsel %vm489, %v4953, -inf
        %v5044 = vsel %vm490, %v4953, -inf
        %v5045 = vsel %vm491, %v4957, -inf
        %v5046 = vsel %vm492, %v4957, -inf
        %v5047 = vsel %vm493, %v4961, -inf
        %v5048 = vsel %vm494, %v4961, -inf
        %v5049 = vsel %vm495, %v4965, -inf
        %v5050 = vsel %vm496, %v4965, -inf
        %v5051 = vsel %vm497, %v4969, -inf
        %v5052 = vsel %vm498, %v4969, -inf
        %v5053 = vsel %vm499, %v4973, -inf
        %v5054 = vsel %vm500, %v4973, -inf
        %v5055 = vsel %vm501, %v4977, -inf
        %v5056 = vsel %vm502, %v4977, -inf
        %v5057 = vsel %vm503, %v4981, -inf
        %v5058 = vsel %vm504, %v4981, -inf
        %v5059 = vsel %vm505, %v4985, -inf
        %v5060 = vsel %vm506, %v4985, -inf
        %v5061 = vsel %vm507, %v4989, -inf
        %v5062 = vsel %vm508, %v4989, -inf
        %v5063 = vsel %vm509, %v4993, -inf
        %v5064 = vsel %vm510, %v4993, -inf
        %v5065 = vsel %vm511, %v4997, -inf
        %v5066 = vsel %vm512, %v4997, -inf
        %v5067 = vsel %vm513, %v5001, -inf
        %v5068 = vsel %vm514, %v5001, -inf
        %v5069 = vsel %vm515, %v5005, -inf
        %v5070 = vsel %vm516, %v5005, -inf
        %v5071 = vmax.f32 %v5007, %v5011
        %v5072 = vmax.f32 %v5009, %v5013
        %v5073 = vmax.f32 %v5071, %v5015
        %v5074 = vmax.f32 %v5072, %v5017
        %v5075 = vmax.f32 %v5073, %v5019
        %v5076 = vmax.f32 %v5074, %v5021
        %v5077 = vmax.f32 %v5075, %v5023
        %v5078 = vmax.f32 %v5076, %v5025
        %v5079 = vmax.f32 %v5077, %v5027
        %v5080 = vmax.f32 %v5078, %v5029
        %v5081 = vmax.f32 %v5079, %v5031
        %v5082 = vmax.f32 %v5080, %v5033
        %v5083 = vmax.f32 %v5081, %v5035
        %v5084 = vmax.f32 %v5082, %v5037
        %v5085 = vmax.f32 %v5083, %v5039
        %v5086 = vmax.f32 %v5084, %v5041
        %v5087 = vmax.f32 %v5085, %v5043
        %v5088 = vmax.f32 %v5086, %v5045
        %v5089 = vmax.f32 %v5087, %v5047
        %v5090 = vmax.f32 %v5088, %v5049
        %v5091 = vmax.f32 %v5089, %v5051
        %v5092 = vmax.f32 %v5090, %v5053
        %v5093 = vmax.f32 %v5091, %v5055
        %v5094 = vmax.f32 %v5092, %v5057
        %v5095 = vmax.f32 %v5093, %v5059
        %v5096 = vmax.f32 %v5094, %v5061
        %v5097 = vmax.f32 %v5095, %v5063
        %v5098 = vmax.f32 %v5096, %v5065
        %v5099 = vmax.f32 %v5097, %v5067
        %v5100 = vmax.f32 %v5098, %v5069
        %v5101 = vmax.f32 %v5099, %v5100
        %v5102 = vrot.slane %v5101, 4
        %v5103 = vmax.f32 %v5101, %v5102
        %v5104 = vrot.slane %v5103, 2
        %v5105 = vmax.f32 %v5103, %v5104
        %v5106 = vrot.slane %v5105, 1
        %v5107 = vmax.f32 %v5105, %v5106
        %v5108 = vmax.f32 %v5008, %v5012
        %v5109 = vmax.f32 %v5010, %v5014
        %v5110 = vmax.f32 %v5108, %v5016
        %v5111 = vmax.f32 %v5109, %v5018
        %v5112 = vmax.f32 %v5110, %v5020
        %v5113 = vmax.f32 %v5111, %v5022
        %v5114 = vmax.f32 %v5112, %v5024
        %v5115 = vmax.f32 %v5113, %v5026
        %v5116 = vmax.f32 %v5114, %v5028
        %v5117 = vmax.f32 %v5115, %v5030
        %v5118 = vmax.f32 %v5116, %v5032
        %v5119 = vmax.f32 %v5117, %v5034
        %v5120 = vmax.f32 %v5118, %v5036
        %v5121 = vmax.f32 %v5119, %v5038
        %v5122 = vmax.f32 %v5120, %v5040
        %v5123 = vmax.f32 %v5121, %v5042
        %v5124 = vmax.f32 %v5122, %v5044
        %v5125 = vmax.f32 %v5123, %v5046
        %v5126 = vmax.f32 %v5124, %v5048
        %v5127 = vmax.f32 %v5125, %v5050
        %v5128 = vmax.f32 %v5126, %v5052
        %v5129 = vmax.f32 %v5127, %v5054
        %v5130 = vmax.f32 %v5128, %v5056
        %v5131 = vmax.f32 %v5129, %v5058
        %v5132 = vmax.f32 %v5130, %v5060
        %v5133 = vmax.f32 %v5131, %v5062
        %v5134 = vmax.f32 %v5132, %v5064
        %v5135 = vmax.f32 %v5133, %v5066
        %v5136 = vmax.f32 %v5134, %v5068
        %v5137 = vmax.f32 %v5135, %v5070
        %v5138 = vmax.f32 %v5136, %v5137
        %v5139 = vrot.slane %v5138, 4
        %v5140 = vmax.f32 %v5138, %v5139
        %v5141 = vrot.slane %v5140, 2
        %v5142 = vmax.f32 %v5140, %v5141
        %v5143 = vrot.slane %v5142, 1
        %v5144 = vmax.f32 %v5142, %v5143
        %s5145 = scalar_lea.vmem %s289, 21 [#allocation3]
        %v5146 = vld [vmem:[%s5145] ss:$8 sm:$0x3]
        %v5149 = vcombine.low %v5107, %v5144
        %v5151 = vunpack.c.l.s4 1966171168
        %v5152 = vunpack.c.0.s8 %v5151
        %v5153 = vlaneseq
        %v5154 = vshrl.u32 %v5153, 7
        %v5155 = vsub.s32 %v5152, %v5154
        %v5156 = vrot.slane %v5149, %v5155
        %v5158 = vunpack.c.l.s4 1966171168
        %v5159 = vunpack.c.0.s8 %v5158
        %v5160 = vlaneseq
        %v5161 = vshrl.u32 %v5160, 7
        %v5162 = vsub.s32 %v5159, %v5161
        %v5163 = vrot.slane %v5156, %v5162
        %v5165 = vmax.f32 %v5146, %v5163
        %5166 = vst.msk [vmem:[%s5145] ss:$8 sm:$0x3] %vm1408, %v5165
        %5167 = vst.msk [vmem:[%s5145] ss:$8 sm:$0x0] %vm1408, %v5165
        %5168 = vset.pattern.permute.xlu0 14
        %5169 = vperm.xlu0 %5168, %v929
        %v5170 = vpop.permute.xlu0 %5169
        %5172 = vset.pattern.permute.xlu0 14
        %5173 = vperm.xlu0 %5172, %v934
        %v5174 = vpop.permute.xlu0 %5173
        %5176 = vset.pattern.permute.xlu0 14
        %5177 = vperm.xlu0 %5176, %v939
        %v5178 = vpop.permute.xlu0 %5177
        %5180 = vset.pattern.permute.xlu0 14
        %5181 = vperm.xlu0 %5180, %v944
        %v5182 = vpop.permute.xlu0 %5181
        %5184 = vset.pattern.permute.xlu0 14
        %5185 = vperm.xlu0 %5184, %v949
        %v5186 = vpop.permute.xlu0 %5185
        %5188 = vset.pattern.permute.xlu0 14
        %5189 = vperm.xlu0 %5188, %v954
        %v5190 = vpop.permute.xlu0 %5189
        %5192 = vset.pattern.permute.xlu0 14
        %5193 = vperm.xlu0 %5192, %v959
        %v5194 = vpop.permute.xlu0 %5193
        %5196 = vset.pattern.permute.xlu0 14
        %5197 = vperm.xlu0 %5196, %v964
        %v5198 = vpop.permute.xlu0 %5197
        %5200 = vset.pattern.permute.xlu0 14
        %5201 = vperm.xlu0 %5200, %v969
        %v5202 = vpop.permute.xlu0 %5201
        %5204 = vset.pattern.permute.xlu0 14
        %5205 = vperm.xlu0 %5204, %v974
        %v5206 = vpop.permute.xlu0 %5205
        %5208 = vset.pattern.permute.xlu0 14
        %5209 = vperm.xlu0 %5208, %v979
        %v5210 = vpop.permute.xlu0 %5209
        %5212 = vset.pattern.permute.xlu0 14
        %5213 = vperm.xlu0 %5212, %v984
        %v5214 = vpop.permute.xlu0 %5213
        %5216 = vset.pattern.permute.xlu0 14
        %5217 = vperm.xlu0 %5216, %v989
        %v5218 = vpop.permute.xlu0 %5217
        %5220 = vset.pattern.permute.xlu0 14
        %5221 = vperm.xlu0 %5220, %v994
        %v5222 = vpop.permute.xlu0 %5221
        %5224 = vset.pattern.permute.xlu0 14
        %5225 = vperm.xlu0 %5224, %v999
        %v5226 = vpop.permute.xlu0 %5225
        %5228 = vset.pattern.permute.xlu0 14
        %5229 = vperm.xlu0 %5228, %v1004
        %v5230 = vpop.permute.xlu0 %5229
        %5232 = vset.pattern.permute.xlu0 14
        %5233 = vperm.xlu0 %5232, %v1009
        %v5234 = vpop.permute.xlu0 %5233
        %5236 = vset.pattern.permute.xlu0 14
        %5237 = vperm.xlu0 %5236, %v1014
        %v5238 = vpop.permute.xlu0 %5237
        %5240 = vset.pattern.permute.xlu0 14
        %5241 = vperm.xlu0 %5240, %v1019
        %v5242 = vpop.permute.xlu0 %5241
        %5244 = vset.pattern.permute.xlu0 14
        %5245 = vperm.xlu0 %5244, %v1024
        %v5246 = vpop.permute.xlu0 %5245
        %5248 = vset.pattern.permute.xlu0 14
        %5249 = vperm.xlu0 %5248, %v1029
        %v5250 = vpop.permute.xlu0 %5249
        %5252 = vset.pattern.permute.xlu0 14
        %5253 = vperm.xlu0 %5252, %v1034
        %v5254 = vpop.permute.xlu0 %5253
        %5256 = vset.pattern.permute.xlu0 14
        %5257 = vperm.xlu0 %5256, %v1039
        %v5258 = vpop.permute.xlu0 %5257
        %5260 = vset.pattern.permute.xlu0 14
        %5261 = vperm.xlu0 %5260, %v1044
        %v5262 = vpop.permute.xlu0 %5261
        %5264 = vset.pattern.permute.xlu0 14
        %5265 = vperm.xlu0 %5264, %v1049
        %v5266 = vpop.permute.xlu0 %5265
        %5268 = vset.pattern.permute.xlu0 14
        %5269 = vperm.xlu0 %5268, %v1054
        %v5270 = vpop.permute.xlu0 %5269
        %5272 = vset.pattern.permute.xlu0 14
        %5273 = vperm.xlu0 %5272, %v1059
        %v5274 = vpop.permute.xlu0 %5273
        %5276 = vset.pattern.permute.xlu0 14
        %5277 = vperm.xlu0 %5276, %v1064
        %v5278 = vpop.permute.xlu0 %5277
        %5280 = vset.pattern.permute.xlu0 14
        %5281 = vperm.xlu0 %5280, %v1069
        %v5282 = vpop.permute.xlu0 %5281
        %5284 = vset.pattern.permute.xlu0 14
        %5285 = vperm.xlu0 %5284, %v1074
        %v5286 = vpop.permute.xlu0 %5285
        %5288 = vset.pattern.permute.xlu0 14
        %5289 = vperm.xlu0 %5288, %v1079
        %v5290 = vpop.permute.xlu0 %5289
        %5292 = vset.pattern.permute.xlu0 14
        %5293 = vperm.xlu0 %5292, %v1084
        %v5294 = vpop.permute.xlu0 %5293
        %v5296 = vsel %vm453, %v5170, -inf
        %v5297 = vsel %vm454, %v5170, -inf
        %v5298 = vsel %vm455, %v5174, -inf
        %v5299 = vsel %vm456, %v5174, -inf
        %v5300 = vsel %vm457, %v5178, -inf
        %v5301 = vsel %vm458, %v5178, -inf
        %v5302 = vsel %vm459, %v5182, -inf
        %v5303 = vsel %vm460, %v5182, -inf
        %v5304 = vsel %vm461, %v5186, -inf
        %v5305 = vsel %vm462, %v5186, -inf
        %v5306 = vsel %vm463, %v5190, -inf
        %v5307 = vsel %vm464, %v5190, -inf
        %v5308 = vsel %vm465, %v5194, -inf
        %v5309 = vsel %vm466, %v5194, -inf
        %v5310 = vsel %vm467, %v5198, -inf
        %v5311 = vsel %vm468, %v5198, -inf
        %v5312 = vsel %vm469, %v5202, -inf
        %v5313 = vsel %vm470, %v5202, -inf
        %v5314 = vsel %vm471, %v5206, -inf
        %v5315 = vsel %vm472, %v5206, -inf
        %v5316 = vsel %vm473, %v5210, -inf
        %v5317 = vsel %vm474, %v5210, -inf
        %v5318 = vsel %vm475, %v5214, -inf
        %v5319 = vsel %vm476, %v5214, -inf
        %v5320 = vsel %vm477, %v5218, -inf
        %v5321 = vsel %vm478, %v5218, -inf
        %v5322 = vsel %vm479, %v5222, -inf
        %v5323 = vsel %vm480, %v5222, -inf
        %v5324 = vsel %vm481, %v5226, -inf
        %v5325 = vsel %vm482, %v5226, -inf
        %v5326 = vsel %vm483, %v5230, -inf
        %v5327 = vsel %vm484, %v5230, -inf
        %v5328 = vsel %vm485, %v5234, -inf
        %v5329 = vsel %vm486, %v5234, -inf
        %v5330 = vsel %vm487, %v5238, -inf
        %v5331 = vsel %vm488, %v5238, -inf
        %v5332 = vsel %vm489, %v5242, -inf
        %v5333 = vsel %vm490, %v5242, -inf
        %v5334 = vsel %vm491, %v5246, -inf
        %v5335 = vsel %vm492, %v5246, -inf
        %v5336 = vsel %vm493, %v5250, -inf
        %v5337 = vsel %vm494, %v5250, -inf
        %v5338 = vsel %vm495, %v5254, -inf
        %v5339 = vsel %vm496, %v5254, -inf
        %v5340 = vsel %vm497, %v5258, -inf
        %v5341 = vsel %vm498, %v5258, -inf
        %v5342 = vsel %vm499, %v5262, -inf
        %v5343 = vsel %vm500, %v5262, -inf
        %v5344 = vsel %vm501, %v5266, -inf
        %v5345 = vsel %vm502, %v5266, -inf
        %v5346 = vsel %vm503, %v5270, -inf
        %v5347 = vsel %vm504, %v5270, -inf
        %v5348 = vsel %vm505, %v5274, -inf
        %v5349 = vsel %vm506, %v5274, -inf
        %v5350 = vsel %vm507, %v5278, -inf
        %v5351 = vsel %vm508, %v5278, -inf
        %v5352 = vsel %vm509, %v5282, -inf
        %v5353 = vsel %vm510, %v5282, -inf
        %v5354 = vsel %vm511, %v5286, -inf
        %v5355 = vsel %vm512, %v5286, -inf
        %v5356 = vsel %vm513, %v5290, -inf
        %v5357 = vsel %vm514, %v5290, -inf
        %v5358 = vsel %vm515, %v5294, -inf
        %v5359 = vsel %vm516, %v5294, -inf
        %v5360 = vmax.f32 %v5296, %v5300
        %v5361 = vmax.f32 %v5298, %v5302
        %v5362 = vmax.f32 %v5360, %v5304
        %v5363 = vmax.f32 %v5361, %v5306
        %v5364 = vmax.f32 %v5362, %v5308
        %v5365 = vmax.f32 %v5363, %v5310
        %v5366 = vmax.f32 %v5364, %v5312
        %v5367 = vmax.f32 %v5365, %v5314
        %v5368 = vmax.f32 %v5366, %v5316
        %v5369 = vmax.f32 %v5367, %v5318
        %v5370 = vmax.f32 %v5368, %v5320
        %v5371 = vmax.f32 %v5369, %v5322
        %v5372 = vmax.f32 %v5370, %v5324
        %v5373 = vmax.f32 %v5371, %v5326
        %v5374 = vmax.f32 %v5372, %v5328
        %v5375 = vmax.f32 %v5373, %v5330
        %v5376 = vmax.f32 %v5374, %v5332
        %v5377 = vmax.f32 %v5375, %v5334
        %v5378 = vmax.f32 %v5376, %v5336
        %v5379 = vmax.f32 %v5377, %v5338
        %v5380 = vmax.f32 %v5378, %v5340
        %v5381 = vmax.f32 %v5379, %v5342
        %v5382 = vmax.f32 %v5380, %v5344
        %v5383 = vmax.f32 %v5381, %v5346
        %v5384 = vmax.f32 %v5382, %v5348
        %v5385 = vmax.f32 %v5383, %v5350
        %v5386 = vmax.f32 %v5384, %v5352
        %v5387 = vmax.f32 %v5385, %v5354
        %v5388 = vmax.f32 %v5386, %v5356
        %v5389 = vmax.f32 %v5387, %v5358
        %v5390 = vmax.f32 %v5388, %v5389
        %v5391 = vrot.slane %v5390, 4
        %v5392 = vmax.f32 %v5390, %v5391
        %v5393 = vrot.slane %v5392, 2
        %v5394 = vmax.f32 %v5392, %v5393
        %v5395 = vrot.slane %v5394, 1
        %v5396 = vmax.f32 %v5394, %v5395
        %v5397 = vmax.f32 %v5297, %v5301
        %v5398 = vmax.f32 %v5299, %v5303
        %v5399 = vmax.f32 %v5397, %v5305
        %v5400 = vmax.f32 %v5398, %v5307
        %v5401 = vmax.f32 %v5399, %v5309
        %v5402 = vmax.f32 %v5400, %v5311
        %v5403 = vmax.f32 %v5401, %v5313
        %v5404 = vmax.f32 %v5402, %v5315
        %v5405 = vmax.f32 %v5403, %v5317
        %v5406 = vmax.f32 %v5404, %v5319
        %v5407 = vmax.f32 %v5405, %v5321
        %v5408 = vmax.f32 %v5406, %v5323
        %v5409 = vmax.f32 %v5407, %v5325
        %v5410 = vmax.f32 %v5408, %v5327
        %v5411 = vmax.f32 %v5409, %v5329
        %v5412 = vmax.f32 %v5410, %v5331
        %v5413 = vmax.f32 %v5411, %v5333
        %v5414 = vmax.f32 %v5412, %v5335
        %v5415 = vmax.f32 %v5413, %v5337
        %v5416 = vmax.f32 %v5414, %v5339
        %v5417 = vmax.f32 %v5415, %v5341
        %v5418 = vmax.f32 %v5416, %v5343
        %v5419 = vmax.f32 %v5417, %v5345
        %v5420 = vmax.f32 %v5418, %v5347
        %v5421 = vmax.f32 %v5419, %v5349
        %v5422 = vmax.f32 %v5420, %v5351
        %v5423 = vmax.f32 %v5421, %v5353
        %v5424 = vmax.f32 %v5422, %v5355
        %v5425 = vmax.f32 %v5423, %v5357
        %v5426 = vmax.f32 %v5424, %v5359
        %v5427 = vmax.f32 %v5425, %v5426
        %v5428 = vrot.slane %v5427, 4
        %v5429 = vmax.f32 %v5427, %v5428
        %v5430 = vrot.slane %v5429, 2
        %v5431 = vmax.f32 %v5429, %v5430
        %v5432 = vrot.slane %v5431, 1
        %v5433 = vmax.f32 %v5431, %v5432
        %s5434 = scalar_lea.vmem %s289, 22 [#allocation3]
        %v5435 = vld [vmem:[%s5434] ss:$8 sm:$0x3]
        %v5438 = vcombine.low %v5396, %v5433
        %v5440 = vunpack.c.l.s4 1966171168
        %v5441 = vunpack.c.0.s8 %v5440
        %v5442 = vlaneseq
        %v5443 = vshrl.u32 %v5442, 7
        %v5444 = vsub.s32 %v5441, %v5443
        %v5445 = vrot.slane %v5438, %v5444
        %v5447 = vunpack.c.l.s4 1966171168
        %v5448 = vunpack.c.0.s8 %v5447
        %v5449 = vlaneseq
        %v5450 = vshrl.u32 %v5449, 7
        %v5451 = vsub.s32 %v5448, %v5450
        %v5452 = vrot.slane %v5445, %v5451
        %v5454 = vmax.f32 %v5435, %v5452
        %5455 = vst.msk [vmem:[%s5434] ss:$8 sm:$0x3] %vm1408, %v5454
        %5456 = vst.msk [vmem:[%s5434] ss:$8 sm:$0x0] %vm1408, %v5454
        %5457 = vset.pattern.permute.xlu0 15
        %5458 = vperm.xlu0 %5457, %v929
        %v5459 = vpop.permute.xlu0 %5458
        %5461 = vset.pattern.permute.xlu0 15
        %5462 = vperm.xlu0 %5461, %v934
        %v5463 = vpop.permute.xlu0 %5462
        %5465 = vset.pattern.permute.xlu0 15
        %5466 = vperm.xlu0 %5465, %v939
        %v5467 = vpop.permute.xlu0 %5466
        %5469 = vset.pattern.permute.xlu0 15
        %5470 = vperm.xlu0 %5469, %v944
        %v5471 = vpop.permute.xlu0 %5470
        %5473 = vset.pattern.permute.xlu0 15
        %5474 = vperm.xlu0 %5473, %v949
        %v5475 = vpop.permute.xlu0 %5474
        %5477 = vset.pattern.permute.xlu0 15
        %5478 = vperm.xlu0 %5477, %v954
        %v5479 = vpop.permute.xlu0 %5478
        %5481 = vset.pattern.permute.xlu0 15
        %5482 = vperm.xlu0 %5481, %v959
        %v5483 = vpop.permute.xlu0 %5482
        %5485 = vset.pattern.permute.xlu0 15
        %5486 = vperm.xlu0 %5485, %v964
        %v5487 = vpop.permute.xlu0 %5486
        %5489 = vset.pattern.permute.xlu0 15
        %5490 = vperm.xlu0 %5489, %v969
        %v5491 = vpop.permute.xlu0 %5490
        %5493 = vset.pattern.permute.xlu0 15
        %5494 = vperm.xlu0 %5493, %v974
        %v5495 = vpop.permute.xlu0 %5494
        %5497 = vset.pattern.permute.xlu0 15
        %5498 = vperm.xlu0 %5497, %v979
        %v5499 = vpop.permute.xlu0 %5498
        %5501 = vset.pattern.permute.xlu0 15
        %5502 = vperm.xlu0 %5501, %v984
        %v5503 = vpop.permute.xlu0 %5502
        %5505 = vset.pattern.permute.xlu0 15
        %5506 = vperm.xlu0 %5505, %v989
        %v5507 = vpop.permute.xlu0 %5506
        %5509 = vset.pattern.permute.xlu0 15
        %5510 = vperm.xlu0 %5509, %v994
        %v5511 = vpop.permute.xlu0 %5510
        %5513 = vset.pattern.permute.xlu0 15
        %5514 = vperm.xlu0 %5513, %v999
        %v5515 = vpop.permute.xlu0 %5514
        %5517 = vset.pattern.permute.xlu0 15
        %5518 = vperm.xlu0 %5517, %v1004
        %v5519 = vpop.permute.xlu0 %5518
        %5521 = vset.pattern.permute.xlu0 15
        %5522 = vperm.xlu0 %5521, %v1009
        %v5523 = vpop.permute.xlu0 %5522
        %5525 = vset.pattern.permute.xlu0 15
        %5526 = vperm.xlu0 %5525, %v1014
        %v5527 = vpop.permute.xlu0 %5526
        %5529 = vset.pattern.permute.xlu0 15
        %5530 = vperm.xlu0 %5529, %v1019
        %v5531 = vpop.permute.xlu0 %5530
        %5533 = vset.pattern.permute.xlu0 15
        %5534 = vperm.xlu0 %5533, %v1024
        %v5535 = vpop.permute.xlu0 %5534
        %5537 = vset.pattern.permute.xlu0 15
        %5538 = vperm.xlu0 %5537, %v1029
        %v5539 = vpop.permute.xlu0 %5538
        %5541 = vset.pattern.permute.xlu0 15
        %5542 = vperm.xlu0 %5541, %v1034
        %v5543 = vpop.permute.xlu0 %5542
        %5545 = vset.pattern.permute.xlu0 15
        %5546 = vperm.xlu0 %5545, %v1039
        %v5547 = vpop.permute.xlu0 %5546
        %5549 = vset.pattern.permute.xlu0 15
        %5550 = vperm.xlu0 %5549, %v1044
        %v5551 = vpop.permute.xlu0 %5550
        %5553 = vset.pattern.permute.xlu0 15
        %5554 = vperm.xlu0 %5553, %v1049
        %v5555 = vpop.permute.xlu0 %5554
        %5557 = vset.pattern.permute.xlu0 15
        %5558 = vperm.xlu0 %5557, %v1054
        %v5559 = vpop.permute.xlu0 %5558
        %5561 = vset.pattern.permute.xlu0 15
        %5562 = vperm.xlu0 %5561, %v1059
        %v5563 = vpop.permute.xlu0 %5562
        %5565 = vset.pattern.permute.xlu0 15
        %5566 = vperm.xlu0 %5565, %v1064
        %v5567 = vpop.permute.xlu0 %5566
        %5569 = vset.pattern.permute.xlu0 15
        %5570 = vperm.xlu0 %5569, %v1069
        %v5571 = vpop.permute.xlu0 %5570
        %5573 = vset.pattern.permute.xlu0 15
        %5574 = vperm.xlu0 %5573, %v1074
        %v5575 = vpop.permute.xlu0 %5574
        %5577 = vset.pattern.permute.xlu0 15
        %5578 = vperm.xlu0 %5577, %v1079
        %v5579 = vpop.permute.xlu0 %5578
        %5581 = vset.pattern.permute.xlu0 15
        %5582 = vperm.xlu0 %5581, %v1084
        %v5583 = vpop.permute.xlu0 %5582
        %v5585 = vsel %vm453, %v5459, -inf
        %v5586 = vsel %vm454, %v5459, -inf
        %v5587 = vsel %vm455, %v5463, -inf
        %v5588 = vsel %vm456, %v5463, -inf
        %v5589 = vsel %vm457, %v5467, -inf
        %v5590 = vsel %vm458, %v5467, -inf
        %v5591 = vsel %vm459, %v5471, -inf
        %v5592 = vsel %vm460, %v5471, -inf
        %v5593 = vsel %vm461, %v5475, -inf
        %v5594 = vsel %vm462, %v5475, -inf
        %v5595 = vsel %vm463, %v5479, -inf
        %v5596 = vsel %vm464, %v5479, -inf
        %v5597 = vsel %vm465, %v5483, -inf
        %v5598 = vsel %vm466, %v5483, -inf
        %v5599 = vsel %vm467, %v5487, -inf
        %v5600 = vsel %vm468, %v5487, -inf
        %v5601 = vsel %vm469, %v5491, -inf
        %v5602 = vsel %vm470, %v5491, -inf
        %v5603 = vsel %vm471, %v5495, -inf
        %v5604 = vsel %vm472, %v5495, -inf
        %v5605 = vsel %vm473, %v5499, -inf
        %v5606 = vsel %vm474, %v5499, -inf
        %v5607 = vsel %vm475, %v5503, -inf
        %v5608 = vsel %vm476, %v5503, -inf
        %v5609 = vsel %vm477, %v5507, -inf
        %v5610 = vsel %vm478, %v5507, -inf
        %v5611 = vsel %vm479, %v5511, -inf
        %v5612 = vsel %vm480, %v5511, -inf
        %v5613 = vsel %vm481, %v5515, -inf
        %v5614 = vsel %vm482, %v5515, -inf
        %v5615 = vsel %vm483, %v5519, -inf
        %v5616 = vsel %vm484, %v5519, -inf
        %v5617 = vsel %vm485, %v5523, -inf
        %v5618 = vsel %vm486, %v5523, -inf
        %v5619 = vsel %vm487, %v5527, -inf
        %v5620 = vsel %vm488, %v5527, -inf
        %v5621 = vsel %vm489, %v5531, -inf
        %v5622 = vsel %vm490, %v5531, -inf
        %v5623 = vsel %vm491, %v5535, -inf
        %v5624 = vsel %vm492, %v5535, -inf
        %v5625 = vsel %vm493, %v5539, -inf
        %v5626 = vsel %vm494, %v5539, -inf
        %v5627 = vsel %vm495, %v5543, -inf
        %v5628 = vsel %vm496, %v5543, -inf
        %v5629 = vsel %vm497, %v5547, -inf
        %v5630 = vsel %vm498, %v5547, -inf
        %v5631 = vsel %vm499, %v5551, -inf
        %v5632 = vsel %vm500, %v5551, -inf
        %v5633 = vsel %vm501, %v5555, -inf
        %v5634 = vsel %vm502, %v5555, -inf
        %v5635 = vsel %vm503, %v5559, -inf
        %v5636 = vsel %vm504, %v5559, -inf
        %v5637 = vsel %vm505, %v5563, -inf
        %v5638 = vsel %vm506, %v5563, -inf
        %v5639 = vsel %vm507, %v5567, -inf
        %v5640 = vsel %vm508, %v5567, -inf
        %v5641 = vsel %vm509, %v5571, -inf
        %v5642 = vsel %vm510, %v5571, -inf
        %v5643 = vsel %vm511, %v5575, -inf
        %v5644 = vsel %vm512, %v5575, -inf
        %v5645 = vsel %vm513, %v5579, -inf
        %v5646 = vsel %vm514, %v5579, -inf
        %v5647 = vsel %vm515, %v5583, -inf
        %v5648 = vsel %vm516, %v5583, -inf
        %v5649 = vmax.f32 %v5585, %v5589
        %v5650 = vmax.f32 %v5587, %v5591
        %v5651 = vmax.f32 %v5649, %v5593
        %v5652 = vmax.f32 %v5650, %v5595
        %v5653 = vmax.f32 %v5651, %v5597
        %v5654 = vmax.f32 %v5652, %v5599
        %v5655 = vmax.f32 %v5653, %v5601
        %v5656 = vmax.f32 %v5654, %v5603
        %v5657 = vmax.f32 %v5655, %v5605
        %v5658 = vmax.f32 %v5656, %v5607
        %v5659 = vmax.f32 %v5657, %v5609
        %v5660 = vmax.f32 %v5658, %v5611
        %v5661 = vmax.f32 %v5659, %v5613
        %v5662 = vmax.f32 %v5660, %v5615
        %v5663 = vmax.f32 %v5661, %v5617
        %v5664 = vmax.f32 %v5662, %v5619
        %v5665 = vmax.f32 %v5663, %v5621
        %v5666 = vmax.f32 %v5664, %v5623
        %v5667 = vmax.f32 %v5665, %v5625
        %v5668 = vmax.f32 %v5666, %v5627
        %v5669 = vmax.f32 %v5667, %v5629
        %v5670 = vmax.f32 %v5668, %v5631
        %v5671 = vmax.f32 %v5669, %v5633
        %v5672 = vmax.f32 %v5670, %v5635
        %v5673 = vmax.f32 %v5671, %v5637
        %v5674 = vmax.f32 %v5672, %v5639
        %v5675 = vmax.f32 %v5673, %v5641
        %v5676 = vmax.f32 %v5674, %v5643
        %v5677 = vmax.f32 %v5675, %v5645
        %v5678 = vmax.f32 %v5676, %v5647
        %v5679 = vmax.f32 %v5677, %v5678
        %v5680 = vrot.slane %v5679, 4
        %v5681 = vmax.f32 %v5679, %v5680
        %v5682 = vrot.slane %v5681, 2
        %v5683 = vmax.f32 %v5681, %v5682
        %v5684 = vrot.slane %v5683, 1
        %v5685 = vmax.f32 %v5683, %v5684
        %v5686 = vmax.f32 %v5586, %v5590
        %v5687 = vmax.f32 %v5588, %v5592
        %v5688 = vmax.f32 %v5686, %v5594
        %v5689 = vmax.f32 %v5687, %v5596
        %v5690 = vmax.f32 %v5688, %v5598
        %v5691 = vmax.f32 %v5689, %v5600
        %v5692 = vmax.f32 %v5690, %v5602
        %v5693 = vmax.f32 %v5691, %v5604
        %v5694 = vmax.f32 %v5692, %v5606
        %v5695 = vmax.f32 %v5693, %v5608
        %v5696 = vmax.f32 %v5694, %v5610
        %v5697 = vmax.f32 %v5695, %v5612
        %v5698 = vmax.f32 %v5696, %v5614
        %v5699 = vmax.f32 %v5697, %v5616
        %v5700 = vmax.f32 %v5698, %v5618
        %v5701 = vmax.f32 %v5699, %v5620
        %v5702 = vmax.f32 %v5700, %v5622
        %v5703 = vmax.f32 %v5701, %v5624
        %v5704 = vmax.f32 %v5702, %v5626
        %v5705 = vmax.f32 %v5703, %v5628
        %v5706 = vmax.f32 %v5704, %v5630
        %v5707 = vmax.f32 %v5705, %v5632
        %v5708 = vmax.f32 %v5706, %v5634
        %v5709 = vmax.f32 %v5707, %v5636
        %v5710 = vmax.f32 %v5708, %v5638
        %v5711 = vmax.f32 %v5709, %v5640
        %v5712 = vmax.f32 %v5710, %v5642
        %v5713 = vmax.f32 %v5711, %v5644
        %v5714 = vmax.f32 %v5712, %v5646
        %v5715 = vmax.f32 %v5713, %v5648
        %v5716 = vmax.f32 %v5714, %v5715
        %v5717 = vrot.slane %v5716, 4
        %v5718 = vmax.f32 %v5716, %v5717
        %v5719 = vrot.slane %v5718, 2
        %v5720 = vmax.f32 %v5718, %v5719
        %v5721 = vrot.slane %v5720, 1
        %v5722 = vmax.f32 %v5720, %v5721
        %s5723 = scalar_lea.vmem %s289, 23 [#allocation3]
        %v5724 = vld [vmem:[%s5723] ss:$8 sm:$0x3]
        %v5727 = vcombine.low %v5685, %v5722
        %v5729 = vunpack.c.l.s4 1966171168
        %v5730 = vunpack.c.0.s8 %v5729
        %v5731 = vlaneseq
        %v5732 = vshrl.u32 %v5731, 7
        %v5733 = vsub.s32 %v5730, %v5732
        %v5734 = vrot.slane %v5727, %v5733
        %v5736 = vunpack.c.l.s4 1966171168
        %v5737 = vunpack.c.0.s8 %v5736
        %v5738 = vlaneseq
        %v5739 = vshrl.u32 %v5738, 7
        %v5740 = vsub.s32 %v5737, %v5739
        %v5741 = vrot.slane %v5734, %v5740
        %v5743 = vmax.f32 %v5724, %v5741
        %5744 = vst.msk [vmem:[%s5723] ss:$8 sm:$0x3] %vm1408, %v5743
        %5745 = vst.msk [vmem:[%s5723] ss:$8 sm:$0x0] %vm1408, %v5743
        // Predicated region
        $region49: #{tpu_custom_call.1} parent=43 // pred_check
          %p5746 = pneg %p309
        $region50: #{tpu_custom_call.1} parent=43 // pred_check_branch
          %5748 = sbr.rel (%p5746) target = $region52
        $region51: #{tpu_custom_call.1} parent=43 // pred_region
          %s5749 = scalar_lea.vmem [#allocation2], 3
          %v5750 = vld [vmem:[%s5749] ss:$4 sm:$0x3]
          %v5751 = vmax.f32 %v5750, 1.0
          %v5752 = vld [vmem:[#allocation2] sm:$0x77]
          %v5754 = vlaneseq
          %v5755 = vshrl.u32 %v5754, 7
          %v5756 = vsub.s32 0, %v5755
          %v5757 = vrot.slane %v5751, %v5756
          %v5758 = vlaneseq
          %v5759 = vshrl.u32 %v5758, 7
          %v5760 = vsub.s32 1, %v5759
          %v5761 = vrot.slane %v5751, %v5760
          %v5762 = vcombine.low %v5757, %v5761
          %v5764 = vrcp.pop %v5762
          %v5765 = vmul.f32 %v5752, %v5764
          %v5766 = vld [vmem:[%s5] sm:$0xff]
          %v5767 = vld [vmem:[%s5 + $0x8] sm:$0xff]
          %v5769 = vcombine.high %v5765, %v5765
          %vm5770 = vcmask 23552
          %v5772 = vsel %vm5770, %v5766, 0
          %v5775 = vsel %vm5770, %v5767, 0
          %vm5777 = vcmask 1042432
          %v5778 = vsel %vm5777, %v5765, 0
          %v5780 = vsel %vm5777, %v5769, 0
          %5782 = vmatprep.subr.mxu0 %v5780
          %5783 = vmatpush1.msra.mxu0 %v5778
          %5784 = vmatprep.subr.mxu0 0.0
          %5785 = vmatpush1.msra.mxu0 0.0
          %5786 = vmatprep.subr.mxu0 0.0
          %5787 = vmatpush1.msra.mxu0 0.0
          %5788 = vmatprep.subr.mxu0 0.0
          %5789 = vmatpush1.msra.mxu0 0.0
          %5790 = vmatprep.subr.mxu0 0.0
          %5791 = vmatpush1.msra.mxu0 0.0
          %5792 = vmatprep.subr.mxu0 0.0
          %5793 = vmatpush1.msra.mxu0 0.0
          %5794 = vmatprep.subr.mxu0 0.0
          %5795 = vmatpush1.msra.mxu0 0.0
          %5796 = vmatprep.subr.mxu0 0.0
          %5797 = vmatpush1.msra.mxu0 0.0
          %5798 = vmatprep.subr.mxu0 0.0
          %5799 = vmatpush1.msra.mxu0 0.0
          %5800 = vmatprep.subr.mxu0 0.0
          %5801 = vmatpush1.msra.mxu0 0.0
          %5802 = vmatprep.subr.mxu0 0.0
          %5803 = vmatpush1.msra.mxu0 0.0
          %5804 = vmatprep.subr.mxu0 0.0
          %5805 = vmatpush1.msra.mxu0 0.0
          %5806 = vmatprep.subr.mxu0 0.0
          %5807 = vmatpush1.msra.mxu0 0.0
          %5808 = vmatprep.subr.mxu0 0.0
          %5809 = vmatpush1.msra.mxu0 0.0
          %5810 = vmatprep.subr.mxu0 0.0
          %5811 = vmatpush1.msra.mxu0 0.0
          %5812 = vmatprep.subr.mxu0 0.0
          %5813 = vmatpush1.msra.mxu0 0.0
          %5814 = vmatprep.subr.mxu0 0.0
          %5815 = vmatpush1.msra.mxu0 0.0
          %5816 = vmatprep.subr.mxu0 0.0
          %5817 = vmatpush1.msra.mxu0 0.0
          %5818 = vmatprep.subr.mxu0 0.0
          %5819 = vmatpush1.msra.mxu0 0.0
          %5820 = vmatprep.subr.mxu0 0.0
          %5821 = vmatpush1.msra.mxu0 0.0
          %5822 = vmatprep.subr.mxu0 0.0
          %5823 = vmatpush1.msra.mxu0 0.0
          %5824 = vmatprep.subr.mxu0 0.0
          %5825 = vmatpush1.msra.mxu0 0.0
          %5826 = vmatprep.subr.mxu0 0.0
          %5827 = vmatpush1.msra.mxu0 0.0
          %5828 = vmatprep.subr.mxu0 0.0
          %5829 = vmatpush1.msra.mxu0 0.0
          %5830 = vmatprep.subr.mxu0 0.0
          %5831 = vmatpush1.msra.mxu0 0.0
          %5832 = vmatprep.subr.mxu0 0.0
          %5833 = vmatpush1.msra.mxu0 0.0
          %5834 = vmatprep.subr.mxu0 0.0
          %5835 = vmatpush1.msra.mxu0 0.0
          %5836 = vmatprep.subr.mxu0 0.0
          %5837 = vmatpush1.msra.mxu0 0.0
          %5838 = vmatprep.subr.mxu0 0.0
          %5839 = vmatpush1.msra.mxu0 0.0
          %5840 = vmatprep.subr.mxu0 0.0
          %5841 = vmatpush1.msra.mxu0 0.0
          %5842 = vmatprep.subr.mxu0 0.0
          %5843 = vmatpush1.msra.mxu0 0.0
          %5844 = vmatprep.subr.mxu0 0.0
          %5845 = vmatpush1.msra.mxu0 0.0
          %5846 = vmatprep.mubr.f32.mxu0 0.0
          %5847 = vmatmul.mubr.f32.gmra.mrb[0].mxu0 %v5772
          %v5848 = vpop.f32.mrb[0].mxu0
          %v5849 = vadd.f32 0.0, %v5848
          %v5850 = vpop.f32.mrb[0].mxu0
          %v5851 = vadd.f32 0.0, %v5850
          %5852 = vmatprep.mubr.f32.mxu0 0.0
          %5853 = vmatmul.mubr.f32.gmra.mrb[0].mxu0 %v5775
          %v5854 = vpop.f32.mrb[0].mxu0
          %v5855 = vadd.f32 0.0, %v5854
          %v5856 = vpop.f32.mrb[0].mxu0
          %v5857 = vadd.f32 0.0, %v5856
          %5858 = vdwg.mxu0
          %v5859 = vld [vmem:[%s289] sm:$0xff]
          %v5860 = vld [vmem:[%s289 + $0x8] sm:$0xff]
          %v5861 = vld [vmem:[%s289 + $0x10] sm:$0xff]
          %v5862 = vld [vmem:[%s289 + $0x18] sm:$0xff]
          %v5863 = vld [vmem:[%s4] sm:$0xff]
          %v5864 = vld [vmem:[%s4 + $0x8] sm:$0xff]
          %5866 = vset.pattern.permute.xlu0 0
          %5867 = vperm.xlu0 %5866, %v5863
          %v5868 = vpop.permute.xlu0 %5867
          %5871 = vset.pattern.permute.xlu0 0
          %5872 = vperm.xlu0 %5871, %v5864
          %v5873 = vpop.permute.xlu0 %5872
          %v5875 = vadd.f32 %v5859, %v5868
          %v5876 = vadd.f32 %v5860, %v5868
          %v5877 = vadd.f32 %v5861, %v5873
          %v5878 = vadd.f32 %v5862, %v5873
          %v5879 = vsub.f32 %v5875, %v5849
          %v5880 = vsub.f32 %v5876, %v5851
          %v5881 = vsub.f32 %v5877, %v5855
          %v5882 = vsub.f32 %v5878, %v5857
          %v5883 = vmax.f32 %v5879, 0.0
          %v5884 = vmax.f32 %v5880, 0.0
          %v5885 = vmax.f32 %v5881, 0.0
          %v5886 = vmax.f32 %v5882, 0.0
          %5887 = vst [vmem:[%s289] sm:$0xff] %v5883
          %5888 = vst [vmem:[%s289 + $0x8] sm:$0xff] %v5884
          %5889 = vst [vmem:[%s289 + $0x10] sm:$0xff] %v5885
          %5890 = vst [vmem:[%s289 + $0x18] sm:$0xff] %v5886
        $region52: #{tpu_custom_call.1} parent=43 // pred_fallthru
          _
        %s5891 = sand.u32 %s181, 1
        %s5892 = scalar_lea.sflag [#allocation4], %s5891
        %s5893 = sand.u32 %s181, 1
        %s5894 = smul.addr %s5893, 32
        %s5895 = scalar_lea.vmem [#allocation3], %s5894
        // Predicated region
        $region53: #{tpu_custom_call.1} parent=43 // pred_check
          %p5896 = pneg %p191
        $region54: #{tpu_custom_call.1} parent=43 // pred_check_branch
          %5898 = sbr.rel (%p5896) target = $region56
        $region55: #{tpu_custom_call.1} parent=43 // pred_region
          %s5899 = smul.u32 2, %s24
          %s5901 = ssub.s32 512, 512
          %5902 = vsyncadd %s5892, %s5901
          %s5903 = smul.addr %s5899, 128
          %s5904 = scalar_lea.hbm %s6, %s5903
          %s5905 = sshll.u32 %s5895, 4
          %s5906 = int_to_ptr.vmem [resolvable:$true] %s5905
          %5911 = dma.vmem_to_hbm [thread:$0]  %s5906, 512, %s5904, %s5892, 256, 512, 16
        $region56: #{tpu_custom_call.1} parent=43 // pred_fallthru
          _
      $region44: #{tpu_custom_call.1} parent=5 // pred_fallthru
        _
      %p5912 = scmp.le.s32.totalorder 2, %s15
      // Predicated region
      $region57: #{tpu_custom_call.1} parent=5 // pred_check
        %p5913 = pneg %p5912
      $region58: #{tpu_custom_call.1} parent=5 // pred_check_branch
        %5915 = sbr.rel (%p5913) target = $region60
      $region59: #{tpu_custom_call.1} parent=5 // pred_region
        %s5916 = ssub.s32 %s15, 2
        // Predicated region
        $region61: #{tpu_custom_call.1} parent=59 // pred_check
          %p5917 = pneg %p197
        $region62: #{tpu_custom_call.1} parent=59 // pred_check_branch
          %5919 = sbr.rel (%p5917) target = $region64
        $region63: #{tpu_custom_call.1} parent=59 // pred_region
          %s5920 = sand.u32 %s182, 1
          %s5921 = scalar_lea.sflag [#allocation4], %s5920
          %s5922 = sand.u32 %s182, 1
          %s5923 = smul.addr %s5922, 32
          %s5924 = scalar_lea.vmem [#allocation3], %s5923
          %5925 = dma.done %s5921, 512
        $region64: #{tpu_custom_call.1} parent=59 // pred_fallthru
          _
      $region60: #{tpu_custom_call.1} parent=5 // pred_fallthru
        _
    $region6: #{tpu_custom_call.1} parent=1 // loop_footer
      %s19 = sadd.s32 1, %s15
    $region7: #{tpu_custom_call.1} parent=1 // loop_footer_branch
      %14 = sbr.rel target = $region3
    $region8: #{tpu_custom_call.1} parent=1 // loop_exit
      _
    %5926 = vsyncpa [#allocation4], 1
    %s5927 = scalar_lea.sflag [#allocation4], 1
    %5928 = vsyncpa %s5927, 1

</llo_original>
